<compile_context>
chip_gen: v7x
topology: tpu7x:2x2x1
jax: 0.10.0
libtpu: 0.0.40
codegen_flags: <defaults>
</compile_context>

<pallas_src>
import functools

import jax
import jax.numpy as jnp
from jax.experimental import pallas as pl
from jax.experimental.pallas import tpu as pltpu


def _round_up(a, b):
    return ((a + b - 1) // b) * b


def _hvq_level_kernel(n_rows, k_chunk, mm_dtype,
                      x_ref, w1_ref, b1_ref, w2_ref, b2_ref, e_ref, esq_ref,
                      q_ref, idx_ref, sse_ref):
    """Fused projection-MLP + vector-quantization kernel for one hierarchy level.

    x_ref   : (tile_n, D)      input rows (flattened batch), pipelined
    w1/b1   : (D, H), (1, H)   first Linear (H = D // 2), resident
    w2/b2   : (H, D), (1, D)   second Linear, resident
    e_ref   : (K, D)           codebook, resident
    esq_ref : (1, K)           per-codeword squared norms (precomputed), resident
    q_ref   : (tile_n, D)      quantized output
    idx_ref : (1, 1, tile_n)   argmin indices, lane-dense slab (int32)
    sse_ref : (1, 1, 1)        this tile's partial sum of squared error
    """
    step = pl.program_id(0)
    tile_n, d = x_ref.shape
    k = e_ref.shape[0]
    nt = (((1,), (1,)), ((), ()))          # contract last dims: A @ B^T

    def mm_cast(a):
        return a if mm_dtype is None else a.astype(mm_dtype)

    # --- projection MLP: Linear -> ReLU -> Linear -------------------------------
    x = x_ref[...].astype(jnp.float32)
    h = jnp.dot(mm_cast(x), mm_cast(w1_ref[...]),
                preferred_element_type=jnp.float32) + b1_ref[...]
    h = jnp.maximum(h, 0.0)
    p = jnp.dot(mm_cast(h), mm_cast(w2_ref[...]),
                preferred_element_type=jnp.float32) + b2_ref[...]
    p_mm = mm_cast(p)

    # --- pass 1: chunked nearest-codeword search --------------------------------
    # argmin_k (||e_k||^2 - 2 p.e_k);  ||p||^2 dropped (row-constant).
    num_chunks = -(-k // k_chunk)
    best = jnp.full((tile_n, 1), jnp.inf, jnp.float32)
    best_idx = jnp.zeros((tile_n, 1), jnp.int32)
    for c in range(num_chunks):
        c0 = c * k_chunk
        csz = min(k_chunk, k - c0)
        s = esq_ref[:, c0:c0 + csz] - 2.0 * jax.lax.dot_general(
            p_mm, mm_cast(e_ref[c0:c0 + csz, :]),
            dimension_numbers=nt, preferred_element_type=jnp.float32)
        loc_min = jnp.min(s, axis=1, keepdims=True)                     # (tile_n, 1)
        lane = jax.lax.broadcasted_iota(jnp.int32, s.shape, 1)
        # first index attaining the chunk minimum (torch-style tie-break)
        loc_idx = jnp.min(jnp.where(s == loc_min,
                                    (lane + c0).astype(jnp.float32),
                                    jnp.float32(k)),
                          axis=1, keepdims=True).astype(jnp.int32)
        take = loc_min < best            # strict '<': earlier chunk wins exact ties
        best_idx = jnp.where(take, loc_idx, best_idx)
        best = jnp.minimum(best, loc_min)

    # --- pass 2: quantize + lane-dense index slab --------------------------------
    q = jnp.zeros((tile_n, d), jnp.float32)
    idx_lane = jnp.zeros((1, tile_n), jnp.float32)
    for c in range(num_chunks):
        c0 = c * k_chunk
        csz = min(k_chunk, k - c0)
        lane = jax.lax.broadcasted_iota(jnp.int32, (tile_n, csz), 1)
        onehot = (lane + c0 == best_idx).astype(jnp.float32)            # (tile_n, csz)
        # quantized rows: one_hot @ codebook (kept f32 so q is exactly a codeword)
        q = q + jnp.dot(onehot, e_ref[c0:c0 + csz, :].astype(jnp.float32),
                        preferred_element_type=jnp.float32)
        # lane-dense indices via two tiny (1, csz) x (tile_n, csz)^T matvecs:
        # within-chunk index + chunk base; both contributions are exact in f32.
        kvec = jax.lax.broadcasted_iota(jnp.int32, (1, csz), 1).astype(jnp.float32)
        sel = jnp.ones((1, csz), jnp.float32)
        loc = jax.lax.dot_general(kvec, onehot, dimension_numbers=nt,
                                  preferred_element_type=jnp.float32)
        hit = jax.lax.dot_general(sel, onehot, dimension_numbers=nt,
                                  preferred_element_type=jnp.float32)
        idx_lane = idx_lane + loc + jnp.float32(c0) * hit

    q_ref[...] = q.astype(q_ref.dtype)
    idx_ref[0] = idx_lane.astype(jnp.int32)

    # --- VQ-loss partial sum (mask padded rows only on the final tile) -----------
    diff = q - p
    sse_ref[0] = jnp.sum(jnp.sum(diff * diff, axis=1, keepdims=True),
                         axis=0, keepdims=True)
    if n_rows % tile_n != 0:
        @pl.when(step == pl.num_programs(0) - 1)
        def _():
            rows = step * tile_n + jax.lax.broadcasted_iota(jnp.int32, (tile_n, 1), 0)
            dm = jnp.where(rows < n_rows, diff, 0.0)
            sse_ref[0] = jnp.sum(jnp.sum(dm * dm, axis=1, keepdims=True),
                                 axis=0, keepdims=True)


def _hvq_level_forward(x, w1, b1, w2, b2, codebook, *, commitment_cost,
                       tile_n=2048, mm_dtype=None):
    """One level of HierarchicalVQLayer: projection MLP + VectorQuantizer (fused)."""
    orig_shape = x.shape
    d = orig_shape[-1]
    h_dim = w1.shape[1]
    k = codebook.shape[0]

    flat = x.reshape(-1, d)
    n = flat.shape[0]

    # Row tile: multiple of 128 (lane-aligned idx slab), capped at the rounded-up
    # row count; large by default to amortize per-grid-step pipeline overhead.
    tile_n = _round_up(min(tile_n, _round_up(n, 128)), 128)
    n_pad = _round_up(n, tile_n)
    if n_pad != n:
        flat = jnp.pad(flat, ((0, n_pad - n), (0, 0)))
    grid_n = n_pad // tile_n

    # Codebook-chunk size bounding the (tile_n, k_chunk) score/one-hot slabs
    # to ~4 MiB each (keeps large-K configs out of the spill-bound regime).
    k_chunk = min(k, max(128, (4 * 1024 * 1024) // (4 * tile_n)))
    if k_chunk < k:
        k_chunk = max(128, (k_chunk // 128) * 128)

    # ||e_k||^2, computed once outside the kernel (tiny).
    e_sq = jnp.sum(codebook.astype(jnp.float32) ** 2, axis=1)[None, :]   # (1, K)

    kernel = functools.partial(_hvq_level_kernel, n, k_chunk, mm_dtype)

    out_shape = (
        jax.ShapeDtypeStruct((n_pad, d), x.dtype),              # quantized
        jax.ShapeDtypeStruct((grid_n, 1, tile_n), jnp.int32),   # indices (lane-dense)
        jax.ShapeDtypeStruct((grid_n, 1, 1), jnp.float32),      # SSE partial sums
    )

    # Derived VMEM budget: double-buffered x/q/idx tiles + resident weights +
    # chunked working set; floor 32 MiB (v5e scoped default is only 16 MiB),
    # cap 56 MiB (headroom under v7x's 64 MiB physical VMEM).
    itemsize = jnp.dtype(x.dtype).itemsize
    resident = (d * h_dim + h_dim + h_dim * d + d + k * d + k) * 4
    pipelined = 2 * (2 * tile_n * d * itemsize + tile_n * 4 + 128)
    working = tile_n * (2 * k_chunk + 3 * d + h_dim) * 4
    vmem_limit = int(min(max(2 * resident + pipelined + working + (4 << 20),
                             32 << 20), 56 << 20))

    cost = pl.CostEstimate(
        flops=int(n_pad * (4 * d * h_dim + 4 * d * k + 6 * k)),
        transcendentals=0,
        bytes_accessed=int(2 * n_pad * d * itemsize + n_pad * 4 + resident))

    def resident_spec(shape, single_buffer):
        index_map = lambda i: (0,) * len(shape)
        if single_buffer and hasattr(pl, "Buffered"):
            try:
                return pl.BlockSpec(shape, index_map, pipeline_mode=pl.Buffered(1))
            except TypeError:          # older jax: no pipeline_mode kwarg
                pass
        return pl.BlockSpec(shape, index_map)

    def build(single_buffer):
        in_specs = [
            pl.BlockSpec((tile_n, d), lambda i: (i, 0)),        # x rows (pipelined)
            resident_spec((d, h_dim), single_buffer),           # W1
            resident_spec((1, h_dim), single_buffer),           # b1
            resident_spec((h_dim, d), single_buffer),           # W2
            resident_spec((1, d), single_buffer),               # b2
            resident_spec((k, d), single_buffer),               # codebook
            resident_spec((1, k), single_buffer),               # ||e_k||^2
        ]
        out_specs = (
            pl.BlockSpec((tile_n, d), lambda i: (i, 0)),
            pl.BlockSpec((1, 1, tile_n), lambda i: (i, 0, 0)),
            pl.BlockSpec((1, 1, 1), lambda i: (i, 0, 0)),
        )
        return pl.pallas_call(
            kernel,
            out_shape=out_shape,
            grid_spec=pltpu.PrefetchScalarGridSpec(
                num_scalar_prefetch=0,
                grid=(grid_n,),
                in_specs=in_specs,
                out_specs=out_specs),
            compiler_params=pltpu.CompilerParams(
                # every output block is private to its grid step, so the row-tile
                # axis can be sharded across v7x's two TensorCores
                dimension_semantics=("parallel",),
                vmem_limit_bytes=vmem_limit),
            cost_estimate=cost,
        )

    args = (flat, w1, b1, w2, b2, codebook, e_sq)
    try:
        q, idx, sse = build(True)(*args)      # single-buffered resident operands
    except Exception:                         # pragma: no cover - portability fallback
        q, idx, sse = build(False)(*args)     # default double-buffering

    quantized = q[:n].reshape(orig_shape)
    indices = idx.reshape(-1)[:n].reshape(orig_shape[:-1])
    mse = jnp.sum(sse) / jnp.float32(n * d)
    # q_latent_loss + commitment_cost * e_latent_loss  (identical values forward)
    vq_loss = (1.0 + commitment_cost) * mse
    return quantized, vq_loss, indices


def hierarchical_vq_forward(inputs, params, *, tile_n=2048, mm_dtype=None):
    """HierarchicalVQLayer.forward — one fused Pallas kernel per level."""
    results = {'quantized': [], 'vq_losses': [], 'indices': [],
               'total_loss': jnp.float32(0.0)}
    for x, p in zip(inputs, params):
        q, vq_loss, idx = _hvq_level_forward(
            x, p['w1'], p['b1'], p['w2'], p['b2'], p['codebook'],
            commitment_cost=p['commitment_cost'], tile_n=tile_n, mm_dtype=mm_dtype)
        results['quantized'].append(q)
        results['vq_losses'].append(vq_loss)
        results['indices'].append(idx)
        results['total_loss'] = results['total_loss'] + vq_loss
    return results


def init_hvq_params(key, codebook_sizes, embedding_dims, commitment_costs=None):
    """Parameters mirroring the PyTorch module's default init.

    Linear: U(-1/sqrt(fan_in), 1/sqrt(fan_in)) for weight and bias
            (weights stored transposed, [in, out], so kernels do x @ W + b).
    Embedding: U(-1/K, 1/K).
    """
    num_levels = len(codebook_sizes)
    if commitment_costs is None:
        commitment_costs = [0.25] * num_levels
    params = []
    for k_sz, d, cc in zip(codebook_sizes, embedding_dims, commitment_costs):
        h = d // 2
        key, k1, k2, k3, k4, k5 = jax.random.split(key, 6)
        bound1 = 1.0 / (d ** 0.5)
        bound2 = 1.0 / (h ** 0.5)
        params.append(dict(
            w1=jax.random.uniform(k1, (d, h), jnp.float32, -bound1, bound1),
            b1=jax.random.uniform(k2, (1, h), jnp.float32, -bound1, bound1),
            w2=jax.random.uniform(k3, (h, d), jnp.float32, -bound2, bound2),
            b2=jax.random.uniform(k4, (1, d), jnp.float32, -bound2, bound2),
            codebook=jax.random.uniform(k5, (k_sz, d), jnp.float32,
                                        -1.0 / k_sz, 1.0 / k_sz),
            commitment_cost=float(cc),
        ))
    return params


def reference_forward(inputs, params):
    """Pure-JAX reference matching the PyTorch forward (values only)."""
    hi = jax.lax.Precision.HIGHEST
    results = {'quantized': [], 'vq_losses': [], 'indices': [],
               'total_loss': jnp.float32(0.0)}
    for x, p in zip(inputs, params):
        shp = x.shape
        d = shp[-1]
        flat = x.reshape(-1, d)
        h = jnp.maximum(jnp.dot(flat, p['w1'], precision=hi) + p['b1'], 0.0)
        proj = jnp.dot(h, p['w2'], precision=hi) + p['b2']
        e = p['codebook']
        dist = (jnp.sum(proj ** 2, axis=1, keepdims=True)
                + jnp.sum(e ** 2, axis=1)
                - 2.0 * jnp.dot(proj, e.T, precision=hi))
        idx = jnp.argmin(dist, axis=1)
        q = e[idx]
        mse = jnp.mean((q - proj) ** 2)
        vq_loss = (1.0 + p['commitment_cost']) * mse
        results['quantized'].append(q.reshape(shp))
        results['vq_losses'].append(vq_loss)
        results['indices'].append(idx.reshape(shp[:-1]))
        results['total_loss'] = results['total_loss'] + vq_loss
    return results


if __name__ == "__main__":
    key = jax.random.PRNGKey(0)

    # Small config consistent with HierarchicalVQLayer(codebook_sizes, embedding_dims)
    codebook_sizes = [64, 32]
    embedding_dims = [32, 16]
    batch, seq = 2, 8

    key, pkey = jax.random.split(key)
    params = init_hvq_params(pkey, codebook_sizes, embedding_dims)

    inputs = []
    for d in embedding_dims:
        key, fk = jax.random.split(key)
        inputs.append(jax.random.normal(fk, (batch, seq, d), jnp.float32))

    out = hierarchical_vq_forward(inputs, params)
    out = jax.block_until_ready(out)

    ref = reference_forward(inputs, params)

    for lvl in range(len(params)):
        assert out['quantized'][lvl].shape == (batch, seq, embedding_dims[lvl])
        assert out['indices'][lvl].shape == (batch, seq)
        assert jnp.array_equal(out['indices'][lvl], ref['indices'][lvl]), \
            f"indices mismatch at level {lvl}"
        assert jnp.allclose(out['quantized'][lvl], ref['quantized'][lvl],
                            atol=1e-5, rtol=1e-5), f"quantized mismatch at level {lvl}"
        assert jnp.allclose(out['vq_losses'][lvl], ref['vq_losses'][lvl],
                            atol=2e-5, rtol=1e-4), f"vq_loss mismatch at level {lvl}"
    assert jnp.allclose(out['total_loss'], ref['total_loss'], atol=2e-5, rtol=1e-4)

    print("KERNEL_OK")
</pallas_src>

<mosaic_0001>
module attributes {stable_mosaic.version = 11 : i64} {
  func.func @_hvq_level_kernel(%arg0: i32, %arg1: memref<128x32xf32, #tpu.memory_space<vmem>>, %arg2: memref<32x16xf32, #tpu.memory_space<vmem>>, %arg3: memref<1x16xf32, #tpu.memory_space<vmem>>, %arg4: memref<16x32xf32, #tpu.memory_space<vmem>>, %arg5: memref<1x32xf32, #tpu.memory_space<vmem>>, %arg6: memref<64x32xf32, #tpu.memory_space<vmem>>, %arg7: memref<1x64xf32, #tpu.memory_space<vmem>>, %arg8: memref<128x32xf32, #tpu.memory_space<vmem>>, %arg9: memref<1x1x128xi32, #tpu.memory_space<vmem>>, %arg10: memref<1x1x1xf32, #tpu.memory_space<vmem>>) attributes {dimension_semantics = [#tpu.dimension_semantics<parallel>], iteration_bounds = array<i64: 1>, scalar_prefetch = 0 : i64, scratch_operands = 0 : i64, tpu.core_type = #tpu.core_type<tc>, window_params = [{transform_indices = @transform_0, window_bounds = array<i64: 128, 32>}, {pipeline_mode = #tpu.pipeline_mode<synchronous>, transform_indices = @transform_1, window_bounds = array<i64: 32, 16>}, {pipeline_mode = #tpu.pipeline_mode<synchronous>, transform_indices = @transform_2, window_bounds = array<i64: 1, 16>}, {pipeline_mode = #tpu.pipeline_mode<synchronous>, transform_indices = @transform_3, window_bounds = array<i64: 16, 32>}, {pipeline_mode = #tpu.pipeline_mode<synchronous>, transform_indices = @transform_4, window_bounds = array<i64: 1, 32>}, {pipeline_mode = #tpu.pipeline_mode<synchronous>, transform_indices = @transform_5, window_bounds = array<i64: 64, 32>}, {pipeline_mode = #tpu.pipeline_mode<synchronous>, transform_indices = @transform_6, window_bounds = array<i64: 1, 64>}, {transform_indices = @transform_7, window_bounds = array<i64: 128, 32>}, {transform_indices = @transform_8, window_bounds = array<i64: 1, 1, 128>}, {transform_indices = @transform_9, window_bounds = array<i64: 1, 1, 1>}]} {
    %c0 = arith.constant 0 : index
    %c0_0 = arith.constant 0 : index
    %0 = vector.load %arg1[%c0, %c0_0] : memref<128x32xf32, #tpu.memory_space<vmem>>, vector<128x32xf32>
    %c0_1 = arith.constant 0 : index
    %c0_2 = arith.constant 0 : index
    %1 = vector.load %arg2[%c0_1, %c0_2] : memref<32x16xf32, #tpu.memory_space<vmem>>, vector<32x16xf32>
    %cst = arith.constant dense<0.000000e+00> : vector<128x16xf32>
    %2 = tpu.matmul %0, %1, %cst {dimension_numbers = #tpu.dot_dimension_numbers<[1], [0], [0], [1], [0, 0, 1, 1], [], []>} : vector<128x32xf32>, vector<32x16xf32>, vector<128x16xf32> -> vector<128x16xf32>
    %c0_3 = arith.constant 0 : index
    %c0_4 = arith.constant 0 : index
    %3 = vector.load %arg3[%c0_3, %c0_4] : memref<1x16xf32, #tpu.memory_space<vmem>>, vector<1x16xf32>
    %4 = vector.broadcast %3 : vector<1x16xf32> to vector<128x16xf32>
    %5 = arith.addf %2, %4 : vector<128x16xf32>
    %cst_5 = arith.constant 0.000000e+00 : f32
    %6 = vector.broadcast %cst_5 : f32 to vector<128x16xf32>
    %7 = arith.maximumf %5, %6 : vector<128x16xf32>
    %c0_6 = arith.constant 0 : index
    %c0_7 = arith.constant 0 : index
    %8 = vector.load %arg4[%c0_6, %c0_7] : memref<16x32xf32, #tpu.memory_space<vmem>>, vector<16x32xf32>
    %cst_8 = arith.constant dense<0.000000e+00> : vector<128x32xf32>
    %9 = tpu.matmul %7, %8, %cst_8 {dimension_numbers = #tpu.dot_dimension_numbers<[1], [0], [0], [1], [0, 0, 1, 1], [], []>} : vector<128x16xf32>, vector<16x32xf32>, vector<128x32xf32> -> vector<128x32xf32>
    %c0_9 = arith.constant 0 : index
    %c0_10 = arith.constant 0 : index
    %10 = vector.load %arg5[%c0_9, %c0_10] : memref<1x32xf32, #tpu.memory_space<vmem>>, vector<1x32xf32>
    %11 = vector.broadcast %10 : vector<1x32xf32> to vector<128x32xf32>
    %12 = arith.addf %9, %11 : vector<128x32xf32>
    %cst_11 = arith.constant 0x7F800000 : f32
    %13 = vector.broadcast %cst_11 : f32 to vector<128x1xf32>
    %c0_i32 = arith.constant 0 : i32
    %14 = vector.broadcast %c0_i32 : i32 to vector<128x1xi32>
    %c0_12 = arith.constant 0 : index
    %c0_13 = arith.constant 0 : index
    %15 = vector.load %arg7[%c0_12, %c0_13] : memref<1x64xf32, #tpu.memory_space<vmem>>, vector<1x64xf32>
    %c0_14 = arith.constant 0 : index
    %c0_15 = arith.constant 0 : index
    %16 = vector.load %arg6[%c0_14, %c0_15] : memref<64x32xf32, #tpu.memory_space<vmem>>, vector<64x32xf32>
    %cst_16 = arith.constant dense<0.000000e+00> : vector<128x64xf32>
    %17 = tpu.matmul %12, %16, %cst_16 {dimension_numbers = #tpu.dot_dimension_numbers<[1], [1], [0], [0], [0, 0, 1, 0], [], []>} : vector<128x32xf32>, vector<64x32xf32>, vector<128x64xf32> -> vector<128x64xf32>
    %cst_17 = arith.constant 2.000000e+00 : f32
    %18 = vector.broadcast %cst_17 : f32 to vector<128x64xf32>
    %19 = arith.mulf %18, %17 : vector<128x64xf32>
    %20 = vector.broadcast %15 : vector<1x64xf32> to vector<128x64xf32>
    %21 = arith.subf %20, %19 : vector<128x64xf32>
    %cst_18 = arith.constant dense<0x7F800000> : vector<128xf32>
    %22 = vector.multi_reduction <minimumf>, %21, %cst_18 [1] : vector<128x64xf32> to vector<128xf32>
    %23 = vector.shape_cast %22 : vector<128xf32> to vector<128x1xf32>
    %24 = tpu.iota {dimensions = array<i32: 1>} : vector<128x64xi32>
    %25 = vector.broadcast %23 : vector<128x1xf32> to vector<128x64xf32>
    %26 = arith.cmpf oeq, %21, %25 : vector<128x64xf32>
    %c0_i32_19 = arith.constant 0 : i32
    %27 = vector.broadcast %c0_i32_19 : i32 to vector<128x64xi32>
    %28 = arith.addi %24, %27 : vector<128x64xi32>
    %29 = arith.sitofp %28 : vector<128x64xi32> to vector<128x64xf32>
    %cst_20 = arith.constant 6.400000e+01 : f32
    %30 = vector.broadcast %cst_20 : f32 to vector<128x64xf32>
    %31 = arith.select %26, %29, %30 : vector<128x64xi1>, vector<128x64xf32>
    %cst_21 = arith.constant dense<0x7F800000> : vector<128xf32>
    %32 = vector.multi_reduction <minimumf>, %31, %cst_21 [1] : vector<128x64xf32> to vector<128xf32>
    %33 = vector.shape_cast %32 : vector<128xf32> to vector<128x1xf32>
    %34 = arith.fptosi %33 : vector<128x1xf32> to vector<128x1xi32>
    %35 = arith.cmpf olt, %23, %13 : vector<128x1xf32>
    %36 = arith.select %35, %34, %14 : vector<128x1xi1>, vector<128x1xi32>
    %cst_22 = arith.constant 0.000000e+00 : f32
    %37 = vector.broadcast %cst_22 : f32 to vector<128x32xf32>
    %cst_23 = arith.constant 0.000000e+00 : f32
    %38 = vector.broadcast %cst_23 : f32 to vector<1x128xf32>
    %39 = tpu.iota {dimensions = array<i32: 1>} : vector<128x64xi32>
    %c0_i32_24 = arith.constant 0 : i32
    %40 = vector.broadcast %c0_i32_24 : i32 to vector<128x64xi32>
    %41 = arith.addi %39, %40 : vector<128x64xi32>
    %42 = vector.broadcast %36 : vector<128x1xi32> to vector<128x64xi32>
    %43 = arith.cmpi eq, %41, %42 : vector<128x64xi32>
    %44 = arith.extui %43 : vector<128x64xi1> to vector<128x64xi32>
    %45 = arith.sitofp %44 : vector<128x64xi32> to vector<128x64xf32>
    %c0_25 = arith.constant 0 : index
    %c0_26 = arith.constant 0 : index
    %46 = vector.load %arg6[%c0_25, %c0_26] : memref<64x32xf32, #tpu.memory_space<vmem>>, vector<64x32xf32>
    %cst_27 = arith.constant dense<0.000000e+00> : vector<128x32xf32>
    %47 = tpu.matmul %45, %46, %cst_27 {dimension_numbers = #tpu.dot_dimension_numbers<[1], [0], [0], [1], [0, 0, 1, 1], [], []>} : vector<128x64xf32>, vector<64x32xf32>, vector<128x32xf32> -> vector<128x32xf32>
    %48 = arith.addf %37, %47 : vector<128x32xf32>
    %49 = tpu.iota {dimensions = array<i32: 1>} : vector<1x64xi32>
    %50 = arith.sitofp %49 : vector<1x64xi32> to vector<1x64xf32>
    %cst_28 = arith.constant 1.000000e+00 : f32
    %51 = vector.broadcast %cst_28 : f32 to vector<1x64xf32>
    %cst_29 = arith.constant dense<0.000000e+00> : vector<1x128xf32>
    %52 = tpu.matmul %50, %45, %cst_29 {dimension_numbers = #tpu.dot_dimension_numbers<[1], [1], [0], [0], [0, 0, 1, 0], [], []>} : vector<1x64xf32>, vector<128x64xf32>, vector<1x128xf32> -> vector<1x128xf32>
    %cst_30 = arith.constant dense<0.000000e+00> : vector<1x128xf32>
    %53 = tpu.matmul %51, %45, %cst_30 {dimension_numbers = #tpu.dot_dimension_numbers<[1], [1], [0], [0], [0, 0, 1, 0], [], []>} : vector<1x64xf32>, vector<128x64xf32>, vector<1x128xf32> -> vector<1x128xf32>
    %54 = arith.addf %38, %52 : vector<1x128xf32>
    %cst_31 = arith.constant 0.000000e+00 : f32
    %55 = vector.broadcast %cst_31 : f32 to vector<1x128xf32>
    %56 = arith.mulf %55, %53 : vector<1x128xf32>
    %57 = arith.addf %54, %56 : vector<1x128xf32>
    %c0_32 = arith.constant 0 : index
    %c0_33 = arith.constant 0 : index
    %58 = vector.load %arg8[%c0_32, %c0_33] : memref<128x32xf32, #tpu.memory_space<vmem>>, vector<128x32xf32>
    tpu.vector_store %arg8[%c0_32, %c0_33], %48 {strides = array<i32>} : memref<128x32xf32, #tpu.memory_space<vmem>>, vector<128x32xf32>,
    %59 = arith.fptosi %57 : vector<1x128xf32> to vector<1x128xi32>
    %c0_34 = arith.constant 0 : index
    %c0_35 = arith.constant 0 : index
    %c0_36 = arith.constant 0 : index
    %60 = vector.load %arg9[%c0_34, %c0_35, %c0_36] : memref<1x1x128xi32, #tpu.memory_space<vmem>>, vector<1x1x128xi32>
    %61 = vector.shape_cast %60 : vector<1x1x128xi32> to vector<1x128xi32>
    %62 = vector.shape_cast %59 : vector<1x128xi32> to vector<1x1x128xi32>
    tpu.vector_store %arg9[%c0_34, %c0_35, %c0_36], %62 {strides = array<i32>} : memref<1x1x128xi32, #tpu.memory_space<vmem>>, vector<1x1x128xi32>,
    %63 = arith.subf %48, %12 : vector<128x32xf32>
    %64 = arith.mulf %63, %63 : vector<128x32xf32>
    %cst_37 = arith.constant dense<0.000000e+00> : vector<128xf32>
    %65 = vector.multi_reduction <add>, %64, %cst_37 [1] : vector<128x32xf32> to vector<128xf32>
    %66 = vector.shape_cast %65 : vector<128xf32> to vector<128x1xf32>
    %cst_38 = arith.constant dense<0.000000e+00> : vector<1xf32>
    %67 = vector.multi_reduction <add>, %66, %cst_38 [0] : vector<128x1xf32> to vector<1xf32>
    %68 = vector.shape_cast %67 : vector<1xf32> to vector<1x1xf32>
    %c0_39 = arith.constant 0 : index
    %c0_40 = arith.constant 0 : index
    %c0_41 = arith.constant 0 : index
    %69 = vector.load %arg10[%c0_39, %c0_40, %c0_41] : memref<1x1x1xf32, #tpu.memory_space<vmem>>, vector<1x1x1xf32>
    %70 = vector.shape_cast %69 : vector<1x1x1xf32> to vector<1x1xf32>
    %71 = vector.shape_cast %68 : vector<1x1xf32> to vector<1x1x1xf32>
    tpu.vector_store %arg10[%c0_39, %c0_40, %c0_41], %71 {strides = array<i32>} : memref<1x1x1xf32, #tpu.memory_space<vmem>>, vector<1x1x1xf32>,
    %c0_i32_42 = arith.constant 0 : i32
    %72 = arith.cmpi eq, %arg0, %c0_i32_42 : i32
    %73 = arith.extui %72 : i1 to i32
    %c0_i32_43 = arith.constant 0 : i32
    %74 = arith.cmpi ne, %73, %c0_i32_43 : i32
    scf.if %74 {
      %c128_i32 = arith.constant 128 : i32
      %75 = arith.muli %arg0, %c128_i32 : i32
      %76 = tpu.iota {dimensions = array<i32: 0>} : vector<128x1xi32>
      %77 = vector.broadcast %75 : i32 to vector<128x1xi32>
      %78 = arith.addi %77, %76 : vector<128x1xi32>
      %c16_i32 = arith.constant 16 : i32
      %79 = vector.broadcast %c16_i32 : i32 to vector<128x1xi32>
      %80 = arith.cmpi slt, %78, %79 : vector<128x1xi32>
      %cst_44 = arith.constant 0.000000e+00 : f32
      %81 = vector.shape_cast %80 : vector<128x1xi1> to vector<128x1xi1>
      %82 = vector.broadcast %81 : vector<128x1xi1> to vector<128x32xi1>
      %83 = vector.broadcast %cst_44 : f32 to vector<128x32xf32>
      %84 = arith.select %82, %63, %83 : vector<128x32xi1>, vector<128x32xf32>
      %85 = arith.mulf %84, %84 : vector<128x32xf32>
      %cst_45 = arith.constant dense<0.000000e+00> : vector<128xf32>
      %86 = vector.multi_reduction <add>, %85, %cst_45 [1] : vector<128x32xf32> to vector<128xf32>
      %87 = vector.shape_cast %86 : vector<128xf32> to vector<128x1xf32>
      %cst_46 = arith.constant dense<0.000000e+00> : vector<1xf32>
      %88 = vector.multi_reduction <add>, %87, %cst_46 [0] : vector<128x1xf32> to vector<1xf32>
      %89 = vector.shape_cast %88 : vector<1xf32> to vector<1x1xf32>
      %c0_47 = arith.constant 0 : index
      %c0_48 = arith.constant 0 : index
      %c0_49 = arith.constant 0 : index
      %90 = vector.load %arg10[%c0_47, %c0_48, %c0_49] : memref<1x1x1xf32, #tpu.memory_space<vmem>>, vector<1x1x1xf32>
      %91 = vector.shape_cast %90 : vector<1x1x1xf32> to vector<1x1xf32>
      %92 = vector.shape_cast %89 : vector<1x1xf32> to vector<1x1x1xf32>
      tpu.vector_store %arg10[%c0_47, %c0_48, %c0_49], %92 {strides = array<i32>} : memref<1x1x1xf32, #tpu.memory_space<vmem>>, vector<1x1x1xf32>,
    } else {
    }
    return
  }
  func.func @transform_0(%arg0: i32) -> (i32, i32) {
    %c0_i32 = arith.constant 0 : i32
    %c0_i32_0 = arith.constant 0 : i32
    return %arg0, %c0_i32 : i32, i32
  }
  func.func @transform_1(%arg0: i32) -> (i32, i32) {
    %c0_i32 = arith.constant 0 : i32
    %c0_i32_0 = arith.constant 0 : i32
    %c0_i32_1 = arith.constant 0 : i32
    return %c0_i32, %c0_i32_0 : i32, i32
  }
  func.func @transform_2(%arg0: i32) -> (i32, i32) {
    %c0_i32 = arith.constant 0 : i32
    %c0_i32_0 = arith.constant 0 : i32
    %c0_i32_1 = arith.constant 0 : i32
    return %c0_i32, %c0_i32_0 : i32, i32
  }
  func.func @transform_3(%arg0: i32) -> (i32, i32) {
    %c0_i32 = arith.constant 0 : i32
    %c0_i32_0 = arith.constant 0 : i32
    %c0_i32_1 = arith.constant 0 : i32
    return %c0_i32, %c0_i32_0 : i32, i32
  }
  func.func @transform_4(%arg0: i32) -> (i32, i32) {
    %c0_i32 = arith.constant 0 : i32
    %c0_i32_0 = arith.constant 0 : i32
    %c0_i32_1 = arith.constant 0 : i32
    return %c0_i32, %c0_i32_0 : i32, i32
  }
  func.func @transform_5(%arg0: i32) -> (i32, i32) {
    %c0_i32 = arith.constant 0 : i32
    %c0_i32_0 = arith.constant 0 : i32
    %c0_i32_1 = arith.constant 0 : i32
    return %c0_i32, %c0_i32_0 : i32, i32
  }
  func.func @transform_6(%arg0: i32) -> (i32, i32) {
    %c0_i32 = arith.constant 0 : i32
    %c0_i32_0 = arith.constant 0 : i32
    %c0_i32_1 = arith.constant 0 : i32
    return %c0_i32, %c0_i32_0 : i32, i32
  }
  func.func @transform_7(%arg0: i32) -> (i32, i32) {
    %c0_i32 = arith.constant 0 : i32
    %c0_i32_0 = arith.constant 0 : i32
    return %arg0, %c0_i32 : i32, i32
  }
  func.func @transform_8(%arg0: i32) -> (i32, i32, i32) {
    %c0_i32 = arith.constant 0 : i32
    %c0_i32_0 = arith.constant 0 : i32
    %c0_i32_1 = arith.constant 0 : i32
    return %arg0, %c0_i32, %c0_i32_0 : i32, i32, i32
  }
  func.func @transform_9(%arg0: i32) -> (i32, i32, i32) {
    %c0_i32 = arith.constant 0 : i32
    %c0_i32_0 = arith.constant 0 : i32
    %c0_i32_1 = arith.constant 0 : i32
    return %arg0, %c0_i32, %c0_i32_0 : i32, i32, i32
  }
}

module attributes {stable_mosaic.version = 11 : i64} {
  func.func @_hvq_level_kernel(%arg0: i32, %arg1: memref<128x32xf32, #tpu.memory_space<vmem>>, %arg2: memref<32x16xf32, #tpu.memory_space<vmem>>, %arg3: memref<1x16xf32, #tpu.memory_space<vmem>>, %arg4: memref<16x32xf32, #tpu.memory_space<vmem>>, %arg5: memref<1x32xf32, #tpu.memory_space<vmem>>, %arg6: memref<64x32xf32, #tpu.memory_space<vmem>>, %arg7: memref<1x64xf32, #tpu.memory_space<vmem>>, %arg8: memref<128x32xf32, #tpu.memory_space<vmem>>, %arg9: memref<1x1x128xi32, #tpu.memory_space<vmem>>, %arg10: memref<1x1x1xf32, #tpu.memory_space<vmem>>) attributes {dimension_semantics = [#tpu.dimension_semantics<parallel>], iteration_bounds = array<i64: 1>, scalar_prefetch = 0 : i64, scratch_operands = 0 : i64, tpu.core_type = #tpu.core_type<tc>, window_params = [{transform_indices = @transform_0, window_bounds = array<i64: 128, 32>}, {pipeline_mode = #tpu.pipeline_mode<synchronous>, transform_indices = @transform_1, window_bounds = array<i64: 32, 16>}, {pipeline_mode = #tpu.pipeline_mode<synchronous>, transform_indices = @transform_2, window_bounds = array<i64: 1, 16>}, {pipeline_mode = #tpu.pipeline_mode<synchronous>, transform_indices = @transform_3, window_bounds = array<i64: 16, 32>}, {pipeline_mode = #tpu.pipeline_mode<synchronous>, transform_indices = @transform_4, window_bounds = array<i64: 1, 32>}, {pipeline_mode = #tpu.pipeline_mode<synchronous>, transform_indices = @transform_5, window_bounds = array<i64: 64, 32>}, {pipeline_mode = #tpu.pipeline_mode<synchronous>, transform_indices = @transform_6, window_bounds = array<i64: 1, 64>}, {transform_indices = @transform_7, window_bounds = array<i64: 128, 32>}, {transform_indices = @transform_8, window_bounds = array<i64: 1, 1, 128>}, {transform_indices = @transform_9, window_bounds = array<i64: 1, 1, 1>}]} {
    %c0 = arith.constant 0 : index
    %c0_0 = arith.constant 0 : index
    %0 = vector.load %arg1[%c0, %c0_0] : memref<128x32xf32, #tpu.memory_space<vmem>>, vector<128x32xf32>
    %c0_1 = arith.constant 0 : index
    %c0_2 = arith.constant 0 : index
    %1 = vector.load %arg2[%c0_1, %c0_2] : memref<32x16xf32, #tpu.memory_space<vmem>>, vector<32x16xf32>
    %cst = arith.constant dense<0.000000e+00> : vector<128x16xf32>
    %2 = tpu.matmul %0, %1, %cst {dimension_numbers = #tpu.dot_dimension_numbers<[1], [0], [0], [1], [0, 0, 1, 1], [], []>} : vector<128x32xf32>, vector<32x16xf32>, vector<128x16xf32> -> vector<128x16xf32>
    %c0_3 = arith.constant 0 : index
    %c0_4 = arith.constant 0 : index
    %3 = vector.load %arg3[%c0_3, %c0_4] : memref<1x16xf32, #tpu.memory_space<vmem>>, vector<1x16xf32>
    %4 = vector.broadcast %3 : vector<1x16xf32> to vector<128x16xf32>
    %5 = arith.addf %2, %4 : vector<128x16xf32>
    %cst_5 = arith.constant 0.000000e+00 : f32
    %6 = vector.broadcast %cst_5 : f32 to vector<128x16xf32>
    %7 = arith.maximumf %5, %6 : vector<128x16xf32>
    %c0_6 = arith.constant 0 : index
    %c0_7 = arith.constant 0 : index
    %8 = vector.load %arg4[%c0_6, %c0_7] : memref<16x32xf32, #tpu.memory_space<vmem>>, vector<16x32xf32>
    %cst_8 = arith.constant dense<0.000000e+00> : vector<128x32xf32>
    %9 = tpu.matmul %7, %8, %cst_8 {dimension_numbers = #tpu.dot_dimension_numbers<[1], [0], [0], [1], [0, 0, 1, 1], [], []>} : vector<128x16xf32>, vector<16x32xf32>, vector<128x32xf32> -> vector<128x32xf32>
    %c0_9 = arith.constant 0 : index
    %c0_10 = arith.constant 0 : index
    %10 = vector.load %arg5[%c0_9, %c0_10] : memref<1x32xf32, #tpu.memory_space<vmem>>, vector<1x32xf32>
    %11 = vector.broadcast %10 : vector<1x32xf32> to vector<128x32xf32>
    %12 = arith.addf %9, %11 : vector<128x32xf32>
    %cst_11 = arith.constant 0x7F800000 : f32
    %13 = vector.broadcast %cst_11 : f32 to vector<128x1xf32>
    %c0_i32 = arith.constant 0 : i32
    %14 = vector.broadcast %c0_i32 : i32 to vector<128x1xi32>
    %c0_12 = arith.constant 0 : index
    %c0_13 = arith.constant 0 : index
    %15 = vector.load %arg7[%c0_12, %c0_13] : memref<1x64xf32, #tpu.memory_space<vmem>>, vector<1x64xf32>
    %c0_14 = arith.constant 0 : index
    %c0_15 = arith.constant 0 : index
    %16 = vector.load %arg6[%c0_14, %c0_15] : memref<64x32xf32, #tpu.memory_space<vmem>>, vector<64x32xf32>
    %cst_16 = arith.constant dense<0.000000e+00> : vector<128x64xf32>
    %17 = tpu.matmul %12, %16, %cst_16 {dimension_numbers = #tpu.dot_dimension_numbers<[1], [1], [0], [0], [0, 0, 1, 0], [], []>} : vector<128x32xf32>, vector<64x32xf32>, vector<128x64xf32> -> vector<128x64xf32>
    %cst_17 = arith.constant 2.000000e+00 : f32
    %18 = vector.broadcast %cst_17 : f32 to vector<128x64xf32>
    %19 = arith.mulf %18, %17 : vector<128x64xf32>
    %20 = vector.broadcast %15 : vector<1x64xf32> to vector<128x64xf32>
    %21 = arith.subf %20, %19 : vector<128x64xf32>
    %cst_18 = arith.constant dense<0x7F800000> : vector<128xf32>
    %22 = vector.multi_reduction <minimumf>, %21, %cst_18 [1] : vector<128x64xf32> to vector<128xf32>
    %23 = vector.shape_cast %22 : vector<128xf32> to vector<128x1xf32>
    %24 = tpu.iota {dimensions = array<i32: 1>} : vector<128x64xi32>
    %25 = vector.broadcast %23 : vector<128x1xf32> to vector<128x64xf32>
    %26 = arith.cmpf oeq, %21, %25 : vector<128x64xf32>
    %c0_i32_19 = arith.constant 0 : i32
    %27 = vector.broadcast %c0_i32_19 : i32 to vector<128x64xi32>
    %28 = arith.addi %24, %27 : vector<128x64xi32>
    %29 = arith.sitofp %28 : vector<128x64xi32> to vector<128x64xf32>
    %cst_20 = arith.constant 6.400000e+01 : f32
    %30 = vector.broadcast %cst_20 : f32 to vector<128x64xf32>
    %31 = arith.select %26, %29, %30 : vector<128x64xi1>, vector<128x64xf32>
    %cst_21 = arith.constant dense<0x7F800000> : vector<128xf32>
    %32 = vector.multi_reduction <minimumf>, %31, %cst_21 [1] : vector<128x64xf32> to vector<128xf32>
    %33 = vector.shape_cast %32 : vector<128xf32> to vector<128x1xf32>
    %34 = arith.fptosi %33 : vector<128x1xf32> to vector<128x1xi32>
    %35 = arith.cmpf olt, %23, %13 : vector<128x1xf32>
    %36 = arith.select %35, %34, %14 : vector<128x1xi1>, vector<128x1xi32>
    %cst_22 = arith.constant 0.000000e+00 : f32
    %37 = vector.broadcast %cst_22 : f32 to vector<128x32xf32>
    %cst_23 = arith.constant 0.000000e+00 : f32
    %38 = vector.broadcast %cst_23 : f32 to vector<1x128xf32>
    %39 = tpu.iota {dimensions = array<i32: 1>} : vector<128x64xi32>
    %c0_i32_24 = arith.constant 0 : i32
    %40 = vector.broadcast %c0_i32_24 : i32 to vector<128x64xi32>
    %41 = arith.addi %39, %40 : vector<128x64xi32>
    %42 = vector.broadcast %36 : vector<128x1xi32> to vector<128x64xi32>
    %43 = arith.cmpi eq, %41, %42 : vector<128x64xi32>
    %44 = arith.extui %43 : vector<128x64xi1> to vector<128x64xi32>
    %45 = arith.sitofp %44 : vector<128x64xi32> to vector<128x64xf32>
    %c0_25 = arith.constant 0 : index
    %c0_26 = arith.constant 0 : index
    %46 = vector.load %arg6[%c0_25, %c0_26] : memref<64x32xf32, #tpu.memory_space<vmem>>, vector<64x32xf32>
    %cst_27 = arith.constant dense<0.000000e+00> : vector<128x32xf32>
    %47 = tpu.matmul %45, %46, %cst_27 {dimension_numbers = #tpu.dot_dimension_numbers<[1], [0], [0], [1], [0, 0, 1, 1], [], []>} : vector<128x64xf32>, vector<64x32xf32>, vector<128x32xf32> -> vector<128x32xf32>
    %48 = arith.addf %37, %47 : vector<128x32xf32>
    %49 = tpu.iota {dimensions = array<i32: 1>} : vector<1x64xi32>
    %50 = arith.sitofp %49 : vector<1x64xi32> to vector<1x64xf32>
    %cst_28 = arith.constant 1.000000e+00 : f32
    %51 = vector.broadcast %cst_28 : f32 to vector<1x64xf32>
    %cst_29 = arith.constant dense<0.000000e+00> : vector<1x128xf32>
    %52 = tpu.matmul %50, %45, %cst_29 {dimension_numbers = #tpu.dot_dimension_numbers<[1], [1], [0], [0], [0, 0, 1, 0], [], []>} : vector<1x64xf32>, vector<128x64xf32>, vector<1x128xf32> -> vector<1x128xf32>
    %cst_30 = arith.constant dense<0.000000e+00> : vector<1x128xf32>
    %53 = tpu.matmul %51, %45, %cst_30 {dimension_numbers = #tpu.dot_dimension_numbers<[1], [1], [0], [0], [0, 0, 1, 0], [], []>} : vector<1x64xf32>, vector<128x64xf32>, vector<1x128xf32> -> vector<1x128xf32>
    %54 = arith.addf %38, %52 : vector<1x128xf32>
    %cst_31 = arith.constant 0.000000e+00 : f32
    %55 = vector.broadcast %cst_31 : f32 to vector<1x128xf32>
    %56 = arith.mulf %55, %53 : vector<1x128xf32>
    %57 = arith.addf %54, %56 : vector<1x128xf32>
    %c0_32 = arith.constant 0 : index
    %c0_33 = arith.constant 0 : index
    %58 = vector.load %arg8[%c0_32, %c0_33] : memref<128x32xf32, #tpu.memory_space<vmem>>, vector<128x32xf32>
    tpu.vector_store %arg8[%c0_32, %c0_33], %48 {strides = array<i32>} : memref<128x32xf32, #tpu.memory_space<vmem>>, vector<128x32xf32>,
    %59 = arith.fptosi %57 : vector<1x128xf32> to vector<1x128xi32>
    %c0_34 = arith.constant 0 : index
    %c0_35 = arith.constant 0 : index
    %c0_36 = arith.constant 0 : index
    %60 = vector.load %arg9[%c0_34, %c0_35, %c0_36] : memref<1x1x128xi32, #tpu.memory_space<vmem>>, vector<1x1x128xi32>
    %61 = vector.shape_cast %60 : vector<1x1x128xi32> to vector<1x128xi32>
    %62 = vector.shape_cast %59 : vector<1x128xi32> to vector<1x1x128xi32>
    tpu.vector_store %arg9[%c0_34, %c0_35, %c0_36], %62 {strides = array<i32>} : memref<1x1x128xi32, #tpu.memory_space<vmem>>, vector<1x1x128xi32>,
    %63 = arith.subf %48, %12 : vector<128x32xf32>
    %64 = arith.mulf %63, %63 : vector<128x32xf32>
    %cst_37 = arith.constant dense<0.000000e+00> : vector<128xf32>
    %65 = vector.multi_reduction <add>, %64, %cst_37 [1] : vector<128x32xf32> to vector<128xf32>
    %66 = vector.shape_cast %65 : vector<128xf32> to vector<128x1xf32>
    %cst_38 = arith.constant dense<0.000000e+00> : vector<1xf32>
    %67 = vector.multi_reduction <add>, %66, %cst_38 [0] : vector<128x1xf32> to vector<1xf32>
    %68 = vector.shape_cast %67 : vector<1xf32> to vector<1x1xf32>
    %c0_39 = arith.constant 0 : index
    %c0_40 = arith.constant 0 : index
    %c0_41 = arith.constant 0 : index
    %69 = vector.load %arg10[%c0_39, %c0_40, %c0_41] : memref<1x1x1xf32, #tpu.memory_space<vmem>>, vector<1x1x1xf32>
    %70 = vector.shape_cast %69 : vector<1x1x1xf32> to vector<1x1xf32>
    %71 = vector.shape_cast %68 : vector<1x1xf32> to vector<1x1x1xf32>
    tpu.vector_store %arg10[%c0_39, %c0_40, %c0_41], %71 {strides = array<i32>} : memref<1x1x1xf32, #tpu.memory_space<vmem>>, vector<1x1x1xf32>,
    %c0_i32_42 = arith.constant 0 : i32
    %72 = arith.cmpi eq, %arg0, %c0_i32_42 : i32
    %73 = arith.extui %72 : i1 to i32
    %c0_i32_43 = arith.constant 0 : i32
    %74 = arith.cmpi ne, %73, %c0_i32_43 : i32
    scf.if %74 {
      %c128_i32 = arith.constant 128 : i32
      %75 = arith.muli %arg0, %c128_i32 : i32
      %76 = tpu.iota {dimensions = array<i32: 0>} : vector<128x1xi32>
      %77 = vector.broadcast %75 : i32 to vector<128x1xi32>
      %78 = arith.addi %77, %76 : vector<128x1xi32>
      %c16_i32 = arith.constant 16 : i32
      %79 = vector.broadcast %c16_i32 : i32 to vector<128x1xi32>
      %80 = arith.cmpi slt, %78, %79 : vector<128x1xi32>
      %cst_44 = arith.constant 0.000000e+00 : f32
      %81 = vector.shape_cast %80 : vector<128x1xi1> to vector<128x1xi1>
      %82 = vector.broadcast %81 : vector<128x1xi1> to vector<128x32xi1>
      %83 = vector.broadcast %cst_44 : f32 to vector<128x32xf32>
      %84 = arith.select %82, %63, %83 : vector<128x32xi1>, vector<128x32xf32>
      %85 = arith.mulf %84, %84 : vector<128x32xf32>
      %cst_45 = arith.constant dense<0.000000e+00> : vector<128xf32>
      %86 = vector.multi_reduction <add>, %85, %cst_45 [1] : vector<128x32xf32> to vector<128xf32>
      %87 = vector.shape_cast %86 : vector<128xf32> to vector<128x1xf32>
      %cst_46 = arith.constant dense<0.000000e+00> : vector<1xf32>
      %88 = vector.multi_reduction <add>, %87, %cst_46 [0] : vector<128x1xf32> to vector<1xf32>
      %89 = vector.shape_cast %88 : vector<1xf32> to vector<1x1xf32>
      %c0_47 = arith.constant 0 : index
      %c0_48 = arith.constant 0 : index
      %c0_49 = arith.constant 0 : index
      %90 = vector.load %arg10[%c0_47, %c0_48, %c0_49] : memref<1x1x1xf32, #tpu.memory_space<vmem>>, vector<1x1x1xf32>
      %91 = vector.shape_cast %90 : vector<1x1x1xf32> to vector<1x1xf32>
      %92 = vector.shape_cast %89 : vector<1x1xf32> to vector<1x1x1xf32>
      tpu.vector_store %arg10[%c0_47, %c0_48, %c0_49], %92 {strides = array<i32>} : memref<1x1x1xf32, #tpu.memory_space<vmem>>, vector<1x1x1xf32>,
    } else {
    }
    return
  }
  func.func @transform_0(%arg0: i32) -> (i32, i32) {
    %c0_i32 = arith.constant 0 : i32
    %c0_i32_0 = arith.constant 0 : i32
    return %arg0, %c0_i32 : i32, i32
  }
  func.func @transform_1(%arg0: i32) -> (i32, i32) {
    %c0_i32 = arith.constant 0 : i32
    %c0_i32_0 = arith.constant 0 : i32
    %c0_i32_1 = arith.constant 0 : i32
    return %c0_i32, %c0_i32_0 : i32, i32
  }
  func.func @transform_2(%arg0: i32) -> (i32, i32) {
    %c0_i32 = arith.constant 0 : i32
    %c0_i32_0 = arith.constant 0 : i32
    %c0_i32_1 = arith.constant 0 : i32
    return %c0_i32, %c0_i32_0 : i32, i32
  }
  func.func @transform_3(%arg0: i32) -> (i32, i32) {
    %c0_i32 = arith.constant 0 : i32
    %c0_i32_0 = arith.constant 0 : i32
    %c0_i32_1 = arith.constant 0 : i32
    return %c0_i32, %c0_i32_0 : i32, i32
  }
  func.func @transform_4(%arg0: i32) -> (i32, i32) {
    %c0_i32 = arith.constant 0 : i32
    %c0_i32_0 = arith.constant 0 : i32
    %c0_i32_1 = arith.constant 0 : i32
    return %c0_i32, %c0_i32_0 : i32, i32
  }
  func.func @transform_5(%arg0: i32) -> (i32, i32) {
    %c0_i32 = arith.constant 0 : i32
    %c0_i32_0 = arith.constant 0 : i32
    %c0_i32_1 = arith.constant 0 : i32
    return %c0_i32, %c0_i32_0 : i32, i32
  }
  func.func @transform_6(%arg0: i32) -> (i32, i32) {
    %c0_i32 = arith.constant 0 : i32
    %c0_i32_0 = arith.constant 0 : i32
    %c0_i32_1 = arith.constant 0 : i32
    return %c0_i32, %c0_i32_0 : i32, i32
  }
  func.func @transform_7(%arg0: i32) -> (i32, i32) {
    %c0_i32 = arith.constant 0 : i32
    %c0_i32_0 = arith.constant 0 : i32
    return %arg0, %c0_i32 : i32, i32
  }
  func.func @transform_8(%arg0: i32) -> (i32, i32, i32) {
    %c0_i32 = arith.constant 0 : i32
    %c0_i32_0 = arith.constant 0 : i32
    %c0_i32_1 = arith.constant 0 : i32
    return %arg0, %c0_i32, %c0_i32_0 : i32, i32, i32
  }
  func.func @transform_9(%arg0: i32) -> (i32, i32, i32) {
    %c0_i32 = arith.constant 0 : i32
    %c0_i32_0 = arith.constant 0 : i32
    %c0_i32_1 = arith.constant 0 : i32
    return %arg0, %c0_i32, %c0_i32_0 : i32, i32, i32
  }
}

</mosaic_0001>

<llo_original>
// kernel: tpu_custom_call.1
$region0: #{tpu_custom_call.1}
  #allocation0 [shape = 'u32[]', space=smem, size = 0x4, offset = 0x4, fixed_abs, tag = 'smem constant byte address 0x4 - core index']
  #allocation1 [shape = 'u32[144,128]{1,0:T(1,128)}', space=vmem, size = 0x12000, scoped, tag = 'internal scratch']
  %s0 = inlined_call_operand.vmem [shape: f32[128,32], index: 0, kind: input, shape index: {}]
  %s1 = inlined_call_operand.vmem [shape: f32[32,16], index: 1, kind: input, shape index: {}]
  %s2 = inlined_call_operand.vmem [shape: f32[1,16], index: 2, kind: input, shape index: {}]
  %s3 = inlined_call_operand.vmem [shape: f32[16,32], index: 3, kind: input, shape index: {}]
  %s4 = inlined_call_operand.vmem [shape: f32[1,32], index: 4, kind: input, shape index: {}]
  %s5 = inlined_call_operand.vmem [shape: f32[64,32], index: 5, kind: input, shape index: {}]
  %s6 = inlined_call_operand.vmem [shape: f32[1,64], index: 6, kind: input, shape index: {}]
  %s7 = inlined_call_operand.vmem [shape: f32[128,32], index: 7, kind: output, shape index: {0}]
  %s8 = inlined_call_operand.hbm [shape: s32[1,1,128], index: 8, kind: output, shape index: {1}]
  %s9 = inlined_call_operand.hbm [shape: f32[1,1,1], index: 9, kind: output, shape index: {2}]
  %10 = xla_tuple %s7, %s8, %s9
  %s11 = sld [smem:[#allocation0]]
  $region58: #{tpu_custom_call.1} parent=0
    _
  %s13 = ssub.s32 1, %s11
  %s14 = scalar_select 0, %s13, %s11
  $region1: #{tpu_custom_call.1} parent=0
    #allocation2 [shape = 'u8[512]{0}', space=vmem, size = 0x400, scoped, tag = 'output window, operand 1, single buffered']
    #allocation3 [shape = 's32[1]{0}', space=sflag, size = 0x4, scoped, tag = 'scoped memory for tpu_custom_call.1']
    #allocation4 [shape = 'u8[512]{0}', space=vmem, size = 0x400, scoped, tag = 'output window, operand 2, single buffered']
    #allocation5 [shape = 's32[1]{0}', space=sflag, size = 0x4, scoped, tag = 'scoped memory for tpu_custom_call.1']
    %15 = vsyncpa [#allocation3], 0
    %16 = vsyncpa [#allocation5], 0
    // Predicated region
    $region2: #{tpu_custom_call.1} parent=1 // pred_check
      _
    $region3: #{tpu_custom_call.1} parent=1 // pred_check_branch
      %18 = sbr.rel (0) target = $region5
    $region4: #{tpu_custom_call.1} parent=1 // pred_region
      _
    $region5: #{tpu_custom_call.1} parent=1 // pred_fallthru
      _
    // Predicated region
    $region6: #{tpu_custom_call.1} parent=1 // pred_check
      _
    $region7: #{tpu_custom_call.1} parent=1 // pred_check_branch
      %20 = sbr.rel (0) target = $region9
    $region8: #{tpu_custom_call.1} parent=1 // pred_region
      _
    $region9: #{tpu_custom_call.1} parent=1 // pred_fallthru
      _
    // Predicated region
    $region10: #{tpu_custom_call.1} parent=1 // pred_check
      _
    $region11: #{tpu_custom_call.1} parent=1 // pred_check_branch
      %22 = sbr.rel (0) target = $region13
    $region12: #{tpu_custom_call.1} parent=1 // pred_region
      _
    $region13: #{tpu_custom_call.1} parent=1 // pred_fallthru
      _
    // Predicated region
    $region14: #{tpu_custom_call.1} parent=1 // pred_check
      _
    $region15: #{tpu_custom_call.1} parent=1 // pred_check_branch
      %24 = sbr.rel (0) target = $region17
    $region16: #{tpu_custom_call.1} parent=1 // pred_region
      _
    $region17: #{tpu_custom_call.1} parent=1 // pred_fallthru
      _
    // Predicated region
    $region18: #{tpu_custom_call.1} parent=1 // pred_check
      _
    $region19: #{tpu_custom_call.1} parent=1 // pred_check_branch
      %26 = sbr.rel (0) target = $region21
    $region20: #{tpu_custom_call.1} parent=1 // pred_region
      _
    $region21: #{tpu_custom_call.1} parent=1 // pred_fallthru
      _
    // Predicated region
    $region22: #{tpu_custom_call.1} parent=1 // pred_check
      _
    $region23: #{tpu_custom_call.1} parent=1 // pred_check_branch
      %28 = sbr.rel (0) target = $region25
    $region24: #{tpu_custom_call.1} parent=1 // pred_region
      _
    $region25: #{tpu_custom_call.1} parent=1 // pred_fallthru
      _
    // Predicated region
    $region26: #{tpu_custom_call.1} parent=1 // pred_check
      _
    $region27: #{tpu_custom_call.1} parent=1 // pred_check_branch
      %30 = sbr.rel (0) target = $region29
    $region28: #{tpu_custom_call.1} parent=1 // pred_region
      _
    $region29: #{tpu_custom_call.1} parent=1 // pred_fallthru
      _
    %v31 = vld [vmem:[%s0] sm:$0xff]
    %v32 = vld [vmem:[%s0 + $0x8] sm:$0xff]
    %v33 = vld [vmem:[%s0 + $0x10] sm:$0xff]
    %v34 = vld [vmem:[%s0 + $0x18] sm:$0xff]
    %v35 = vld [vmem:[%s0 + $0x20] sm:$0xff]
    %v36 = vld [vmem:[%s0 + $0x28] sm:$0xff]
    %v37 = vld [vmem:[%s0 + $0x30] sm:$0xff]
    %v38 = vld [vmem:[%s0 + $0x38] sm:$0xff]
    %v39 = vld [vmem:[%s0 + $0x40] sm:$0xff]
    %v40 = vld [vmem:[%s0 + $0x48] sm:$0xff]
    %v41 = vld [vmem:[%s0 + $0x50] sm:$0xff]
    %v42 = vld [vmem:[%s0 + $0x58] sm:$0xff]
    %v43 = vld [vmem:[%s0 + $0x60] sm:$0xff]
    %v44 = vld [vmem:[%s0 + $0x68] sm:$0xff]
    %v45 = vld [vmem:[%s0 + $0x70] sm:$0xff]
    %v46 = vld [vmem:[%s0 + $0x78] sm:$0xff]
    %v47 = vld [vmem:[%s1] sm:$0xff]
    %v48 = vld [vmem:[%s1 + $0x8] sm:$0xff]
    %v49 = vld [vmem:[%s1 + $0x10] sm:$0xff]
    %v50 = vld [vmem:[%s1 + $0x18] sm:$0xff]
    %v51 = vld [vmem:[%s2] sm:$0x1]
    %v53 = vlaneseq
    %v54 = vshrl.u32 %v53, 7
    %v55 = vsub.s32 0, %v54
    %v56 = vrot.slane %v51, %v55
    %vm58 = vcmask 261120
    %v60 = vsel %vm58, %v31, 0
    %v63 = vsel %vm58, %v32, 0
    %v66 = vsel %vm58, %v33, 0
    %v69 = vsel %vm58, %v34, 0
    %v72 = vsel %vm58, %v35, 0
    %v75 = vsel %vm58, %v36, 0
    %v78 = vsel %vm58, %v37, 0
    %v81 = vsel %vm58, %v38, 0
    %v84 = vsel %vm58, %v39, 0
    %v87 = vsel %vm58, %v40, 0
    %v90 = vsel %vm58, %v41, 0
    %v93 = vsel %vm58, %v42, 0
    %v96 = vsel %vm58, %v43, 0
    %v99 = vsel %vm58, %v44, 0
    %v102 = vsel %vm58, %v45, 0
    %v105 = vsel %vm58, %v46, 0
    %107 = vmatprep.subr.mxu0 0.0
    %108 = vmatpush1.msra.mxu0 %v47
    %109 = vmatprep.subr.mxu0 0.0
    %110 = vmatpush1.msra.mxu0 %v48
    %111 = vmatprep.subr.mxu0 0.0
    %112 = vmatpush1.msra.mxu0 %v49
    %113 = vmatprep.subr.mxu0 0.0
    %114 = vmatpush1.msra.mxu0 %v50
    %115 = vmatprep.subr.mxu0 0.0
    %116 = vmatpush1.msra.mxu0 0.0
    %117 = vmatprep.subr.mxu0 0.0
    %118 = vmatpush1.msra.mxu0 0.0
    %119 = vmatprep.subr.mxu0 0.0
    %120 = vmatpush1.msra.mxu0 0.0
    %121 = vmatprep.subr.mxu0 0.0
    %122 = vmatpush1.msra.mxu0 0.0
    %123 = vmatprep.subr.mxu0 0.0
    %124 = vmatpush1.msra.mxu0 0.0
    %125 = vmatprep.subr.mxu0 0.0
    %126 = vmatpush1.msra.mxu0 0.0
    %127 = vmatprep.subr.mxu0 0.0
    %128 = vmatpush1.msra.mxu0 0.0
    %129 = vmatprep.subr.mxu0 0.0
    %130 = vmatpush1.msra.mxu0 0.0
    %131 = vmatprep.subr.mxu0 0.0
    %132 = vmatpush1.msra.mxu0 0.0
    %133 = vmatprep.subr.mxu0 0.0
    %134 = vmatpush1.msra.mxu0 0.0
    %135 = vmatprep.subr.mxu0 0.0
    %136 = vmatpush1.msra.mxu0 0.0
    %137 = vmatprep.subr.mxu0 0.0
    %138 = vmatpush1.msra.mxu0 0.0
    %139 = vmatprep.subr.mxu0 0.0
    %140 = vmatpush1.msra.mxu0 0.0
    %141 = vmatprep.subr.mxu0 0.0
    %142 = vmatpush1.msra.mxu0 0.0
    %143 = vmatprep.subr.mxu0 0.0
    %144 = vmatpush1.msra.mxu0 0.0
    %145 = vmatprep.subr.mxu0 0.0
    %146 = vmatpush1.msra.mxu0 0.0
    %147 = vmatprep.subr.mxu0 0.0
    %148 = vmatpush1.msra.mxu0 0.0
    %149 = vmatprep.subr.mxu0 0.0
    %150 = vmatpush1.msra.mxu0 0.0
    %151 = vmatprep.subr.mxu0 0.0
    %152 = vmatpush1.msra.mxu0 0.0
    %153 = vmatprep.subr.mxu0 0.0
    %154 = vmatpush1.msra.mxu0 0.0
    %155 = vmatprep.subr.mxu0 0.0
    %156 = vmatpush1.msra.mxu0 0.0
    %157 = vmatprep.subr.mxu0 0.0
    %158 = vmatpush1.msra.mxu0 0.0
    %159 = vmatprep.subr.mxu0 0.0
    %160 = vmatpush1.msra.mxu0 0.0
    %161 = vmatprep.subr.mxu0 0.0
    %162 = vmatpush1.msra.mxu0 0.0
    %163 = vmatprep.subr.mxu0 0.0
    %164 = vmatpush1.msra.mxu0 0.0
    %165 = vmatprep.subr.mxu0 0.0
    %166 = vmatpush1.msra.mxu0 0.0
    %167 = vmatprep.subr.mxu0 0.0
    %168 = vmatpush1.msra.mxu0 0.0
    %169 = vmatprep.subr.mxu0 0.0
    %170 = vmatpush1.msra.mxu0 0.0
    %171 = vmatprep.mubr.f32.mxu0 0.0
    %172 = vmatmul.mubr.f32.gmra.mrb[0].mxu0 %v60
    %v173 = vpop.f32.mrb[0].mxu0
    %v174 = vadd.f32 %v56, %v173
    %v175 = vpop.f32.mrb[0].mxu0
    %176 = vmatprep.mubr.f32.mxu0 0.0
    %177 = vmatmul.mubr.f32.gmra.mrb[0].mxu0 %v63
    %v178 = vpop.f32.mrb[0].mxu0
    %v179 = vadd.f32 %v56, %v178
    %v180 = vpop.f32.mrb[0].mxu0
    %181 = vmatprep.mubr.f32.mxu0 0.0
    %182 = vmatmul.mubr.f32.gmra.mrb[0].mxu0 %v66
    %v183 = vpop.f32.mrb[0].mxu0
    %v184 = vadd.f32 %v56, %v183
    %v185 = vpop.f32.mrb[0].mxu0
    %186 = vmatprep.mubr.f32.mxu0 0.0
    %187 = vmatmul.mubr.f32.gmra.mrb[0].mxu0 %v69
    %v188 = vpop.f32.mrb[0].mxu0
    %v189 = vadd.f32 %v56, %v188
    %v190 = vpop.f32.mrb[0].mxu0
    %191 = vmatprep.mubr.f32.mxu0 0.0
    %192 = vmatmul.mubr.f32.gmra.mrb[0].mxu0 %v72
    %v193 = vpop.f32.mrb[0].mxu0
    %v194 = vadd.f32 %v56, %v193
    %v195 = vpop.f32.mrb[0].mxu0
    %196 = vmatprep.mubr.f32.mxu0 0.0
    %197 = vmatmul.mubr.f32.gmra.mrb[0].mxu0 %v75
    %v198 = vpop.f32.mrb[0].mxu0
    %v199 = vadd.f32 %v56, %v198
    %v200 = vpop.f32.mrb[0].mxu0
    %201 = vmatprep.mubr.f32.mxu0 0.0
    %202 = vmatmul.mubr.f32.gmra.mrb[0].mxu0 %v78
    %v203 = vpop.f32.mrb[0].mxu0
    %v204 = vadd.f32 %v56, %v203
    %v205 = vpop.f32.mrb[0].mxu0
    %206 = vmatprep.mubr.f32.mxu0 0.0
    %207 = vmatmul.mubr.f32.gmra.mrb[0].mxu0 %v81
    %v208 = vpop.f32.mrb[0].mxu0
    %v209 = vadd.f32 %v56, %v208
    %v210 = vpop.f32.mrb[0].mxu0
    %211 = vmatprep.mubr.f32.mxu0 0.0
    %212 = vmatmul.mubr.f32.gmra.mrb[0].mxu0 %v84
    %v213 = vpop.f32.mrb[0].mxu0
    %v214 = vadd.f32 %v56, %v213
    %v215 = vpop.f32.mrb[0].mxu0
    %216 = vmatprep.mubr.f32.mxu0 0.0
    %217 = vmatmul.mubr.f32.gmra.mrb[0].mxu0 %v87
    %v218 = vpop.f32.mrb[0].mxu0
    %v219 = vadd.f32 %v56, %v218
    %v220 = vpop.f32.mrb[0].mxu0
    %221 = vmatprep.mubr.f32.mxu0 0.0
    %222 = vmatmul.mubr.f32.gmra.mrb[0].mxu0 %v90
    %v223 = vpop.f32.mrb[0].mxu0
    %v224 = vadd.f32 %v56, %v223
    %v225 = vpop.f32.mrb[0].mxu0
    %226 = vmatprep.mubr.f32.mxu0 0.0
    %227 = vmatmul.mubr.f32.gmra.mrb[0].mxu0 %v93
    %v228 = vpop.f32.mrb[0].mxu0
    %v229 = vadd.f32 %v56, %v228
    %v230 = vpop.f32.mrb[0].mxu0
    %231 = vmatprep.mubr.f32.mxu0 0.0
    %232 = vmatmul.mubr.f32.gmra.mrb[0].mxu0 %v96
    %v233 = vpop.f32.mrb[0].mxu0
    %v234 = vadd.f32 %v56, %v233
    %v235 = vpop.f32.mrb[0].mxu0
    %236 = vmatprep.mubr.f32.mxu0 0.0
    %237 = vmatmul.mubr.f32.gmra.mrb[0].mxu0 %v99
    %v238 = vpop.f32.mrb[0].mxu0
    %v239 = vadd.f32 %v56, %v238
    %v240 = vpop.f32.mrb[0].mxu0
    %241 = vmatprep.mubr.f32.mxu0 0.0
    %242 = vmatmul.mubr.f32.gmra.mrb[0].mxu0 %v102
    %v243 = vpop.f32.mrb[0].mxu0
    %v244 = vadd.f32 %v56, %v243
    %v245 = vpop.f32.mrb[0].mxu0
    %246 = vmatprep.mubr.f32.mxu0 0.0
    %247 = vmatmul.mubr.f32.gmra.mrb[0].mxu0 %v105
    %v248 = vpop.f32.mrb[0].mxu0
    %v249 = vadd.f32 %v56, %v248
    %v250 = vpop.f32.mrb[0].mxu0
    %251 = vdwg.mxu0
    %v252 = vmax.f32 %v174, 0.0
    %v253 = vmax.f32 %v179, 0.0
    %v254 = vmax.f32 %v184, 0.0
    %v255 = vmax.f32 %v189, 0.0
    %v256 = vmax.f32 %v194, 0.0
    %v257 = vmax.f32 %v199, 0.0
    %v258 = vmax.f32 %v204, 0.0
    %v259 = vmax.f32 %v209, 0.0
    %v260 = vmax.f32 %v214, 0.0
    %v261 = vmax.f32 %v219, 0.0
    %v262 = vmax.f32 %v224, 0.0
    %v263 = vmax.f32 %v229, 0.0
    %v264 = vmax.f32 %v234, 0.0
    %v265 = vmax.f32 %v239, 0.0
    %v266 = vmax.f32 %v244, 0.0
    %v267 = vmax.f32 %v249, 0.0
    %v268 = vld [vmem:[%s3] sm:$0xff]
    %v269 = vld [vmem:[%s3 + $0x8] sm:$0xff]
    %v270 = vld [vmem:[%s4] sm:$0x1]
    %v272 = vlaneseq
    %v273 = vshrl.u32 %v272, 7
    %v274 = vsub.s32 0, %v273
    %v275 = vrot.slane %v270, %v274
    %vm277 = vcmask 130048
    %v279 = vsel %vm277, %v252, 0
    %v282 = vsel %vm277, %v253, 0
    %v285 = vsel %vm277, %v254, 0
    %v288 = vsel %vm277, %v255, 0
    %v291 = vsel %vm277, %v256, 0
    %v294 = vsel %vm277, %v257, 0
    %v297 = vsel %vm277, %v258, 0
    %v300 = vsel %vm277, %v259, 0
    %v303 = vsel %vm277, %v260, 0
    %v306 = vsel %vm277, %v261, 0
    %v309 = vsel %vm277, %v262, 0
    %v312 = vsel %vm277, %v263, 0
    %v315 = vsel %vm277, %v264, 0
    %v318 = vsel %vm277, %v265, 0
    %v321 = vsel %vm277, %v266, 0
    %v324 = vsel %vm277, %v267, 0
    %326 = vmatprep.subr.mxu0 0.0
    %327 = vmatpush1.msra.mxu0 %v268
    %328 = vmatprep.subr.mxu0 0.0
    %329 = vmatpush1.msra.mxu0 %v269
    %330 = vmatprep.subr.mxu0 0.0
    %331 = vmatpush1.msra.mxu0 0.0
    %332 = vmatprep.subr.mxu0 0.0
    %333 = vmatpush1.msra.mxu0 0.0
    %334 = vmatprep.subr.mxu0 0.0
    %335 = vmatpush1.msra.mxu0 0.0
    %336 = vmatprep.subr.mxu0 0.0
    %337 = vmatpush1.msra.mxu0 0.0
    %338 = vmatprep.subr.mxu0 0.0
    %339 = vmatpush1.msra.mxu0 0.0
    %340 = vmatprep.subr.mxu0 0.0
    %341 = vmatpush1.msra.mxu0 0.0
    %342 = vmatprep.subr.mxu0 0.0
    %343 = vmatpush1.msra.mxu0 0.0
    %344 = vmatprep.subr.mxu0 0.0
    %345 = vmatpush1.msra.mxu0 0.0
    %346 = vmatprep.subr.mxu0 0.0
    %347 = vmatpush1.msra.mxu0 0.0
    %348 = vmatprep.subr.mxu0 0.0
    %349 = vmatpush1.msra.mxu0 0.0
    %350 = vmatprep.subr.mxu0 0.0
    %351 = vmatpush1.msra.mxu0 0.0
    %352 = vmatprep.subr.mxu0 0.0
    %353 = vmatpush1.msra.mxu0 0.0
    %354 = vmatprep.subr.mxu0 0.0
    %355 = vmatpush1.msra.mxu0 0.0
    %356 = vmatprep.subr.mxu0 0.0
    %357 = vmatpush1.msra.mxu0 0.0
    %358 = vmatprep.subr.mxu0 0.0
    %359 = vmatpush1.msra.mxu0 0.0
    %360 = vmatprep.subr.mxu0 0.0
    %361 = vmatpush1.msra.mxu0 0.0
    %362 = vmatprep.subr.mxu0 0.0
    %363 = vmatpush1.msra.mxu0 0.0
    %364 = vmatprep.subr.mxu0 0.0
    %365 = vmatpush1.msra.mxu0 0.0
    %366 = vmatprep.subr.mxu0 0.0
    %367 = vmatpush1.msra.mxu0 0.0
    %368 = vmatprep.subr.mxu0 0.0
    %369 = vmatpush1.msra.mxu0 0.0
    %370 = vmatprep.subr.mxu0 0.0
    %371 = vmatpush1.msra.mxu0 0.0
    %372 = vmatprep.subr.mxu0 0.0
    %373 = vmatpush1.msra.mxu0 0.0
    %374 = vmatprep.subr.mxu0 0.0
    %375 = vmatpush1.msra.mxu0 0.0
    %376 = vmatprep.subr.mxu0 0.0
    %377 = vmatpush1.msra.mxu0 0.0
    %378 = vmatprep.subr.mxu0 0.0
    %379 = vmatpush1.msra.mxu0 0.0
    %380 = vmatprep.subr.mxu0 0.0
    %381 = vmatpush1.msra.mxu0 0.0
    %382 = vmatprep.subr.mxu0 0.0
    %383 = vmatpush1.msra.mxu0 0.0
    %384 = vmatprep.subr.mxu0 0.0
    %385 = vmatpush1.msra.mxu0 0.0
    %386 = vmatprep.subr.mxu0 0.0
    %387 = vmatpush1.msra.mxu0 0.0
    %388 = vmatprep.subr.mxu0 0.0
    %389 = vmatpush1.msra.mxu0 0.0
    %390 = vmatprep.mubr.f32.mxu0 0.0
    %391 = vmatmul.mubr.f32.gmra.mrb[0].mxu0 %v279
    %v392 = vpop.f32.mrb[0].mxu0
    %v393 = vadd.f32 %v275, %v392
    %v394 = vpop.f32.mrb[0].mxu0
    %395 = vmatprep.mubr.f32.mxu0 0.0
    %396 = vmatmul.mubr.f32.gmra.mrb[0].mxu0 %v282
    %v397 = vpop.f32.mrb[0].mxu0
    %v398 = vadd.f32 %v275, %v397
    %v399 = vpop.f32.mrb[0].mxu0
    %400 = vmatprep.mubr.f32.mxu0 0.0
    %401 = vmatmul.mubr.f32.gmra.mrb[0].mxu0 %v285
    %v402 = vpop.f32.mrb[0].mxu0
    %v403 = vadd.f32 %v275, %v402
    %v404 = vpop.f32.mrb[0].mxu0
    %405 = vmatprep.mubr.f32.mxu0 0.0
    %406 = vmatmul.mubr.f32.gmra.mrb[0].mxu0 %v288
    %v407 = vpop.f32.mrb[0].mxu0
    %v408 = vadd.f32 %v275, %v407
    %v409 = vpop.f32.mrb[0].mxu0
    %410 = vmatprep.mubr.f32.mxu0 0.0
    %411 = vmatmul.mubr.f32.gmra.mrb[0].mxu0 %v291
    %v412 = vpop.f32.mrb[0].mxu0
    %v413 = vadd.f32 %v275, %v412
    %v414 = vpop.f32.mrb[0].mxu0
    %415 = vmatprep.mubr.f32.mxu0 0.0
    %416 = vmatmul.mubr.f32.gmra.mrb[0].mxu0 %v294
    %v417 = vpop.f32.mrb[0].mxu0
    %v418 = vadd.f32 %v275, %v417
    %v419 = vpop.f32.mrb[0].mxu0
    %420 = vmatprep.mubr.f32.mxu0 0.0
    %421 = vmatmul.mubr.f32.gmra.mrb[0].mxu0 %v297
    %v422 = vpop.f32.mrb[0].mxu0
    %v423 = vadd.f32 %v275, %v422
    %v424 = vpop.f32.mrb[0].mxu0
    %425 = vmatprep.mubr.f32.mxu0 0.0
    %426 = vmatmul.mubr.f32.gmra.mrb[0].mxu0 %v300
    %v427 = vpop.f32.mrb[0].mxu0
    %v428 = vadd.f32 %v275, %v427
    %v429 = vpop.f32.mrb[0].mxu0
    %430 = vmatprep.mubr.f32.mxu0 0.0
    %431 = vmatmul.mubr.f32.gmra.mrb[0].mxu0 %v303
    %v432 = vpop.f32.mrb[0].mxu0
    %v433 = vadd.f32 %v275, %v432
    %v434 = vpop.f32.mrb[0].mxu0
    %435 = vmatprep.mubr.f32.mxu0 0.0
    %436 = vmatmul.mubr.f32.gmra.mrb[0].mxu0 %v306
    %v437 = vpop.f32.mrb[0].mxu0
    %v438 = vadd.f32 %v275, %v437
    %v439 = vpop.f32.mrb[0].mxu0
    %440 = vmatprep.mubr.f32.mxu0 0.0
    %441 = vmatmul.mubr.f32.gmra.mrb[0].mxu0 %v309
    %v442 = vpop.f32.mrb[0].mxu0
    %v443 = vadd.f32 %v275, %v442
    %v444 = vpop.f32.mrb[0].mxu0
    %445 = vmatprep.mubr.f32.mxu0 0.0
    %446 = vmatmul.mubr.f32.gmra.mrb[0].mxu0 %v312
    %v447 = vpop.f32.mrb[0].mxu0
    %v448 = vadd.f32 %v275, %v447
    %v449 = vpop.f32.mrb[0].mxu0
    %450 = vmatprep.mubr.f32.mxu0 0.0
    %451 = vmatmul.mubr.f32.gmra.mrb[0].mxu0 %v315
    %v452 = vpop.f32.mrb[0].mxu0
    %v453 = vadd.f32 %v275, %v452
    %v454 = vpop.f32.mrb[0].mxu0
    %455 = vmatprep.mubr.f32.mxu0 0.0
    %456 = vmatmul.mubr.f32.gmra.mrb[0].mxu0 %v318
    %v457 = vpop.f32.mrb[0].mxu0
    %v458 = vadd.f32 %v275, %v457
    %v459 = vpop.f32.mrb[0].mxu0
    %460 = vmatprep.mubr.f32.mxu0 0.0
    %461 = vmatmul.mubr.f32.gmra.mrb[0].mxu0 %v321
    %v462 = vpop.f32.mrb[0].mxu0
    %v463 = vadd.f32 %v275, %v462
    %v464 = vpop.f32.mrb[0].mxu0
    %465 = vmatprep.mubr.f32.mxu0 0.0
    %466 = vmatmul.mubr.f32.gmra.mrb[0].mxu0 %v324
    %v467 = vpop.f32.mrb[0].mxu0
    %v468 = vadd.f32 %v275, %v467
    %v469 = vpop.f32.mrb[0].mxu0
    %470 = vdwg.mxu0
    %v471 = vld [vmem:[%s6] sm:$0x1]
    %v472 = vld [vmem:[%s5] sm:$0xff]
    %v473 = vld [vmem:[%s5 + $0x8] sm:$0xff]
    %v474 = vld [vmem:[%s5 + $0x10] sm:$0xff]
    %v475 = vld [vmem:[%s5 + $0x18] sm:$0xff]
    %v476 = vld [vmem:[%s5 + $0x20] sm:$0xff]
    %v477 = vld [vmem:[%s5 + $0x28] sm:$0xff]
    %v478 = vld [vmem:[%s5 + $0x30] sm:$0xff]
    %v479 = vld [vmem:[%s5 + $0x38] sm:$0xff]
    %v481 = vsel %vm58, %v393, 0
    %v484 = vsel %vm58, %v398, 0
    %v487 = vsel %vm58, %v403, 0
    %v490 = vsel %vm58, %v408, 0
    %v493 = vsel %vm58, %v413, 0
    %v496 = vsel %vm58, %v418, 0
    %v499 = vsel %vm58, %v423, 0
    %v502 = vsel %vm58, %v428, 0
    %v505 = vsel %vm58, %v433, 0
    %v508 = vsel %vm58, %v438, 0
    %v511 = vsel %vm58, %v443, 0
    %v514 = vsel %vm58, %v448, 0
    %v517 = vsel %vm58, %v453, 0
    %v520 = vsel %vm58, %v458, 0
    %v523 = vsel %vm58, %v463, 0
    %v526 = vsel %vm58, %v468, 0
    %v529 = vsel %vm58, %v472, 0
    %v532 = vsel %vm58, %v473, 0
    %v535 = vsel %vm58, %v474, 0
    %v538 = vsel %vm58, %v475, 0
    %v541 = vsel %vm58, %v476, 0
    %v544 = vsel %vm58, %v477, 0
    %v547 = vsel %vm58, %v478, 0
    %v550 = vsel %vm58, %v479, 0
    %552 = vmatprep.subr.mxu0 0.0
    %553 = vmatpush1.xpose.msra.mxu0 %v529
    %554 = vmatprep.subr.mxu0 0.0
    %555 = vmatpush1.xpose.msra.mxu0 %v532
    %556 = vmatprep.subr.mxu0 0.0
    %557 = vmatpush1.xpose.msra.mxu0 %v535
    %558 = vmatprep.subr.mxu0 0.0
    %559 = vmatpush1.xpose.msra.mxu0 %v538
    %560 = vmatprep.subr.mxu0 0.0
    %561 = vmatpush1.xpose.msra.mxu0 %v541
    %562 = vmatprep.subr.mxu0 0.0
    %563 = vmatpush1.xpose.msra.mxu0 %v544
    %564 = vmatprep.subr.mxu0 0.0
    %565 = vmatpush1.xpose.msra.mxu0 %v547
    %566 = vmatprep.subr.mxu0 0.0
    %567 = vmatpush1.xpose.msra.mxu0 %v550
    %568 = vmatprep.subr.mxu0 0.0
    %569 = vmatpush1.xpose.msra.mxu0 0.0
    %570 = vmatprep.subr.mxu0 0.0
    %571 = vmatpush1.xpose.msra.mxu0 0.0
    %572 = vmatprep.subr.mxu0 0.0
    %573 = vmatpush1.xpose.msra.mxu0 0.0
    %574 = vmatprep.subr.mxu0 0.0
    %575 = vmatpush1.xpose.msra.mxu0 0.0
    %576 = vmatprep.subr.mxu0 0.0
    %577 = vmatpush1.xpose.msra.mxu0 0.0
    %578 = vmatprep.subr.mxu0 0.0
    %579 = vmatpush1.xpose.msra.mxu0 0.0
    %580 = vmatprep.subr.mxu0 0.0
    %581 = vmatpush1.xpose.msra.mxu0 0.0
    %582 = vmatprep.subr.mxu0 0.0
    %583 = vmatpush1.xpose.msra.mxu0 0.0
    %584 = vmatprep.subr.mxu0 0.0
    %585 = vmatpush1.xpose.msra.mxu0 0.0
    %586 = vmatprep.subr.mxu0 0.0
    %587 = vmatpush1.xpose.msra.mxu0 0.0
    %588 = vmatprep.subr.mxu0 0.0
    %589 = vmatpush1.xpose.msra.mxu0 0.0
    %590 = vmatprep.subr.mxu0 0.0
    %591 = vmatpush1.xpose.msra.mxu0 0.0
    %592 = vmatprep.subr.mxu0 0.0
    %593 = vmatpush1.xpose.msra.mxu0 0.0
    %594 = vmatprep.subr.mxu0 0.0
    %595 = vmatpush1.xpose.msra.mxu0 0.0
    %596 = vmatprep.subr.mxu0 0.0
    %597 = vmatpush1.xpose.msra.mxu0 0.0
    %598 = vmatprep.subr.mxu0 0.0
    %599 = vmatpush1.xpose.msra.mxu0 0.0
    %600 = vmatprep.subr.mxu0 0.0
    %601 = vmatpush1.xpose.msra.mxu0 0.0
    %602 = vmatprep.subr.mxu0 0.0
    %603 = vmatpush1.xpose.msra.mxu0 0.0
    %604 = vmatprep.subr.mxu0 0.0
    %605 = vmatpush1.xpose.msra.mxu0 0.0
    %606 = vmatprep.subr.mxu0 0.0
    %607 = vmatpush1.xpose.msra.mxu0 0.0
    %608 = vmatprep.subr.mxu0 0.0
    %609 = vmatpush1.xpose.msra.mxu0 0.0
    %610 = vmatprep.subr.mxu0 0.0
    %611 = vmatpush1.xpose.msra.mxu0 0.0
    %612 = vmatprep.subr.mxu0 0.0
    %613 = vmatpush1.xpose.msra.mxu0 0.0
    %614 = vmatprep.subr.mxu0 0.0
    %615 = vmatpush1.xpose.msra.mxu0 0.0
    %616 = vmatprep.mubr.f32.mxu0 0.0
    %617 = vmatmul.mubr.f32.gmra.mrb[0].mxu0 %v481
    %v618 = vpop.f32.mrb[0].mxu0
    %v619 = vadd.f32 0.0, %v618
    %v620 = vpop.f32.mrb[0].mxu0
    %621 = vmatprep.mubr.f32.mxu0 0.0
    %622 = vmatmul.mubr.f32.gmra.mrb[0].mxu0 %v484
    %v623 = vpop.f32.mrb[0].mxu0
    %v624 = vadd.f32 0.0, %v623
    %v625 = vpop.f32.mrb[0].mxu0
    %626 = vmatprep.mubr.f32.mxu0 0.0
    %627 = vmatmul.mubr.f32.gmra.mrb[0].mxu0 %v487
    %v628 = vpop.f32.mrb[0].mxu0
    %v629 = vadd.f32 0.0, %v628
    %v630 = vpop.f32.mrb[0].mxu0
    %631 = vmatprep.mubr.f32.mxu0 0.0
    %632 = vmatmul.mubr.f32.gmra.mrb[0].mxu0 %v490
    %v633 = vpop.f32.mrb[0].mxu0
    %v634 = vadd.f32 0.0, %v633
    %v635 = vpop.f32.mrb[0].mxu0
    %636 = vmatprep.mubr.f32.mxu0 0.0
    %637 = vmatmul.mubr.f32.gmra.mrb[0].mxu0 %v493
    %v638 = vpop.f32.mrb[0].mxu0
    %v639 = vadd.f32 0.0, %v638
    %v640 = vpop.f32.mrb[0].mxu0
    %641 = vmatprep.mubr.f32.mxu0 0.0
    %642 = vmatmul.mubr.f32.gmra.mrb[0].mxu0 %v496
    %v643 = vpop.f32.mrb[0].mxu0
    %v644 = vadd.f32 0.0, %v643
    %v645 = vpop.f32.mrb[0].mxu0
    %646 = vmatprep.mubr.f32.mxu0 0.0
    %647 = vmatmul.mubr.f32.gmra.mrb[0].mxu0 %v499
    %v648 = vpop.f32.mrb[0].mxu0
    %v649 = vadd.f32 0.0, %v648
    %v650 = vpop.f32.mrb[0].mxu0
    %651 = vmatprep.mubr.f32.mxu0 0.0
    %652 = vmatmul.mubr.f32.gmra.mrb[0].mxu0 %v502
    %v653 = vpop.f32.mrb[0].mxu0
    %v654 = vadd.f32 0.0, %v653
    %v655 = vpop.f32.mrb[0].mxu0
    %656 = vmatprep.mubr.f32.mxu0 0.0
    %657 = vmatmul.mubr.f32.gmra.mrb[0].mxu0 %v505
    %v658 = vpop.f32.mrb[0].mxu0
    %v659 = vadd.f32 0.0, %v658
    %v660 = vpop.f32.mrb[0].mxu0
    %661 = vmatprep.mubr.f32.mxu0 0.0
    %662 = vmatmul.mubr.f32.gmra.mrb[0].mxu0 %v508
    %v663 = vpop.f32.mrb[0].mxu0
    %v664 = vadd.f32 0.0, %v663
    %v665 = vpop.f32.mrb[0].mxu0
    %666 = vmatprep.mubr.f32.mxu0 0.0
    %667 = vmatmul.mubr.f32.gmra.mrb[0].mxu0 %v511
    %v668 = vpop.f32.mrb[0].mxu0
    %v669 = vadd.f32 0.0, %v668
    %v670 = vpop.f32.mrb[0].mxu0
    %671 = vmatprep.mubr.f32.mxu0 0.0
    %672 = vmatmul.mubr.f32.gmra.mrb[0].mxu0 %v514
    %v673 = vpop.f32.mrb[0].mxu0
    %v674 = vadd.f32 0.0, %v673
    %v675 = vpop.f32.mrb[0].mxu0
    %676 = vmatprep.mubr.f32.mxu0 0.0
    %677 = vmatmul.mubr.f32.gmra.mrb[0].mxu0 %v517
    %v678 = vpop.f32.mrb[0].mxu0
    %v679 = vadd.f32 0.0, %v678
    %v680 = vpop.f32.mrb[0].mxu0
    %681 = vmatprep.mubr.f32.mxu0 0.0
    %682 = vmatmul.mubr.f32.gmra.mrb[0].mxu0 %v520
    %v683 = vpop.f32.mrb[0].mxu0
    %v684 = vadd.f32 0.0, %v683
    %v685 = vpop.f32.mrb[0].mxu0
    %686 = vmatprep.mubr.f32.mxu0 0.0
    %687 = vmatmul.mubr.f32.gmra.mrb[0].mxu0 %v523
    %v688 = vpop.f32.mrb[0].mxu0
    %v689 = vadd.f32 0.0, %v688
    %v690 = vpop.f32.mrb[0].mxu0
    %691 = vmatprep.mubr.f32.mxu0 0.0
    %692 = vmatmul.mubr.f32.gmra.mrb[0].mxu0 %v526
    %v693 = vpop.f32.mrb[0].mxu0
    %v694 = vadd.f32 0.0, %v693
    %v695 = vpop.f32.mrb[0].mxu0
    %696 = vdwg.mxu0
    %v697 = vmul.f32 %v619, 2.0
    %v698 = vmul.f32 %v624, 2.0
    %v699 = vmul.f32 %v629, 2.0
    %v700 = vmul.f32 %v634, 2.0
    %v701 = vmul.f32 %v639, 2.0
    %v702 = vmul.f32 %v644, 2.0
    %v703 = vmul.f32 %v649, 2.0
    %v704 = vmul.f32 %v654, 2.0
    %v705 = vmul.f32 %v659, 2.0
    %v706 = vmul.f32 %v664, 2.0
    %v707 = vmul.f32 %v669, 2.0
    %v708 = vmul.f32 %v674, 2.0
    %v709 = vmul.f32 %v679, 2.0
    %v710 = vmul.f32 %v684, 2.0
    %v711 = vmul.f32 %v689, 2.0
    %v712 = vmul.f32 %v694, 2.0
    %v714 = vlaneseq
    %v715 = vshrl.u32 %v714, 7
    %v716 = vsub.s32 0, %v715
    %v717 = vrot.slane %v471, %v716
    %v719 = vsub.f32 %v717, %v697
    %v720 = vsub.f32 %v717, %v698
    %v721 = vsub.f32 %v717, %v699
    %v722 = vsub.f32 %v717, %v700
    %v723 = vsub.f32 %v717, %v701
    %v724 = vsub.f32 %v717, %v702
    %v725 = vsub.f32 %v717, %v703
    %v726 = vsub.f32 %v717, %v704
    %v727 = vsub.f32 %v717, %v705
    %v728 = vsub.f32 %v717, %v706
    %v729 = vsub.f32 %v717, %v707
    %v730 = vsub.f32 %v717, %v708
    %v731 = vsub.f32 %v717, %v709
    %v732 = vsub.f32 %v717, %v710
    %v733 = vsub.f32 %v717, %v711
    %v734 = vsub.f32 %v717, %v712
    %vm735 = vcmask 523264
    %v736 = vsel %vm735, %v719, inf
    %737 = vmin.xlane.f32.xlu0 %v736
    %v738 = vpop.xlane.xlu0 %737
    %v739 = vsel %vm735, %v720, inf
    %740 = vmin.xlane.f32.xlu0 %v739
    %v741 = vpop.xlane.xlu0 %740
    %v742 = vsel %vm735, %v721, inf
    %743 = vmin.xlane.f32.xlu0 %v742
    %v744 = vpop.xlane.xlu0 %743
    %v745 = vsel %vm735, %v722, inf
    %746 = vmin.xlane.f32.xlu0 %v745
    %v747 = vpop.xlane.xlu0 %746
    %v748 = vsel %vm735, %v723, inf
    %749 = vmin.xlane.f32.xlu0 %v748
    %v750 = vpop.xlane.xlu0 %749
    %v751 = vsel %vm735, %v724, inf
    %752 = vmin.xlane.f32.xlu0 %v751
    %v753 = vpop.xlane.xlu0 %752
    %v754 = vsel %vm735, %v725, inf
    %755 = vmin.xlane.f32.xlu0 %v754
    %v756 = vpop.xlane.xlu0 %755
    %v757 = vsel %vm735, %v726, inf
    %758 = vmin.xlane.f32.xlu0 %v757
    %v759 = vpop.xlane.xlu0 %758
    %v760 = vsel %vm735, %v727, inf
    %761 = vmin.xlane.f32.xlu0 %v760
    %v762 = vpop.xlane.xlu0 %761
    %v763 = vsel %vm735, %v728, inf
    %764 = vmin.xlane.f32.xlu0 %v763
    %v765 = vpop.xlane.xlu0 %764
    %v766 = vsel %vm735, %v729, inf
    %767 = vmin.xlane.f32.xlu0 %v766
    %v768 = vpop.xlane.xlu0 %767
    %v769 = vsel %vm735, %v730, inf
    %770 = vmin.xlane.f32.xlu0 %v769
    %v771 = vpop.xlane.xlu0 %770
    %v772 = vsel %vm735, %v731, inf
    %773 = vmin.xlane.f32.xlu0 %v772
    %v774 = vpop.xlane.xlu0 %773
    %v775 = vsel %vm735, %v732, inf
    %776 = vmin.xlane.f32.xlu0 %v775
    %v777 = vpop.xlane.xlu0 %776
    %v778 = vsel %vm735, %v733, inf
    %779 = vmin.xlane.f32.xlu0 %v778
    %v780 = vpop.xlane.xlu0 %779
    %v781 = vsel %vm735, %v734, inf
    %782 = vmin.xlane.f32.xlu0 %v781
    %v783 = vpop.xlane.xlu0 %782
    %v784 = vlaneseq
    %v785 = vand.u32 %v784, 127
    %vm786 = vcmp.eq.f32.partialorder %v719, %v738
    %vm787 = vcmp.eq.f32.partialorder %v720, %v741
    %vm788 = vcmp.eq.f32.partialorder %v721, %v744
    %vm789 = vcmp.eq.f32.partialorder %v722, %v747
    %vm790 = vcmp.eq.f32.partialorder %v723, %v750
    %vm791 = vcmp.eq.f32.partialorder %v724, %v753
    %vm792 = vcmp.eq.f32.partialorder %v725, %v756
    %vm793 = vcmp.eq.f32.partialorder %v726, %v759
    %vm794 = vcmp.eq.f32.partialorder %v727, %v762
    %vm795 = vcmp.eq.f32.partialorder %v728, %v765
    %vm796 = vcmp.eq.f32.partialorder %v729, %v768
    %vm797 = vcmp.eq.f32.partialorder %v730, %v771
    %vm798 = vcmp.eq.f32.partialorder %v731, %v774
    %vm799 = vcmp.eq.f32.partialorder %v732, %v777
    %vm800 = vcmp.eq.f32.partialorder %v733, %v780
    %vm801 = vcmp.eq.f32.partialorder %v734, %v783
    %v802 = vcvt.s32.f32 %v785
    %v803 = vsel %vm786, %v802, 64.0
    %v804 = vsel %vm787, %v802, 64.0
    %v805 = vsel %vm788, %v802, 64.0
    %v806 = vsel %vm789, %v802, 64.0
    %v807 = vsel %vm790, %v802, 64.0
    %v808 = vsel %vm791, %v802, 64.0
    %v809 = vsel %vm792, %v802, 64.0
    %v810 = vsel %vm793, %v802, 64.0
    %v811 = vsel %vm794, %v802, 64.0
    %v812 = vsel %vm795, %v802, 64.0
    %v813 = vsel %vm796, %v802, 64.0
    %v814 = vsel %vm797, %v802, 64.0
    %v815 = vsel %vm798, %v802, 64.0
    %v816 = vsel %vm799, %v802, 64.0
    %v817 = vsel %vm800, %v802, 64.0
    %v818 = vsel %vm801, %v802, 64.0
    %v819 = vsel %vm735, %v803, inf
    %820 = vmin.xlane.f32.xlu0 %v819
    %v821 = vpop.xlane.xlu0 %820
    %v822 = vsel %vm735, %v804, inf
    %823 = vmin.xlane.f32.xlu0 %v822
    %v824 = vpop.xlane.xlu0 %823
    %v825 = vsel %vm735, %v805, inf
    %826 = vmin.xlane.f32.xlu0 %v825
    %v827 = vpop.xlane.xlu0 %826
    %v828 = vsel %vm735, %v806, inf
    %829 = vmin.xlane.f32.xlu0 %v828
    %v830 = vpop.xlane.xlu0 %829
    %v831 = vsel %vm735, %v807, inf
    %832 = vmin.xlane.f32.xlu0 %v831
    %v833 = vpop.xlane.xlu0 %832
    %v834 = vsel %vm735, %v808, inf
    %835 = vmin.xlane.f32.xlu0 %v834
    %v836 = vpop.xlane.xlu0 %835
    %v837 = vsel %vm735, %v809, inf
    %838 = vmin.xlane.f32.xlu0 %v837
    %v839 = vpop.xlane.xlu0 %838
    %v840 = vsel %vm735, %v810, inf
    %841 = vmin.xlane.f32.xlu0 %v840
    %v842 = vpop.xlane.xlu0 %841
    %v843 = vsel %vm735, %v811, inf
    %844 = vmin.xlane.f32.xlu0 %v843
    %v845 = vpop.xlane.xlu0 %844
    %v846 = vsel %vm735, %v812, inf
    %847 = vmin.xlane.f32.xlu0 %v846
    %v848 = vpop.xlane.xlu0 %847
    %v849 = vsel %vm735, %v813, inf
    %850 = vmin.xlane.f32.xlu0 %v849
    %v851 = vpop.xlane.xlu0 %850
    %v852 = vsel %vm735, %v814, inf
    %853 = vmin.xlane.f32.xlu0 %v852
    %v854 = vpop.xlane.xlu0 %853
    %v855 = vsel %vm735, %v815, inf
    %856 = vmin.xlane.f32.xlu0 %v855
    %v857 = vpop.xlane.xlu0 %856
    %v858 = vsel %vm735, %v816, inf
    %859 = vmin.xlane.f32.xlu0 %v858
    %v860 = vpop.xlane.xlu0 %859
    %v861 = vsel %vm735, %v817, inf
    %862 = vmin.xlane.f32.xlu0 %v861
    %v863 = vpop.xlane.xlu0 %862
    %v864 = vsel %vm735, %v818, inf
    %865 = vmin.xlane.f32.xlu0 %v864
    %v866 = vpop.xlane.xlu0 %865
    %v867 = vcvt.f32.s32.to.zero.pseudo %v821
    %v868 = vcvt.f32.s32.to.zero.pseudo %v824
    %v869 = vcvt.f32.s32.to.zero.pseudo %v827
    %v870 = vcvt.f32.s32.to.zero.pseudo %v830
    %v871 = vcvt.f32.s32.to.zero.pseudo %v833
    %v872 = vcvt.f32.s32.to.zero.pseudo %v836
    %v873 = vcvt.f32.s32.to.zero.pseudo %v839
    %v874 = vcvt.f32.s32.to.zero.pseudo %v842
    %v875 = vcvt.f32.s32.to.zero.pseudo %v845
    %v876 = vcvt.f32.s32.to.zero.pseudo %v848
    %v877 = vcvt.f32.s32.to.zero.pseudo %v851
    %v878 = vcvt.f32.s32.to.zero.pseudo %v854
    %v879 = vcvt.f32.s32.to.zero.pseudo %v857
    %v880 = vcvt.f32.s32.to.zero.pseudo %v860
    %v881 = vcvt.f32.s32.to.zero.pseudo %v863
    %v882 = vcvt.f32.s32.to.zero.pseudo %v866
    %vm883 = vcmp.lt.f32.partialorder %v738, inf
    %vm884 = vcmp.lt.f32.partialorder %v741, inf
    %vm885 = vcmp.lt.f32.partialorder %v744, inf
    %vm886 = vcmp.lt.f32.partialorder %v747, inf
    %vm887 = vcmp.lt.f32.partialorder %v750, inf
    %vm888 = vcmp.lt.f32.partialorder %v753, inf
    %vm889 = vcmp.lt.f32.partialorder %v756, inf
    %vm890 = vcmp.lt.f32.partialorder %v759, inf
    %vm891 = vcmp.lt.f32.partialorder %v762, inf
    %vm892 = vcmp.lt.f32.partialorder %v765, inf
    %vm893 = vcmp.lt.f32.partialorder %v768, inf
    %vm894 = vcmp.lt.f32.partialorder %v771, inf
    %vm895 = vcmp.lt.f32.partialorder %v774, inf
    %vm896 = vcmp.lt.f32.partialorder %v777, inf
    %vm897 = vcmp.lt.f32.partialorder %v780, inf
    %vm898 = vcmp.lt.f32.partialorder %v783, inf
    %v899 = vsel %vm883, %v867, 0
    %v900 = vsel %vm884, %v868, 0
    %v901 = vsel %vm885, %v869, 0
    %v902 = vsel %vm886, %v870, 0
    %v903 = vsel %vm887, %v871, 0
    %v904 = vsel %vm888, %v872, 0
    %v905 = vsel %vm889, %v873, 0
    %v906 = vsel %vm890, %v874, 0
    %v907 = vsel %vm891, %v875, 0
    %v908 = vsel %vm892, %v876, 0
    %v909 = vsel %vm893, %v877, 0
    %v910 = vsel %vm894, %v878, 0
    %v911 = vsel %vm895, %v879, 0
    %v912 = vsel %vm896, %v880, 0
    %v913 = vsel %vm897, %v881, 0
    %v914 = vsel %vm898, %v882, 0
    %vm915 = vcmp.eq.s32.totalorder %v785, %v899
    %vm916 = vcmp.eq.s32.totalorder %v785, %v900
    %vm917 = vcmp.eq.s32.totalorder %v785, %v901
    %vm918 = vcmp.eq.s32.totalorder %v785, %v902
    %vm919 = vcmp.eq.s32.totalorder %v785, %v903
    %vm920 = vcmp.eq.s32.totalorder %v785, %v904
    %vm921 = vcmp.eq.s32.totalorder %v785, %v905
    %vm922 = vcmp.eq.s32.totalorder %v785, %v906
    %vm923 = vcmp.eq.s32.totalorder %v785, %v907
    %vm924 = vcmp.eq.s32.totalorder %v785, %v908
    %vm925 = vcmp.eq.s32.totalorder %v785, %v909
    %vm926 = vcmp.eq.s32.totalorder %v785, %v910
    %vm927 = vcmp.eq.s32.totalorder %v785, %v911
    %vm928 = vcmp.eq.s32.totalorder %v785, %v912
    %vm929 = vcmp.eq.s32.totalorder %v785, %v913
    %vm930 = vcmp.eq.s32.totalorder %v785, %v914
    %v931 = vsel %vm915, 1, 0
    %v932 = vsel %vm916, 1, 0
    %v933 = vsel %vm917, 1, 0
    %v934 = vsel %vm918, 1, 0
    %v935 = vsel %vm919, 1, 0
    %v936 = vsel %vm920, 1, 0
    %v937 = vsel %vm921, 1, 0
    %v938 = vsel %vm922, 1, 0
    %v939 = vsel %vm923, 1, 0
    %v940 = vsel %vm924, 1, 0
    %v941 = vsel %vm925, 1, 0
    %v942 = vsel %vm926, 1, 0
    %v943 = vsel %vm927, 1, 0
    %v944 = vsel %vm928, 1, 0
    %v945 = vsel %vm929, 1, 0
    %v946 = vsel %vm930, 1, 0
    %v947 = vcvt.s32.f32 %v931
    %v948 = vcvt.s32.f32 %v932
    %v949 = vcvt.s32.f32 %v933
    %v950 = vcvt.s32.f32 %v934
    %v951 = vcvt.s32.f32 %v935
    %v952 = vcvt.s32.f32 %v936
    %v953 = vcvt.s32.f32 %v937
    %v954 = vcvt.s32.f32 %v938
    %v955 = vcvt.s32.f32 %v939
    %v956 = vcvt.s32.f32 %v940
    %v957 = vcvt.s32.f32 %v941
    %v958 = vcvt.s32.f32 %v942
    %v959 = vcvt.s32.f32 %v943
    %v960 = vcvt.s32.f32 %v944
    %v961 = vcvt.s32.f32 %v945
    %v962 = vcvt.s32.f32 %v946
    %v964 = vsel %vm735, %v947, 0
    %v967 = vsel %vm735, %v948, 0
    %v970 = vsel %vm735, %v949, 0
    %v973 = vsel %vm735, %v950, 0
    %v976 = vsel %vm735, %v951, 0
    %v979 = vsel %vm735, %v952, 0
    %v982 = vsel %vm735, %v953, 0
    %v985 = vsel %vm735, %v954, 0
    %v988 = vsel %vm735, %v955, 0
    %v991 = vsel %vm735, %v956, 0
    %v994 = vsel %vm735, %v957, 0
    %v997 = vsel %vm735, %v958, 0
    %v1000 = vsel %vm735, %v959, 0
    %v1003 = vsel %vm735, %v960, 0
    %v1006 = vsel %vm735, %v961, 0
    %v1009 = vsel %vm735, %v962, 0
    %1011 = vmatprep.subr.mxu0 0.0
    %1012 = vmatpush1.msra.mxu0 %v472
    %1013 = vmatprep.subr.mxu0 0.0
    %1014 = vmatpush1.msra.mxu0 %v473
    %1015 = vmatprep.subr.mxu0 0.0
    %1016 = vmatpush1.msra.mxu0 %v474
    %1017 = vmatprep.subr.mxu0 0.0
    %1018 = vmatpush1.msra.mxu0 %v475
    %1019 = vmatprep.subr.mxu0 0.0
    %1020 = vmatpush1.msra.mxu0 %v476
    %1021 = vmatprep.subr.mxu0 0.0
    %1022 = vmatpush1.msra.mxu0 %v477
    %1023 = vmatprep.subr.mxu0 0.0
    %1024 = vmatpush1.msra.mxu0 %v478
    %1025 = vmatprep.subr.mxu0 0.0
    %1026 = vmatpush1.msra.mxu0 %v479
    %1027 = vmatprep.subr.mxu0 0.0
    %1028 = vmatpush1.msra.mxu0 0.0
    %1029 = vmatprep.subr.mxu0 0.0
    %1030 = vmatpush1.msra.mxu0 0.0
    %1031 = vmatprep.subr.mxu0 0.0
    %1032 = vmatpush1.msra.mxu0 0.0
    %1033 = vmatprep.subr.mxu0 0.0
    %1034 = vmatpush1.msra.mxu0 0.0
    %1035 = vmatprep.subr.mxu0 0.0
    %1036 = vmatpush1.msra.mxu0 0.0
    %1037 = vmatprep.subr.mxu0 0.0
    %1038 = vmatpush1.msra.mxu0 0.0
    %1039 = vmatprep.subr.mxu0 0.0
    %1040 = vmatpush1.msra.mxu0 0.0
    %1041 = vmatprep.subr.mxu0 0.0
    %1042 = vmatpush1.msra.mxu0 0.0
    %1043 = vmatprep.subr.mxu0 0.0
    %1044 = vmatpush1.msra.mxu0 0.0
    %1045 = vmatprep.subr.mxu0 0.0
    %1046 = vmatpush1.msra.mxu0 0.0
    %1047 = vmatprep.subr.mxu0 0.0
    %1048 = vmatpush1.msra.mxu0 0.0
    %1049 = vmatprep.subr.mxu0 0.0
    %1050 = vmatpush1.msra.mxu0 0.0
    %1051 = vmatprep.subr.mxu0 0.0
    %1052 = vmatpush1.msra.mxu0 0.0
    %1053 = vmatprep.subr.mxu0 0.0
    %1054 = vmatpush1.msra.mxu0 0.0
    %1055 = vmatprep.subr.mxu0 0.0
    %1056 = vmatpush1.msra.mxu0 0.0
    %1057 = vmatprep.subr.mxu0 0.0
    %1058 = vmatpush1.msra.mxu0 0.0
    %1059 = vmatprep.subr.mxu0 0.0
    %1060 = vmatpush1.msra.mxu0 0.0
    %1061 = vmatprep.subr.mxu0 0.0
    %1062 = vmatpush1.msra.mxu0 0.0
    %1063 = vmatprep.subr.mxu0 0.0
    %1064 = vmatpush1.msra.mxu0 0.0
    %1065 = vmatprep.subr.mxu0 0.0
    %1066 = vmatpush1.msra.mxu0 0.0
    %1067 = vmatprep.subr.mxu0 0.0
    %1068 = vmatpush1.msra.mxu0 0.0
    %1069 = vmatprep.subr.mxu0 0.0
    %1070 = vmatpush1.msra.mxu0 0.0
    %1071 = vmatprep.subr.mxu0 0.0
    %1072 = vmatpush1.msra.mxu0 0.0
    %1073 = vmatprep.subr.mxu0 0.0
    %1074 = vmatpush1.msra.mxu0 0.0
    %1075 = vmatprep.mubr.f32.mxu0 0.0
    %1076 = vmatmul.mubr.f32.gmra.mrb[0].mxu0 %v964
    %v1077 = vpop.f32.mrb[0].mxu0
    %v1078 = vadd.f32 0.0, %v1077
    %v1079 = vpop.f32.mrb[0].mxu0
    %1080 = vmatprep.mubr.f32.mxu0 0.0
    %1081 = vmatmul.mubr.f32.gmra.mrb[0].mxu0 %v967
    %v1082 = vpop.f32.mrb[0].mxu0
    %v1083 = vadd.f32 0.0, %v1082
    %v1084 = vpop.f32.mrb[0].mxu0
    %1085 = vmatprep.mubr.f32.mxu0 0.0
    %1086 = vmatmul.mubr.f32.gmra.mrb[0].mxu0 %v970
    %v1087 = vpop.f32.mrb[0].mxu0
    %v1088 = vadd.f32 0.0, %v1087
    %v1089 = vpop.f32.mrb[0].mxu0
    %1090 = vmatprep.mubr.f32.mxu0 0.0
    %1091 = vmatmul.mubr.f32.gmra.mrb[0].mxu0 %v973
    %v1092 = vpop.f32.mrb[0].mxu0
    %v1093 = vadd.f32 0.0, %v1092
    %v1094 = vpop.f32.mrb[0].mxu0
    %1095 = vmatprep.mubr.f32.mxu0 0.0
    %1096 = vmatmul.mubr.f32.gmra.mrb[0].mxu0 %v976
    %v1097 = vpop.f32.mrb[0].mxu0
    %v1098 = vadd.f32 0.0, %v1097
    %v1099 = vpop.f32.mrb[0].mxu0
    %1100 = vmatprep.mubr.f32.mxu0 0.0
    %1101 = vmatmul.mubr.f32.gmra.mrb[0].mxu0 %v979
    %v1102 = vpop.f32.mrb[0].mxu0
    %v1103 = vadd.f32 0.0, %v1102
    %v1104 = vpop.f32.mrb[0].mxu0
    %1105 = vmatprep.mubr.f32.mxu0 0.0
    %1106 = vmatmul.mubr.f32.gmra.mrb[0].mxu0 %v982
    %v1107 = vpop.f32.mrb[0].mxu0
    %v1108 = vadd.f32 0.0, %v1107
    %v1109 = vpop.f32.mrb[0].mxu0
    %1110 = vmatprep.mubr.f32.mxu0 0.0
    %1111 = vmatmul.mubr.f32.gmra.mrb[0].mxu0 %v985
    %v1112 = vpop.f32.mrb[0].mxu0
    %v1113 = vadd.f32 0.0, %v1112
    %v1114 = vpop.f32.mrb[0].mxu0
    %1115 = vmatprep.mubr.f32.mxu0 0.0
    %1116 = vmatmul.mubr.f32.gmra.mrb[0].mxu0 %v988
    %v1117 = vpop.f32.mrb[0].mxu0
    %v1118 = vadd.f32 0.0, %v1117
    %v1119 = vpop.f32.mrb[0].mxu0
    %1120 = vmatprep.mubr.f32.mxu0 0.0
    %1121 = vmatmul.mubr.f32.gmra.mrb[0].mxu0 %v991
    %v1122 = vpop.f32.mrb[0].mxu0
    %v1123 = vadd.f32 0.0, %v1122
    %v1124 = vpop.f32.mrb[0].mxu0
    %1125 = vmatprep.mubr.f32.mxu0 0.0
    %1126 = vmatmul.mubr.f32.gmra.mrb[0].mxu0 %v994
    %v1127 = vpop.f32.mrb[0].mxu0
    %v1128 = vadd.f32 0.0, %v1127
    %v1129 = vpop.f32.mrb[0].mxu0
    %1130 = vmatprep.mubr.f32.mxu0 0.0
    %1131 = vmatmul.mubr.f32.gmra.mrb[0].mxu0 %v997
    %v1132 = vpop.f32.mrb[0].mxu0
    %v1133 = vadd.f32 0.0, %v1132
    %v1134 = vpop.f32.mrb[0].mxu0
    %1135 = vmatprep.mubr.f32.mxu0 0.0
    %1136 = vmatmul.mubr.f32.gmra.mrb[0].mxu0 %v1000
    %v1137 = vpop.f32.mrb[0].mxu0
    %v1138 = vadd.f32 0.0, %v1137
    %v1139 = vpop.f32.mrb[0].mxu0
    %1140 = vmatprep.mubr.f32.mxu0 0.0
    %1141 = vmatmul.mubr.f32.gmra.mrb[0].mxu0 %v1003
    %v1142 = vpop.f32.mrb[0].mxu0
    %v1143 = vadd.f32 0.0, %v1142
    %v1144 = vpop.f32.mrb[0].mxu0
    %1145 = vmatprep.mubr.f32.mxu0 0.0
    %1146 = vmatmul.mubr.f32.gmra.mrb[0].mxu0 %v1006
    %v1147 = vpop.f32.mrb[0].mxu0
    %v1148 = vadd.f32 0.0, %v1147
    %v1149 = vpop.f32.mrb[0].mxu0
    %1150 = vmatprep.mubr.f32.mxu0 0.0
    %1151 = vmatmul.mubr.f32.gmra.mrb[0].mxu0 %v1009
    %v1152 = vpop.f32.mrb[0].mxu0
    %v1153 = vadd.f32 0.0, %v1152
    %v1154 = vpop.f32.mrb[0].mxu0
    %1155 = vdwg.mxu0
    %v1157 = vsel %vm735, 1.0, 0
    %1159 = vmatprep.subr.mxu0 0.0
    %1160 = vmatpush1.xpose.msra.mxu0 %v964
    %1161 = vmatprep.subr.mxu0 0.0
    %1162 = vmatpush1.xpose.msra.mxu0 %v967
    %1163 = vmatprep.subr.mxu0 0.0
    %1164 = vmatpush1.xpose.msra.mxu0 %v970
    %1165 = vmatprep.subr.mxu0 0.0
    %1166 = vmatpush1.xpose.msra.mxu0 %v973
    %1167 = vmatprep.subr.mxu0 0.0
    %1168 = vmatpush1.xpose.msra.mxu0 %v976
    %1169 = vmatprep.subr.mxu0 0.0
    %1170 = vmatpush1.xpose.msra.mxu0 %v979
    %1171 = vmatprep.subr.mxu0 0.0
    %1172 = vmatpush1.xpose.msra.mxu0 %v982
    %1173 = vmatprep.subr.mxu0 0.0
    %1174 = vmatpush1.xpose.msra.mxu0 %v985
    %1175 = vmatprep.subr.mxu0 0.0
    %1176 = vmatpush1.xpose.msra.mxu0 %v988
    %1177 = vmatprep.subr.mxu0 0.0
    %1178 = vmatpush1.xpose.msra.mxu0 %v991
    %1179 = vmatprep.subr.mxu0 0.0
    %1180 = vmatpush1.xpose.msra.mxu0 %v994
    %1181 = vmatprep.subr.mxu0 0.0
    %1182 = vmatpush1.xpose.msra.mxu0 %v997
    %1183 = vmatprep.subr.mxu0 0.0
    %1184 = vmatpush1.xpose.msra.mxu0 %v1000
    %1185 = vmatprep.subr.mxu0 0.0
    %1186 = vmatpush1.xpose.msra.mxu0 %v1003
    %1187 = vmatprep.subr.mxu0 0.0
    %1188 = vmatpush1.xpose.msra.mxu0 %v1006
    %1189 = vmatprep.subr.mxu0 0.0
    %1190 = vmatpush1.xpose.msra.mxu0 %v1009
    %1191 = vmatprep.subr.mxu0 0.0
    %1192 = vmatpush1.xpose.msra.mxu0 0.0
    %1193 = vmatprep.subr.mxu0 0.0
    %1194 = vmatpush1.xpose.msra.mxu0 0.0
    %1195 = vmatprep.subr.mxu0 0.0
    %1196 = vmatpush1.xpose.msra.mxu0 0.0
    %1197 = vmatprep.subr.mxu0 0.0
    %1198 = vmatpush1.xpose.msra.mxu0 0.0
    %1199 = vmatprep.subr.mxu0 0.0
    %1200 = vmatpush1.xpose.msra.mxu0 0.0
    %1201 = vmatprep.subr.mxu0 0.0
    %1202 = vmatpush1.xpose.msra.mxu0 0.0
    %1203 = vmatprep.subr.mxu0 0.0
    %1204 = vmatpush1.xpose.msra.mxu0 0.0
    %1205 = vmatprep.subr.mxu0 0.0
    %1206 = vmatpush1.xpose.msra.mxu0 0.0
    %1207 = vmatprep.subr.mxu0 0.0
    %1208 = vmatpush1.xpose.msra.mxu0 0.0
    %1209 = vmatprep.subr.mxu0 0.0
    %1210 = vmatpush1.xpose.msra.mxu0 0.0
    %1211 = vmatprep.subr.mxu0 0.0
    %1212 = vmatpush1.xpose.msra.mxu0 0.0
    %1213 = vmatprep.subr.mxu0 0.0
    %1214 = vmatpush1.xpose.msra.mxu0 0.0
    %1215 = vmatprep.subr.mxu0 0.0
    %1216 = vmatpush1.xpose.msra.mxu0 0.0
    %1217 = vmatprep.subr.mxu0 0.0
    %1218 = vmatpush1.xpose.msra.mxu0 0.0
    %1219 = vmatprep.subr.mxu0 0.0
    %1220 = vmatpush1.xpose.msra.mxu0 0.0
    %1221 = vmatprep.subr.mxu0 0.0
    %1222 = vmatpush1.xpose.msra.mxu0 0.0
    %1223 = vmatprep.mubr.f32.mxu0 0.0
    %1224 = vmatmul.mubr.f32.gmra.mrb[0].mxu0 %v1157
    %v1225 = vpop.f32.mrb[0].mxu0
    %v1226 = vadd.f32 0.0, %v1225
    %v1227 = vpop.f32.mrb[0].mxu0
    %1228 = vdwg.mxu0
    %v1229 = vmul.f32 %v1226, 0.0
    %v1231 = vsel %vm735, %v802, 0
    %1233 = vmatprep.subr.mxu0 0.0
    %1234 = vmatpush1.xpose.msra.mxu0 %v964
    %1235 = vmatprep.subr.mxu0 0.0
    %1236 = vmatpush1.xpose.msra.mxu0 %v967
    %1237 = vmatprep.subr.mxu0 0.0
    %1238 = vmatpush1.xpose.msra.mxu0 %v970
    %1239 = vmatprep.subr.mxu0 0.0
    %1240 = vmatpush1.xpose.msra.mxu0 %v973
    %1241 = vmatprep.subr.mxu0 0.0
    %1242 = vmatpush1.xpose.msra.mxu0 %v976
    %1243 = vmatprep.subr.mxu0 0.0
    %1244 = vmatpush1.xpose.msra.mxu0 %v979
    %1245 = vmatprep.subr.mxu0 0.0
    %1246 = vmatpush1.xpose.msra.mxu0 %v982
    %1247 = vmatprep.subr.mxu0 0.0
    %1248 = vmatpush1.xpose.msra.mxu0 %v985
    %1249 = vmatprep.subr.mxu0 0.0
    %1250 = vmatpush1.xpose.msra.mxu0 %v988
    %1251 = vmatprep.subr.mxu0 0.0
    %1252 = vmatpush1.xpose.msra.mxu0 %v991
    %1253 = vmatprep.subr.mxu0 0.0
    %1254 = vmatpush1.xpose.msra.mxu0 %v994
    %1255 = vmatprep.subr.mxu0 0.0
    %1256 = vmatpush1.xpose.msra.mxu0 %v997
    %1257 = vmatprep.subr.mxu0 0.0
    %1258 = vmatpush1.xpose.msra.mxu0 %v1000
    %1259 = vmatprep.subr.mxu0 0.0
    %1260 = vmatpush1.xpose.msra.mxu0 %v1003
    %1261 = vmatprep.subr.mxu0 0.0
    %1262 = vmatpush1.xpose.msra.mxu0 %v1006
    %1263 = vmatprep.subr.mxu0 0.0
    %1264 = vmatpush1.xpose.msra.mxu0 %v1009
    %1265 = vmatprep.subr.mxu0 0.0
    %1266 = vmatpush1.xpose.msra.mxu0 0.0
    %1267 = vmatprep.subr.mxu0 0.0
    %1268 = vmatpush1.xpose.msra.mxu0 0.0
    %1269 = vmatprep.subr.mxu0 0.0
    %1270 = vmatpush1.xpose.msra.mxu0 0.0
    %1271 = vmatprep.subr.mxu0 0.0
    %1272 = vmatpush1.xpose.msra.mxu0 0.0
    %1273 = vmatprep.subr.mxu0 0.0
    %1274 = vmatpush1.xpose.msra.mxu0 0.0
    %1275 = vmatprep.subr.mxu0 0.0
    %1276 = vmatpush1.xpose.msra.mxu0 0.0
    %1277 = vmatprep.subr.mxu0 0.0
    %1278 = vmatpush1.xpose.msra.mxu0 0.0
    %1279 = vmatprep.subr.mxu0 0.0
    %1280 = vmatpush1.xpose.msra.mxu0 0.0
    %1281 = vmatprep.subr.mxu0 0.0
    %1282 = vmatpush1.xpose.msra.mxu0 0.0
    %1283 = vmatprep.subr.mxu0 0.0
    %1284 = vmatpush1.xpose.msra.mxu0 0.0
    %1285 = vmatprep.subr.mxu0 0.0
    %1286 = vmatpush1.xpose.msra.mxu0 0.0
    %1287 = vmatprep.subr.mxu0 0.0
    %1288 = vmatpush1.xpose.msra.mxu0 0.0
    %1289 = vmatprep.subr.mxu0 0.0
    %1290 = vmatpush1.xpose.msra.mxu0 0.0
    %1291 = vmatprep.subr.mxu0 0.0
    %1292 = vmatpush1.xpose.msra.mxu0 0.0
    %1293 = vmatprep.subr.mxu0 0.0
    %1294 = vmatpush1.xpose.msra.mxu0 0.0
    %1295 = vmatprep.subr.mxu0 0.0
    %1296 = vmatpush1.xpose.msra.mxu0 0.0
    %1297 = vmatprep.mubr.f32.mxu0 0.0
    %1298 = vmatmul.mubr.f32.gmra.mrb[0].mxu0 %v1231
    %v1299 = vpop.f32.mrb[0].mxu0
    %v1300 = vadd.f32 %v1229, %v1299
    %v1301 = vpop.f32.mrb[0].mxu0
    %1302 = vdwg.mxu0
    %1303 = vst.msk [vmem:[%s7] sm:$0xff] %vm58, %v1078
    %1304 = vst.msk [vmem:[%s7 + $0x8] sm:$0xff] %vm58, %v1083
    %1305 = vst.msk [vmem:[%s7 + $0x10] sm:$0xff] %vm58, %v1088
    %1306 = vst.msk [vmem:[%s7 + $0x18] sm:$0xff] %vm58, %v1093
    %1307 = vst.msk [vmem:[%s7 + $0x20] sm:$0xff] %vm58, %v1098
    %1308 = vst.msk [vmem:[%s7 + $0x28] sm:$0xff] %vm58, %v1103
    %1309 = vst.msk [vmem:[%s7 + $0x30] sm:$0xff] %vm58, %v1108
    %1310 = vst.msk [vmem:[%s7 + $0x38] sm:$0xff] %vm58, %v1113
    %1311 = vst.msk [vmem:[%s7 + $0x40] sm:$0xff] %vm58, %v1118
    %1312 = vst.msk [vmem:[%s7 + $0x48] sm:$0xff] %vm58, %v1123
    %1313 = vst.msk [vmem:[%s7 + $0x50] sm:$0xff] %vm58, %v1128
    %1314 = vst.msk [vmem:[%s7 + $0x58] sm:$0xff] %vm58, %v1133
    %1315 = vst.msk [vmem:[%s7 + $0x60] sm:$0xff] %vm58, %v1138
    %1316 = vst.msk [vmem:[%s7 + $0x68] sm:$0xff] %vm58, %v1143
    %1317 = vst.msk [vmem:[%s7 + $0x70] sm:$0xff] %vm58, %v1148
    %1318 = vst.msk [vmem:[%s7 + $0x78] sm:$0xff] %vm58, %v1153
    %v1319 = vcvt.f32.s32.to.zero.pseudo %v1300
    %1320 = vst [vmem:[#allocation2] sm:$0x1] %v1319
    %v1321 = vsub.f32 %v1078, %v393
    %v1322 = vsub.f32 %v1083, %v398
    %v1323 = vsub.f32 %v1088, %v403
    %v1324 = vsub.f32 %v1093, %v408
    %v1325 = vsub.f32 %v1098, %v413
    %v1326 = vsub.f32 %v1103, %v418
    %v1327 = vsub.f32 %v1108, %v423
    %v1328 = vsub.f32 %v1113, %v428
    %v1329 = vsub.f32 %v1118, %v433
    %v1330 = vsub.f32 %v1123, %v438
    %v1331 = vsub.f32 %v1128, %v443
    %v1332 = vsub.f32 %v1133, %v448
    %v1333 = vsub.f32 %v1138, %v453
    %v1334 = vsub.f32 %v1143, %v458
    %v1335 = vsub.f32 %v1148, %v463
    %v1336 = vsub.f32 %v1153, %v468
    %v1337 = vmul.f32 %v1321, %v1321
    %v1338 = vmul.f32 %v1322, %v1322
    %v1339 = vmul.f32 %v1323, %v1323
    %v1340 = vmul.f32 %v1324, %v1324
    %v1341 = vmul.f32 %v1325, %v1325
    %v1342 = vmul.f32 %v1326, %v1326
    %v1343 = vmul.f32 %v1327, %v1327
    %v1344 = vmul.f32 %v1328, %v1328
    %v1345 = vmul.f32 %v1329, %v1329
    %v1346 = vmul.f32 %v1330, %v1330
    %v1347 = vmul.f32 %v1331, %v1331
    %v1348 = vmul.f32 %v1332, %v1332
    %v1349 = vmul.f32 %v1333, %v1333
    %v1350 = vmul.f32 %v1334, %v1334
    %v1351 = vmul.f32 %v1335, %v1335
    %v1352 = vmul.f32 %v1336, %v1336
    %v1353 = vsel %vm58, %v1337, 0.0
    %1354 = vadd.xlane.f32.xlu0 %v1353
    %v1355 = vpop.xlane.xlu0 %1354
    %v1356 = vsel %vm58, %v1338, 0.0
    %1357 = vadd.xlane.f32.xlu0 %v1356
    %v1358 = vpop.xlane.xlu0 %1357
    %v1359 = vsel %vm58, %v1339, 0.0
    %1360 = vadd.xlane.f32.xlu0 %v1359
    %v1361 = vpop.xlane.xlu0 %1360
    %v1362 = vsel %vm58, %v1340, 0.0
    %1363 = vadd.xlane.f32.xlu0 %v1362
    %v1364 = vpop.xlane.xlu0 %1363
    %v1365 = vsel %vm58, %v1341, 0.0
    %1366 = vadd.xlane.f32.xlu0 %v1365
    %v1367 = vpop.xlane.xlu0 %1366
    %v1368 = vsel %vm58, %v1342, 0.0
    %1369 = vadd.xlane.f32.xlu0 %v1368
    %v1370 = vpop.xlane.xlu0 %1369
    %v1371 = vsel %vm58, %v1343, 0.0
    %1372 = vadd.xlane.f32.xlu0 %v1371
    %v1373 = vpop.xlane.xlu0 %1372
    %v1374 = vsel %vm58, %v1344, 0.0
    %1375 = vadd.xlane.f32.xlu0 %v1374
    %v1376 = vpop.xlane.xlu0 %1375
    %v1377 = vsel %vm58, %v1345, 0.0
    %1378 = vadd.xlane.f32.xlu0 %v1377
    %v1379 = vpop.xlane.xlu0 %1378
    %v1380 = vsel %vm58, %v1346, 0.0
    %1381 = vadd.xlane.f32.xlu0 %v1380
    %v1382 = vpop.xlane.xlu0 %1381
    %v1383 = vsel %vm58, %v1347, 0.0
    %1384 = vadd.xlane.f32.xlu0 %v1383
    %v1385 = vpop.xlane.xlu0 %1384
    %v1386 = vsel %vm58, %v1348, 0.0
    %1387 = vadd.xlane.f32.xlu0 %v1386
    %v1388 = vpop.xlane.xlu0 %1387
    %v1389 = vsel %vm58, %v1349, 0.0
    %1390 = vadd.xlane.f32.xlu0 %v1389
    %v1391 = vpop.xlane.xlu0 %1390
    %v1392 = vsel %vm58, %v1350, 0.0
    %1393 = vadd.xlane.f32.xlu0 %v1392
    %v1394 = vpop.xlane.xlu0 %1393
    %v1395 = vsel %vm58, %v1351, 0.0
    %1396 = vadd.xlane.f32.xlu0 %v1395
    %v1397 = vpop.xlane.xlu0 %1396
    %v1398 = vsel %vm58, %v1352, 0.0
    %1399 = vadd.xlane.f32.xlu0 %v1398
    %v1400 = vpop.xlane.xlu0 %1399
    %v1401 = vadd.f32 %v1355, %v1358
    %v1402 = vadd.f32 %v1401, %v1361
    %v1403 = vadd.f32 %v1402, %v1364
    %v1404 = vadd.f32 %v1403, %v1367
    %v1405 = vadd.f32 %v1404, %v1370
    %v1406 = vadd.f32 %v1405, %v1373
    %v1407 = vadd.f32 %v1406, %v1376
    %v1408 = vadd.f32 %v1407, %v1379
    %v1409 = vadd.f32 %v1408, %v1382
    %v1410 = vadd.f32 %v1409, %v1385
    %v1411 = vadd.f32 %v1410, %v1388
    %v1412 = vadd.f32 %v1411, %v1391
    %v1413 = vadd.f32 %v1412, %v1394
    %v1414 = vadd.f32 %v1413, %v1397
    %v1415 = vadd.f32 %v1414, %v1400
    %v1416 = vrot.slane %v1415, 4
    %v1417 = vadd.f32 %v1415, %v1416
    %v1418 = vrot.slane %v1417, 2
    %v1419 = vadd.f32 %v1417, %v1418
    %v1420 = vrot.slane %v1419, 1
    %v1421 = vadd.f32 %v1419, %v1420
    %vm1422 = vcmask 0
    %1423 = vst.msk [vmem:[#allocation4] sm:$0x1] %vm1422, %v1421
    %p1424 = scmp.eq.s32.totalorder 0, 0
    // Predicated region
    $region30: #{tpu_custom_call.1} parent=1 // pred_check
      %p1425 = pneg %p1424
    $region31: #{tpu_custom_call.1} parent=1 // pred_check_branch
      %1427 = sbr.rel (%p1425) target = $region33
    $region32: #{tpu_custom_call.1} parent=1 // pred_region
      %s1428 = smul.u32 0, 128
      %v1429 = vlaneseq
      %v1430 = vshrl.u32 %v1429, 7
      %v1431 = vadd.s32 %v1430, 8
      %v1432 = vadd.s32 %v1430, 16
      %v1433 = vadd.s32 %v1430, 24
      %v1434 = vadd.s32 %v1430, 32
      %v1435 = vadd.s32 %v1430, 40
      %v1436 = vadd.s32 %v1430, 48
      %v1437 = vadd.s32 %v1430, 56
      %v1438 = vadd.s32 %v1430, 64
      %v1439 = vadd.s32 %v1430, 72
      %v1440 = vadd.s32 %v1430, 80
      %v1441 = vadd.s32 %v1430, 88
      %v1442 = vadd.s32 %v1430, 96
      %v1443 = vadd.s32 %v1430, 104
      %v1444 = vadd.s32 %v1430, 112
      %v1445 = vadd.s32 %v1430, 120
      %v1446 = vstv %s1428
      %v1447 = vadd.s32 %v1446, %v1430
      %v1448 = vadd.s32 %v1446, %v1431
      %v1449 = vadd.s32 %v1446, %v1432
      %v1450 = vadd.s32 %v1446, %v1433
      %v1451 = vadd.s32 %v1446, %v1434
      %v1452 = vadd.s32 %v1446, %v1435
      %v1453 = vadd.s32 %v1446, %v1436
      %v1454 = vadd.s32 %v1446, %v1437
      %v1455 = vadd.s32 %v1446, %v1438
      %v1456 = vadd.s32 %v1446, %v1439
      %v1457 = vadd.s32 %v1446, %v1440
      %v1458 = vadd.s32 %v1446, %v1441
      %v1459 = vadd.s32 %v1446, %v1442
      %v1460 = vadd.s32 %v1446, %v1443
      %v1461 = vadd.s32 %v1446, %v1444
      %v1462 = vadd.s32 %v1446, %v1445
      %vm1463 = vcmp.lt.s32.totalorder %v1447, 16
      %vm1464 = vcmp.lt.s32.totalorder %v1448, 16
      %vm1465 = vcmp.lt.s32.totalorder %v1449, 16
      %vm1466 = vcmp.lt.s32.totalorder %v1450, 16
      %vm1467 = vcmp.lt.s32.totalorder %v1451, 16
      %vm1468 = vcmp.lt.s32.totalorder %v1452, 16
      %vm1469 = vcmp.lt.s32.totalorder %v1453, 16
      %vm1470 = vcmp.lt.s32.totalorder %v1454, 16
      %vm1471 = vcmp.lt.s32.totalorder %v1455, 16
      %vm1472 = vcmp.lt.s32.totalorder %v1456, 16
      %vm1473 = vcmp.lt.s32.totalorder %v1457, 16
      %vm1474 = vcmp.lt.s32.totalorder %v1458, 16
      %vm1475 = vcmp.lt.s32.totalorder %v1459, 16
      %vm1476 = vcmp.lt.s32.totalorder %v1460, 16
      %vm1477 = vcmp.lt.s32.totalorder %v1461, 16
      %vm1478 = vcmp.lt.s32.totalorder %v1462, 16
      %v1479 = vsel %vm1463, 1, 0
      %v1480 = vsel %vm1464, 1, 0
      %v1481 = vsel %vm1465, 1, 0
      %v1482 = vsel %vm1466, 1, 0
      %v1483 = vsel %vm1467, 1, 0
      %v1484 = vsel %vm1468, 1, 0
      %v1485 = vsel %vm1469, 1, 0
      %v1486 = vsel %vm1470, 1, 0
      %v1487 = vsel %vm1471, 1, 0
      %v1488 = vsel %vm1472, 1, 0
      %v1489 = vsel %vm1473, 1, 0
      %v1490 = vsel %vm1474, 1, 0
      %v1491 = vsel %vm1475, 1, 0
      %v1492 = vsel %vm1476, 1, 0
      %v1493 = vsel %vm1477, 1, 0
      %v1494 = vsel %vm1478, 1, 0
      %vm1495 = vcmp.eq.s32.totalorder %v1479, 1
      %vm1496 = vcmp.eq.s32.totalorder %v1480, 1
      %vm1497 = vcmp.eq.s32.totalorder %v1481, 1
      %vm1498 = vcmp.eq.s32.totalorder %v1482, 1
      %vm1499 = vcmp.eq.s32.totalorder %v1483, 1
      %vm1500 = vcmp.eq.s32.totalorder %v1484, 1
      %vm1501 = vcmp.eq.s32.totalorder %v1485, 1
      %vm1502 = vcmp.eq.s32.totalorder %v1486, 1
      %vm1503 = vcmp.eq.s32.totalorder %v1487, 1
      %vm1504 = vcmp.eq.s32.totalorder %v1488, 1
      %vm1505 = vcmp.eq.s32.totalorder %v1489, 1
      %vm1506 = vcmp.eq.s32.totalorder %v1490, 1
      %vm1507 = vcmp.eq.s32.totalorder %v1491, 1
      %vm1508 = vcmp.eq.s32.totalorder %v1492, 1
      %vm1509 = vcmp.eq.s32.totalorder %v1493, 1
      %vm1510 = vcmp.eq.s32.totalorder %v1494, 1
      %v1511 = vsel %vm1495, %v1321, 0.0
      %v1512 = vsel %vm1496, %v1322, 0.0
      %v1513 = vsel %vm1497, %v1323, 0.0
      %v1514 = vsel %vm1498, %v1324, 0.0
      %v1515 = vsel %vm1499, %v1325, 0.0
      %v1516 = vsel %vm1500, %v1326, 0.0
      %v1517 = vsel %vm1501, %v1327, 0.0
      %v1518 = vsel %vm1502, %v1328, 0.0
      %v1519 = vsel %vm1503, %v1329, 0.0
      %v1520 = vsel %vm1504, %v1330, 0.0
      %v1521 = vsel %vm1505, %v1331, 0.0
      %v1522 = vsel %vm1506, %v1332, 0.0
      %v1523 = vsel %vm1507, %v1333, 0.0
      %v1524 = vsel %vm1508, %v1334, 0.0
      %v1525 = vsel %vm1509, %v1335, 0.0
      %v1526 = vsel %vm1510, %v1336, 0.0
      %v1527 = vmul.f32 %v1511, %v1511
      %v1528 = vmul.f32 %v1512, %v1512
      %v1529 = vmul.f32 %v1513, %v1513
      %v1530 = vmul.f32 %v1514, %v1514
      %v1531 = vmul.f32 %v1515, %v1515
      %v1532 = vmul.f32 %v1516, %v1516
      %v1533 = vmul.f32 %v1517, %v1517
      %v1534 = vmul.f32 %v1518, %v1518
      %v1535 = vmul.f32 %v1519, %v1519
      %v1536 = vmul.f32 %v1520, %v1520
      %v1537 = vmul.f32 %v1521, %v1521
      %v1538 = vmul.f32 %v1522, %v1522
      %v1539 = vmul.f32 %v1523, %v1523
      %v1540 = vmul.f32 %v1524, %v1524
      %v1541 = vmul.f32 %v1525, %v1525
      %v1542 = vmul.f32 %v1526, %v1526
      %v1543 = vsel %vm58, %v1527, 0.0
      %1544 = vadd.xlane.f32.xlu0 %v1543
      %v1545 = vpop.xlane.xlu0 %1544
      %v1546 = vsel %vm58, %v1528, 0.0
      %1547 = vadd.xlane.f32.xlu0 %v1546
      %v1548 = vpop.xlane.xlu0 %1547
      %v1549 = vsel %vm58, %v1529, 0.0
      %1550 = vadd.xlane.f32.xlu0 %v1549
      %v1551 = vpop.xlane.xlu0 %1550
      %v1552 = vsel %vm58, %v1530, 0.0
      %1553 = vadd.xlane.f32.xlu0 %v1552
      %v1554 = vpop.xlane.xlu0 %1553
      %v1555 = vsel %vm58, %v1531, 0.0
      %1556 = vadd.xlane.f32.xlu0 %v1555
      %v1557 = vpop.xlane.xlu0 %1556
      %v1558 = vsel %vm58, %v1532, 0.0
      %1559 = vadd.xlane.f32.xlu0 %v1558
      %v1560 = vpop.xlane.xlu0 %1559
      %v1561 = vsel %vm58, %v1533, 0.0
      %1562 = vadd.xlane.f32.xlu0 %v1561
      %v1563 = vpop.xlane.xlu0 %1562
      %v1564 = vsel %vm58, %v1534, 0.0
      %1565 = vadd.xlane.f32.xlu0 %v1564
      %v1566 = vpop.xlane.xlu0 %1565
      %v1567 = vsel %vm58, %v1535, 0.0
      %1568 = vadd.xlane.f32.xlu0 %v1567
      %v1569 = vpop.xlane.xlu0 %1568
      %v1570 = vsel %vm58, %v1536, 0.0
      %1571 = vadd.xlane.f32.xlu0 %v1570
      %v1572 = vpop.xlane.xlu0 %1571
      %v1573 = vsel %vm58, %v1537, 0.0
      %1574 = vadd.xlane.f32.xlu0 %v1573
      %v1575 = vpop.xlane.xlu0 %1574
      %v1576 = vsel %vm58, %v1538, 0.0
      %1577 = vadd.xlane.f32.xlu0 %v1576
      %v1578 = vpop.xlane.xlu0 %1577
      %v1579 = vsel %vm58, %v1539, 0.0
      %1580 = vadd.xlane.f32.xlu0 %v1579
      %v1581 = vpop.xlane.xlu0 %1580
      %v1582 = vsel %vm58, %v1540, 0.0
      %1583 = vadd.xlane.f32.xlu0 %v1582
      %v1584 = vpop.xlane.xlu0 %1583
      %v1585 = vsel %vm58, %v1541, 0.0
      %1586 = vadd.xlane.f32.xlu0 %v1585
      %v1587 = vpop.xlane.xlu0 %1586
      %v1588 = vsel %vm58, %v1542, 0.0
      %1589 = vadd.xlane.f32.xlu0 %v1588
      %v1590 = vpop.xlane.xlu0 %1589
      %v1591 = vadd.f32 %v1545, %v1548
      %v1592 = vadd.f32 %v1591, %v1551
      %v1593 = vadd.f32 %v1592, %v1554
      %v1594 = vadd.f32 %v1593, %v1557
      %v1595 = vadd.f32 %v1594, %v1560
      %v1596 = vadd.f32 %v1595, %v1563
      %v1597 = vadd.f32 %v1596, %v1566
      %v1598 = vadd.f32 %v1597, %v1569
      %v1599 = vadd.f32 %v1598, %v1572
      %v1600 = vadd.f32 %v1599, %v1575
      %v1601 = vadd.f32 %v1600, %v1578
      %v1602 = vadd.f32 %v1601, %v1581
      %v1603 = vadd.f32 %v1602, %v1584
      %v1604 = vadd.f32 %v1603, %v1587
      %v1605 = vadd.f32 %v1604, %v1590
      %v1606 = vrot.slane %v1605, 4
      %v1607 = vadd.f32 %v1605, %v1606
      %v1608 = vrot.slane %v1607, 2
      %v1609 = vadd.f32 %v1607, %v1608
      %v1610 = vrot.slane %v1609, 1
      %v1611 = vadd.f32 %v1609, %v1610
      %1612 = vst.msk [vmem:[#allocation4] sm:$0x1] %vm1422, %v1611
    $region33: #{tpu_custom_call.1} parent=1 // pred_fallthru
      _
    // Predicated region
    $region34: #{tpu_custom_call.1} parent=1 // pred_check
      _
    $region35: #{tpu_custom_call.1} parent=1 // pred_check_branch
      %1614 = sbr.rel (0) target = $region37
    $region36: #{tpu_custom_call.1} parent=1 // pred_region
      _
    $region37: #{tpu_custom_call.1} parent=1 // pred_fallthru
      _
    // Predicated region
    $region38: #{tpu_custom_call.1} parent=1 // pred_check
      _
    $region39: #{tpu_custom_call.1} parent=1 // pred_check_branch
      %1616 = sbr.rel (0) target = $region41
    $region40: #{tpu_custom_call.1} parent=1 // pred_region
      %s1618 = ssub.s32 16, 16
      %1619 = vsyncadd [#allocation3], %s1618
      %s1621 = sshll.u32 [#allocation2], 4
      %s1622 = int_to_ptr.vmem [resolvable:$true] %s1621
      %1624 = dma.vmem_to_hbm [thread:$0]  %s1622, 16, %s8, [#allocation3]
    $region41: #{tpu_custom_call.1} parent=1 // pred_fallthru
      _
    // Predicated region
    $region42: #{tpu_custom_call.1} parent=1 // pred_check
      _
    $region43: #{tpu_custom_call.1} parent=1 // pred_check_branch
      %1626 = sbr.rel (0) target = $region45
    $region44: #{tpu_custom_call.1} parent=1 // pred_region
      %s1628 = ssub.s32 16, 16
      %1629 = vsyncadd [#allocation5], %s1628
      %s1631 = sshll.u32 [#allocation4], 4
      %s1632 = int_to_ptr.vmem [resolvable:$true] %s1631
      %1634 = dma.vmem_to_hbm [thread:$0]  %s1632, 16, %s9, [#allocation5]
    $region45: #{tpu_custom_call.1} parent=1 // pred_fallthru
      _
    // Predicated region
    $region46: #{tpu_custom_call.1} parent=1 // pred_check
      _
    $region47: #{tpu_custom_call.1} parent=1 // pred_check_branch
      %1636 = sbr.rel (0) target = $region49
    $region48: #{tpu_custom_call.1} parent=1 // pred_region
      _
    $region49: #{tpu_custom_call.1} parent=1 // pred_fallthru
      _
    // Predicated region
    $region50: #{tpu_custom_call.1} parent=1 // pred_check
      _
    $region51: #{tpu_custom_call.1} parent=1 // pred_check_branch
      %1638 = sbr.rel (0) target = $region53
    $region52: #{tpu_custom_call.1} parent=1 // pred_region
      %1639 = dma.done [#allocation3], 16
    $region53: #{tpu_custom_call.1} parent=1 // pred_fallthru
      _
    // Predicated region
    $region54: #{tpu_custom_call.1} parent=1 // pred_check
      _
    $region55: #{tpu_custom_call.1} parent=1 // pred_check_branch
      %1641 = sbr.rel (0) target = $region57
    $region56: #{tpu_custom_call.1} parent=1 // pred_region
      %1642 = dma.done [#allocation5], 16
    $region57: #{tpu_custom_call.1} parent=1 // pred_fallthru
      _
    %1643 = vsyncpa [#allocation3], 1
    %1644 = vsyncpa [#allocation5], 1

// kernel: tpu_custom_call.1
$region0: #{tpu_custom_call.1}
  #allocation0 [shape = 'u32[]', space=smem, size = 0x4, offset = 0x4, fixed_abs, tag = 'smem constant byte address 0x4 - core index']
  #allocation1 [shape = 'u32[144,128]{1,0:T(1,128)}', space=vmem, size = 0x12000, scoped, tag = 'internal scratch']
  %s0 = inlined_call_operand.vmem [shape: f32[128,32], index: 0, kind: input, shape index: {}]
  %s1 = inlined_call_operand.vmem [shape: f32[32,16], index: 1, kind: input, shape index: {}]
  %s2 = inlined_call_operand.vmem [shape: f32[1,16], index: 2, kind: input, shape index: {}]
  %s3 = inlined_call_operand.vmem [shape: f32[16,32], index: 3, kind: input, shape index: {}]
  %s4 = inlined_call_operand.vmem [shape: f32[1,32], index: 4, kind: input, shape index: {}]
  %s5 = inlined_call_operand.vmem [shape: f32[64,32], index: 5, kind: input, shape index: {}]
  %s6 = inlined_call_operand.vmem [shape: f32[1,64], index: 6, kind: input, shape index: {}]
  %s7 = inlined_call_operand.vmem [shape: f32[128,32], index: 7, kind: output, shape index: {0}]
  %s8 = inlined_call_operand.hbm [shape: s32[1,1,128], index: 8, kind: output, shape index: {1}]
  %s9 = inlined_call_operand.hbm [shape: f32[1,1,1], index: 9, kind: output, shape index: {2}]
  %10 = xla_tuple %s7, %s8, %s9
  %s11 = sld [smem:[#allocation0]]
  $region58: #{tpu_custom_call.1} parent=0
    _
  %s13 = ssub.s32 1, %s11
  %s14 = scalar_select 0, %s13, %s11
  $region1: #{tpu_custom_call.1} parent=0
    #allocation2 [shape = 'u8[512]{0}', space=vmem, size = 0x400, scoped, tag = 'output window, operand 1, single buffered']
    #allocation3 [shape = 's32[1]{0}', space=sflag, size = 0x4, scoped, tag = 'scoped memory for tpu_custom_call.1']
    #allocation4 [shape = 'u8[512]{0}', space=vmem, size = 0x400, scoped, tag = 'output window, operand 2, single buffered']
    #allocation5 [shape = 's32[1]{0}', space=sflag, size = 0x4, scoped, tag = 'scoped memory for tpu_custom_call.1']
    %15 = vsyncpa [#allocation3], 0
    %16 = vsyncpa [#allocation5], 0
    // Predicated region
    $region2: #{tpu_custom_call.1} parent=1 // pred_check
      _
    $region3: #{tpu_custom_call.1} parent=1 // pred_check_branch
      %18 = sbr.rel (0) target = $region5
    $region4: #{tpu_custom_call.1} parent=1 // pred_region
      _
    $region5: #{tpu_custom_call.1} parent=1 // pred_fallthru
      _
    // Predicated region
    $region6: #{tpu_custom_call.1} parent=1 // pred_check
      _
    $region7: #{tpu_custom_call.1} parent=1 // pred_check_branch
      %20 = sbr.rel (0) target = $region9
    $region8: #{tpu_custom_call.1} parent=1 // pred_region
      _
    $region9: #{tpu_custom_call.1} parent=1 // pred_fallthru
      _
    // Predicated region
    $region10: #{tpu_custom_call.1} parent=1 // pred_check
      _
    $region11: #{tpu_custom_call.1} parent=1 // pred_check_branch
      %22 = sbr.rel (0) target = $region13
    $region12: #{tpu_custom_call.1} parent=1 // pred_region
      _
    $region13: #{tpu_custom_call.1} parent=1 // pred_fallthru
      _
    // Predicated region
    $region14: #{tpu_custom_call.1} parent=1 // pred_check
      _
    $region15: #{tpu_custom_call.1} parent=1 // pred_check_branch
      %24 = sbr.rel (0) target = $region17
    $region16: #{tpu_custom_call.1} parent=1 // pred_region
      _
    $region17: #{tpu_custom_call.1} parent=1 // pred_fallthru
      _
    // Predicated region
    $region18: #{tpu_custom_call.1} parent=1 // pred_check
      _
    $region19: #{tpu_custom_call.1} parent=1 // pred_check_branch
      %26 = sbr.rel (0) target = $region21
    $region20: #{tpu_custom_call.1} parent=1 // pred_region
      _
    $region21: #{tpu_custom_call.1} parent=1 // pred_fallthru
      _
    // Predicated region
    $region22: #{tpu_custom_call.1} parent=1 // pred_check
      _
    $region23: #{tpu_custom_call.1} parent=1 // pred_check_branch
      %28 = sbr.rel (0) target = $region25
    $region24: #{tpu_custom_call.1} parent=1 // pred_region
      _
    $region25: #{tpu_custom_call.1} parent=1 // pred_fallthru
      _
    // Predicated region
    $region26: #{tpu_custom_call.1} parent=1 // pred_check
      _
    $region27: #{tpu_custom_call.1} parent=1 // pred_check_branch
      %30 = sbr.rel (0) target = $region29
    $region28: #{tpu_custom_call.1} parent=1 // pred_region
      _
    $region29: #{tpu_custom_call.1} parent=1 // pred_fallthru
      _
    %v31 = vld [vmem:[%s0] sm:$0xff]
    %v32 = vld [vmem:[%s0 + $0x8] sm:$0xff]
    %v33 = vld [vmem:[%s0 + $0x10] sm:$0xff]
    %v34 = vld [vmem:[%s0 + $0x18] sm:$0xff]
    %v35 = vld [vmem:[%s0 + $0x20] sm:$0xff]
    %v36 = vld [vmem:[%s0 + $0x28] sm:$0xff]
    %v37 = vld [vmem:[%s0 + $0x30] sm:$0xff]
    %v38 = vld [vmem:[%s0 + $0x38] sm:$0xff]
    %v39 = vld [vmem:[%s0 + $0x40] sm:$0xff]
    %v40 = vld [vmem:[%s0 + $0x48] sm:$0xff]
    %v41 = vld [vmem:[%s0 + $0x50] sm:$0xff]
    %v42 = vld [vmem:[%s0 + $0x58] sm:$0xff]
    %v43 = vld [vmem:[%s0 + $0x60] sm:$0xff]
    %v44 = vld [vmem:[%s0 + $0x68] sm:$0xff]
    %v45 = vld [vmem:[%s0 + $0x70] sm:$0xff]
    %v46 = vld [vmem:[%s0 + $0x78] sm:$0xff]
    %v47 = vld [vmem:[%s1] sm:$0xff]
    %v48 = vld [vmem:[%s1 + $0x8] sm:$0xff]
    %v49 = vld [vmem:[%s1 + $0x10] sm:$0xff]
    %v50 = vld [vmem:[%s1 + $0x18] sm:$0xff]
    %v51 = vld [vmem:[%s2] sm:$0x1]
    %v53 = vlaneseq
    %v54 = vshrl.u32 %v53, 7
    %v55 = vsub.s32 0, %v54
    %v56 = vrot.slane %v51, %v55
    %vm58 = vcmask 261120
    %v60 = vsel %vm58, %v31, 0
    %v63 = vsel %vm58, %v32, 0
    %v66 = vsel %vm58, %v33, 0
    %v69 = vsel %vm58, %v34, 0
    %v72 = vsel %vm58, %v35, 0
    %v75 = vsel %vm58, %v36, 0
    %v78 = vsel %vm58, %v37, 0
    %v81 = vsel %vm58, %v38, 0
    %v84 = vsel %vm58, %v39, 0
    %v87 = vsel %vm58, %v40, 0
    %v90 = vsel %vm58, %v41, 0
    %v93 = vsel %vm58, %v42, 0
    %v96 = vsel %vm58, %v43, 0
    %v99 = vsel %vm58, %v44, 0
    %v102 = vsel %vm58, %v45, 0
    %v105 = vsel %vm58, %v46, 0
    %107 = vmatprep.subr.mxu0 0.0
    %108 = vmatpush1.msra.mxu0 %v47
    %109 = vmatprep.subr.mxu0 0.0
    %110 = vmatpush1.msra.mxu0 %v48
    %111 = vmatprep.subr.mxu0 0.0
    %112 = vmatpush1.msra.mxu0 %v49
    %113 = vmatprep.subr.mxu0 0.0
    %114 = vmatpush1.msra.mxu0 %v50
    %115 = vmatprep.subr.mxu0 0.0
    %116 = vmatpush1.msra.mxu0 0.0
    %117 = vmatprep.subr.mxu0 0.0
    %118 = vmatpush1.msra.mxu0 0.0
    %119 = vmatprep.subr.mxu0 0.0
    %120 = vmatpush1.msra.mxu0 0.0
    %121 = vmatprep.subr.mxu0 0.0
    %122 = vmatpush1.msra.mxu0 0.0
    %123 = vmatprep.subr.mxu0 0.0
    %124 = vmatpush1.msra.mxu0 0.0
    %125 = vmatprep.subr.mxu0 0.0
    %126 = vmatpush1.msra.mxu0 0.0
    %127 = vmatprep.subr.mxu0 0.0
    %128 = vmatpush1.msra.mxu0 0.0
    %129 = vmatprep.subr.mxu0 0.0
    %130 = vmatpush1.msra.mxu0 0.0
    %131 = vmatprep.subr.mxu0 0.0
    %132 = vmatpush1.msra.mxu0 0.0
    %133 = vmatprep.subr.mxu0 0.0
    %134 = vmatpush1.msra.mxu0 0.0
    %135 = vmatprep.subr.mxu0 0.0
    %136 = vmatpush1.msra.mxu0 0.0
    %137 = vmatprep.subr.mxu0 0.0
    %138 = vmatpush1.msra.mxu0 0.0
    %139 = vmatprep.subr.mxu0 0.0
    %140 = vmatpush1.msra.mxu0 0.0
    %141 = vmatprep.subr.mxu0 0.0
    %142 = vmatpush1.msra.mxu0 0.0
    %143 = vmatprep.subr.mxu0 0.0
    %144 = vmatpush1.msra.mxu0 0.0
    %145 = vmatprep.subr.mxu0 0.0
    %146 = vmatpush1.msra.mxu0 0.0
    %147 = vmatprep.subr.mxu0 0.0
    %148 = vmatpush1.msra.mxu0 0.0
    %149 = vmatprep.subr.mxu0 0.0
    %150 = vmatpush1.msra.mxu0 0.0
    %151 = vmatprep.subr.mxu0 0.0
    %152 = vmatpush1.msra.mxu0 0.0
    %153 = vmatprep.subr.mxu0 0.0
    %154 = vmatpush1.msra.mxu0 0.0
    %155 = vmatprep.subr.mxu0 0.0
    %156 = vmatpush1.msra.mxu0 0.0
    %157 = vmatprep.subr.mxu0 0.0
    %158 = vmatpush1.msra.mxu0 0.0
    %159 = vmatprep.subr.mxu0 0.0
    %160 = vmatpush1.msra.mxu0 0.0
    %161 = vmatprep.subr.mxu0 0.0
    %162 = vmatpush1.msra.mxu0 0.0
    %163 = vmatprep.subr.mxu0 0.0
    %164 = vmatpush1.msra.mxu0 0.0
    %165 = vmatprep.subr.mxu0 0.0
    %166 = vmatpush1.msra.mxu0 0.0
    %167 = vmatprep.subr.mxu0 0.0
    %168 = vmatpush1.msra.mxu0 0.0
    %169 = vmatprep.subr.mxu0 0.0
    %170 = vmatpush1.msra.mxu0 0.0
    %171 = vmatprep.mubr.f32.mxu0 0.0
    %172 = vmatmul.mubr.f32.gmra.mrb[0].mxu0 %v60
    %v173 = vpop.f32.mrb[0].mxu0
    %v174 = vadd.f32 %v56, %v173
    %v175 = vpop.f32.mrb[0].mxu0
    %176 = vmatprep.mubr.f32.mxu0 0.0
    %177 = vmatmul.mubr.f32.gmra.mrb[0].mxu0 %v63
    %v178 = vpop.f32.mrb[0].mxu0
    %v179 = vadd.f32 %v56, %v178
    %v180 = vpop.f32.mrb[0].mxu0
    %181 = vmatprep.mubr.f32.mxu0 0.0
    %182 = vmatmul.mubr.f32.gmra.mrb[0].mxu0 %v66
    %v183 = vpop.f32.mrb[0].mxu0
    %v184 = vadd.f32 %v56, %v183
    %v185 = vpop.f32.mrb[0].mxu0
    %186 = vmatprep.mubr.f32.mxu0 0.0
    %187 = vmatmul.mubr.f32.gmra.mrb[0].mxu0 %v69
    %v188 = vpop.f32.mrb[0].mxu0
    %v189 = vadd.f32 %v56, %v188
    %v190 = vpop.f32.mrb[0].mxu0
    %191 = vmatprep.mubr.f32.mxu0 0.0
    %192 = vmatmul.mubr.f32.gmra.mrb[0].mxu0 %v72
    %v193 = vpop.f32.mrb[0].mxu0
    %v194 = vadd.f32 %v56, %v193
    %v195 = vpop.f32.mrb[0].mxu0
    %196 = vmatprep.mubr.f32.mxu0 0.0
    %197 = vmatmul.mubr.f32.gmra.mrb[0].mxu0 %v75
    %v198 = vpop.f32.mrb[0].mxu0
    %v199 = vadd.f32 %v56, %v198
    %v200 = vpop.f32.mrb[0].mxu0
    %201 = vmatprep.mubr.f32.mxu0 0.0
    %202 = vmatmul.mubr.f32.gmra.mrb[0].mxu0 %v78
    %v203 = vpop.f32.mrb[0].mxu0
    %v204 = vadd.f32 %v56, %v203
    %v205 = vpop.f32.mrb[0].mxu0
    %206 = vmatprep.mubr.f32.mxu0 0.0
    %207 = vmatmul.mubr.f32.gmra.mrb[0].mxu0 %v81
    %v208 = vpop.f32.mrb[0].mxu0
    %v209 = vadd.f32 %v56, %v208
    %v210 = vpop.f32.mrb[0].mxu0
    %211 = vmatprep.mubr.f32.mxu0 0.0
    %212 = vmatmul.mubr.f32.gmra.mrb[0].mxu0 %v84
    %v213 = vpop.f32.mrb[0].mxu0
    %v214 = vadd.f32 %v56, %v213
    %v215 = vpop.f32.mrb[0].mxu0
    %216 = vmatprep.mubr.f32.mxu0 0.0
    %217 = vmatmul.mubr.f32.gmra.mrb[0].mxu0 %v87
    %v218 = vpop.f32.mrb[0].mxu0
    %v219 = vadd.f32 %v56, %v218
    %v220 = vpop.f32.mrb[0].mxu0
    %221 = vmatprep.mubr.f32.mxu0 0.0
    %222 = vmatmul.mubr.f32.gmra.mrb[0].mxu0 %v90
    %v223 = vpop.f32.mrb[0].mxu0
    %v224 = vadd.f32 %v56, %v223
    %v225 = vpop.f32.mrb[0].mxu0
    %226 = vmatprep.mubr.f32.mxu0 0.0
    %227 = vmatmul.mubr.f32.gmra.mrb[0].mxu0 %v93
    %v228 = vpop.f32.mrb[0].mxu0
    %v229 = vadd.f32 %v56, %v228
    %v230 = vpop.f32.mrb[0].mxu0
    %231 = vmatprep.mubr.f32.mxu0 0.0
    %232 = vmatmul.mubr.f32.gmra.mrb[0].mxu0 %v96
    %v233 = vpop.f32.mrb[0].mxu0
    %v234 = vadd.f32 %v56, %v233
    %v235 = vpop.f32.mrb[0].mxu0
    %236 = vmatprep.mubr.f32.mxu0 0.0
    %237 = vmatmul.mubr.f32.gmra.mrb[0].mxu0 %v99
    %v238 = vpop.f32.mrb[0].mxu0
    %v239 = vadd.f32 %v56, %v238
    %v240 = vpop.f32.mrb[0].mxu0
    %241 = vmatprep.mubr.f32.mxu0 0.0
    %242 = vmatmul.mubr.f32.gmra.mrb[0].mxu0 %v102
    %v243 = vpop.f32.mrb[0].mxu0
    %v244 = vadd.f32 %v56, %v243
    %v245 = vpop.f32.mrb[0].mxu0
    %246 = vmatprep.mubr.f32.mxu0 0.0
    %247 = vmatmul.mubr.f32.gmra.mrb[0].mxu0 %v105
    %v248 = vpop.f32.mrb[0].mxu0
    %v249 = vadd.f32 %v56, %v248
    %v250 = vpop.f32.mrb[0].mxu0
    %251 = vdwg.mxu0
    %v252 = vmax.f32 %v174, 0.0
    %v253 = vmax.f32 %v179, 0.0
    %v254 = vmax.f32 %v184, 0.0
    %v255 = vmax.f32 %v189, 0.0
    %v256 = vmax.f32 %v194, 0.0
    %v257 = vmax.f32 %v199, 0.0
    %v258 = vmax.f32 %v204, 0.0
    %v259 = vmax.f32 %v209, 0.0
    %v260 = vmax.f32 %v214, 0.0
    %v261 = vmax.f32 %v219, 0.0
    %v262 = vmax.f32 %v224, 0.0
    %v263 = vmax.f32 %v229, 0.0
    %v264 = vmax.f32 %v234, 0.0
    %v265 = vmax.f32 %v239, 0.0
    %v266 = vmax.f32 %v244, 0.0
    %v267 = vmax.f32 %v249, 0.0
    %v268 = vld [vmem:[%s3] sm:$0xff]
    %v269 = vld [vmem:[%s3 + $0x8] sm:$0xff]
    %v270 = vld [vmem:[%s4] sm:$0x1]
    %v272 = vlaneseq
    %v273 = vshrl.u32 %v272, 7
    %v274 = vsub.s32 0, %v273
    %v275 = vrot.slane %v270, %v274
    %vm277 = vcmask 130048
    %v279 = vsel %vm277, %v252, 0
    %v282 = vsel %vm277, %v253, 0
    %v285 = vsel %vm277, %v254, 0
    %v288 = vsel %vm277, %v255, 0
    %v291 = vsel %vm277, %v256, 0
    %v294 = vsel %vm277, %v257, 0
    %v297 = vsel %vm277, %v258, 0
    %v300 = vsel %vm277, %v259, 0
    %v303 = vsel %vm277, %v260, 0
    %v306 = vsel %vm277, %v261, 0
    %v309 = vsel %vm277, %v262, 0
    %v312 = vsel %vm277, %v263, 0
    %v315 = vsel %vm277, %v264, 0
    %v318 = vsel %vm277, %v265, 0
    %v321 = vsel %vm277, %v266, 0
    %v324 = vsel %vm277, %v267, 0
    %326 = vmatprep.subr.mxu0 0.0
    %327 = vmatpush1.msra.mxu0 %v268
    %328 = vmatprep.subr.mxu0 0.0
    %329 = vmatpush1.msra.mxu0 %v269
    %330 = vmatprep.subr.mxu0 0.0
    %331 = vmatpush1.msra.mxu0 0.0
    %332 = vmatprep.subr.mxu0 0.0
    %333 = vmatpush1.msra.mxu0 0.0
    %334 = vmatprep.subr.mxu0 0.0
    %335 = vmatpush1.msra.mxu0 0.0
    %336 = vmatprep.subr.mxu0 0.0
    %337 = vmatpush1.msra.mxu0 0.0
    %338 = vmatprep.subr.mxu0 0.0
    %339 = vmatpush1.msra.mxu0 0.0
    %340 = vmatprep.subr.mxu0 0.0
    %341 = vmatpush1.msra.mxu0 0.0
    %342 = vmatprep.subr.mxu0 0.0
    %343 = vmatpush1.msra.mxu0 0.0
    %344 = vmatprep.subr.mxu0 0.0
    %345 = vmatpush1.msra.mxu0 0.0
    %346 = vmatprep.subr.mxu0 0.0
    %347 = vmatpush1.msra.mxu0 0.0
    %348 = vmatprep.subr.mxu0 0.0
    %349 = vmatpush1.msra.mxu0 0.0
    %350 = vmatprep.subr.mxu0 0.0
    %351 = vmatpush1.msra.mxu0 0.0
    %352 = vmatprep.subr.mxu0 0.0
    %353 = vmatpush1.msra.mxu0 0.0
    %354 = vmatprep.subr.mxu0 0.0
    %355 = vmatpush1.msra.mxu0 0.0
    %356 = vmatprep.subr.mxu0 0.0
    %357 = vmatpush1.msra.mxu0 0.0
    %358 = vmatprep.subr.mxu0 0.0
    %359 = vmatpush1.msra.mxu0 0.0
    %360 = vmatprep.subr.mxu0 0.0
    %361 = vmatpush1.msra.mxu0 0.0
    %362 = vmatprep.subr.mxu0 0.0
    %363 = vmatpush1.msra.mxu0 0.0
    %364 = vmatprep.subr.mxu0 0.0
    %365 = vmatpush1.msra.mxu0 0.0
    %366 = vmatprep.subr.mxu0 0.0
    %367 = vmatpush1.msra.mxu0 0.0
    %368 = vmatprep.subr.mxu0 0.0
    %369 = vmatpush1.msra.mxu0 0.0
    %370 = vmatprep.subr.mxu0 0.0
    %371 = vmatpush1.msra.mxu0 0.0
    %372 = vmatprep.subr.mxu0 0.0
    %373 = vmatpush1.msra.mxu0 0.0
    %374 = vmatprep.subr.mxu0 0.0
    %375 = vmatpush1.msra.mxu0 0.0
    %376 = vmatprep.subr.mxu0 0.0
    %377 = vmatpush1.msra.mxu0 0.0
    %378 = vmatprep.subr.mxu0 0.0
    %379 = vmatpush1.msra.mxu0 0.0
    %380 = vmatprep.subr.mxu0 0.0
    %381 = vmatpush1.msra.mxu0 0.0
    %382 = vmatprep.subr.mxu0 0.0
    %383 = vmatpush1.msra.mxu0 0.0
    %384 = vmatprep.subr.mxu0 0.0
    %385 = vmatpush1.msra.mxu0 0.0
    %386 = vmatprep.subr.mxu0 0.0
    %387 = vmatpush1.msra.mxu0 0.0
    %388 = vmatprep.subr.mxu0 0.0
    %389 = vmatpush1.msra.mxu0 0.0
    %390 = vmatprep.mubr.f32.mxu0 0.0
    %391 = vmatmul.mubr.f32.gmra.mrb[0].mxu0 %v279
    %v392 = vpop.f32.mrb[0].mxu0
    %v393 = vadd.f32 %v275, %v392
    %v394 = vpop.f32.mrb[0].mxu0
    %395 = vmatprep.mubr.f32.mxu0 0.0
    %396 = vmatmul.mubr.f32.gmra.mrb[0].mxu0 %v282
    %v397 = vpop.f32.mrb[0].mxu0
    %v398 = vadd.f32 %v275, %v397
    %v399 = vpop.f32.mrb[0].mxu0
    %400 = vmatprep.mubr.f32.mxu0 0.0
    %401 = vmatmul.mubr.f32.gmra.mrb[0].mxu0 %v285
    %v402 = vpop.f32.mrb[0].mxu0
    %v403 = vadd.f32 %v275, %v402
    %v404 = vpop.f32.mrb[0].mxu0
    %405 = vmatprep.mubr.f32.mxu0 0.0
    %406 = vmatmul.mubr.f32.gmra.mrb[0].mxu0 %v288
    %v407 = vpop.f32.mrb[0].mxu0
    %v408 = vadd.f32 %v275, %v407
    %v409 = vpop.f32.mrb[0].mxu0
    %410 = vmatprep.mubr.f32.mxu0 0.0
    %411 = vmatmul.mubr.f32.gmra.mrb[0].mxu0 %v291
    %v412 = vpop.f32.mrb[0].mxu0
    %v413 = vadd.f32 %v275, %v412
    %v414 = vpop.f32.mrb[0].mxu0
    %415 = vmatprep.mubr.f32.mxu0 0.0
    %416 = vmatmul.mubr.f32.gmra.mrb[0].mxu0 %v294
    %v417 = vpop.f32.mrb[0].mxu0
    %v418 = vadd.f32 %v275, %v417
    %v419 = vpop.f32.mrb[0].mxu0
    %420 = vmatprep.mubr.f32.mxu0 0.0
    %421 = vmatmul.mubr.f32.gmra.mrb[0].mxu0 %v297
    %v422 = vpop.f32.mrb[0].mxu0
    %v423 = vadd.f32 %v275, %v422
    %v424 = vpop.f32.mrb[0].mxu0
    %425 = vmatprep.mubr.f32.mxu0 0.0
    %426 = vmatmul.mubr.f32.gmra.mrb[0].mxu0 %v300
    %v427 = vpop.f32.mrb[0].mxu0
    %v428 = vadd.f32 %v275, %v427
    %v429 = vpop.f32.mrb[0].mxu0
    %430 = vmatprep.mubr.f32.mxu0 0.0
    %431 = vmatmul.mubr.f32.gmra.mrb[0].mxu0 %v303
    %v432 = vpop.f32.mrb[0].mxu0
    %v433 = vadd.f32 %v275, %v432
    %v434 = vpop.f32.mrb[0].mxu0
    %435 = vmatprep.mubr.f32.mxu0 0.0
    %436 = vmatmul.mubr.f32.gmra.mrb[0].mxu0 %v306
    %v437 = vpop.f32.mrb[0].mxu0
    %v438 = vadd.f32 %v275, %v437
    %v439 = vpop.f32.mrb[0].mxu0
    %440 = vmatprep.mubr.f32.mxu0 0.0
    %441 = vmatmul.mubr.f32.gmra.mrb[0].mxu0 %v309
    %v442 = vpop.f32.mrb[0].mxu0
    %v443 = vadd.f32 %v275, %v442
    %v444 = vpop.f32.mrb[0].mxu0
    %445 = vmatprep.mubr.f32.mxu0 0.0
    %446 = vmatmul.mubr.f32.gmra.mrb[0].mxu0 %v312
    %v447 = vpop.f32.mrb[0].mxu0
    %v448 = vadd.f32 %v275, %v447
    %v449 = vpop.f32.mrb[0].mxu0
    %450 = vmatprep.mubr.f32.mxu0 0.0
    %451 = vmatmul.mubr.f32.gmra.mrb[0].mxu0 %v315
    %v452 = vpop.f32.mrb[0].mxu0
    %v453 = vadd.f32 %v275, %v452
    %v454 = vpop.f32.mrb[0].mxu0
    %455 = vmatprep.mubr.f32.mxu0 0.0
    %456 = vmatmul.mubr.f32.gmra.mrb[0].mxu0 %v318
    %v457 = vpop.f32.mrb[0].mxu0
    %v458 = vadd.f32 %v275, %v457
    %v459 = vpop.f32.mrb[0].mxu0
    %460 = vmatprep.mubr.f32.mxu0 0.0
    %461 = vmatmul.mubr.f32.gmra.mrb[0].mxu0 %v321
    %v462 = vpop.f32.mrb[0].mxu0
    %v463 = vadd.f32 %v275, %v462
    %v464 = vpop.f32.mrb[0].mxu0
    %465 = vmatprep.mubr.f32.mxu0 0.0
    %466 = vmatmul.mubr.f32.gmra.mrb[0].mxu0 %v324
    %v467 = vpop.f32.mrb[0].mxu0
    %v468 = vadd.f32 %v275, %v467
    %v469 = vpop.f32.mrb[0].mxu0
    %470 = vdwg.mxu0
    %v471 = vld [vmem:[%s6] sm:$0x1]
    %v472 = vld [vmem:[%s5] sm:$0xff]
    %v473 = vld [vmem:[%s5 + $0x8] sm:$0xff]
    %v474 = vld [vmem:[%s5 + $0x10] sm:$0xff]
    %v475 = vld [vmem:[%s5 + $0x18] sm:$0xff]
    %v476 = vld [vmem:[%s5 + $0x20] sm:$0xff]
    %v477 = vld [vmem:[%s5 + $0x28] sm:$0xff]
    %v478 = vld [vmem:[%s5 + $0x30] sm:$0xff]
    %v479 = vld [vmem:[%s5 + $0x38] sm:$0xff]
    %v481 = vsel %vm58, %v393, 0
    %v484 = vsel %vm58, %v398, 0
    %v487 = vsel %vm58, %v403, 0
    %v490 = vsel %vm58, %v408, 0
    %v493 = vsel %vm58, %v413, 0
    %v496 = vsel %vm58, %v418, 0
    %v499 = vsel %vm58, %v423, 0
    %v502 = vsel %vm58, %v428, 0
    %v505 = vsel %vm58, %v433, 0
    %v508 = vsel %vm58, %v438, 0
    %v511 = vsel %vm58, %v443, 0
    %v514 = vsel %vm58, %v448, 0
    %v517 = vsel %vm58, %v453, 0
    %v520 = vsel %vm58, %v458, 0
    %v523 = vsel %vm58, %v463, 0
    %v526 = vsel %vm58, %v468, 0
    %v529 = vsel %vm58, %v472, 0
    %v532 = vsel %vm58, %v473, 0
    %v535 = vsel %vm58, %v474, 0
    %v538 = vsel %vm58, %v475, 0
    %v541 = vsel %vm58, %v476, 0
    %v544 = vsel %vm58, %v477, 0
    %v547 = vsel %vm58, %v478, 0
    %v550 = vsel %vm58, %v479, 0
    %552 = vmatprep.subr.mxu0 0.0
    %553 = vmatpush1.xpose.msra.mxu0 %v529
    %554 = vmatprep.subr.mxu0 0.0
    %555 = vmatpush1.xpose.msra.mxu0 %v532
    %556 = vmatprep.subr.mxu0 0.0
    %557 = vmatpush1.xpose.msra.mxu0 %v535
    %558 = vmatprep.subr.mxu0 0.0
    %559 = vmatpush1.xpose.msra.mxu0 %v538
    %560 = vmatprep.subr.mxu0 0.0
    %561 = vmatpush1.xpose.msra.mxu0 %v541
    %562 = vmatprep.subr.mxu0 0.0
    %563 = vmatpush1.xpose.msra.mxu0 %v544
    %564 = vmatprep.subr.mxu0 0.0
    %565 = vmatpush1.xpose.msra.mxu0 %v547
    %566 = vmatprep.subr.mxu0 0.0
    %567 = vmatpush1.xpose.msra.mxu0 %v550
    %568 = vmatprep.subr.mxu0 0.0
    %569 = vmatpush1.xpose.msra.mxu0 0.0
    %570 = vmatprep.subr.mxu0 0.0
    %571 = vmatpush1.xpose.msra.mxu0 0.0
    %572 = vmatprep.subr.mxu0 0.0
    %573 = vmatpush1.xpose.msra.mxu0 0.0
    %574 = vmatprep.subr.mxu0 0.0
    %575 = vmatpush1.xpose.msra.mxu0 0.0
    %576 = vmatprep.subr.mxu0 0.0
    %577 = vmatpush1.xpose.msra.mxu0 0.0
    %578 = vmatprep.subr.mxu0 0.0
    %579 = vmatpush1.xpose.msra.mxu0 0.0
    %580 = vmatprep.subr.mxu0 0.0
    %581 = vmatpush1.xpose.msra.mxu0 0.0
    %582 = vmatprep.subr.mxu0 0.0
    %583 = vmatpush1.xpose.msra.mxu0 0.0
    %584 = vmatprep.subr.mxu0 0.0
    %585 = vmatpush1.xpose.msra.mxu0 0.0
    %586 = vmatprep.subr.mxu0 0.0
    %587 = vmatpush1.xpose.msra.mxu0 0.0
    %588 = vmatprep.subr.mxu0 0.0
    %589 = vmatpush1.xpose.msra.mxu0 0.0
    %590 = vmatprep.subr.mxu0 0.0
    %591 = vmatpush1.xpose.msra.mxu0 0.0
    %592 = vmatprep.subr.mxu0 0.0
    %593 = vmatpush1.xpose.msra.mxu0 0.0
    %594 = vmatprep.subr.mxu0 0.0
    %595 = vmatpush1.xpose.msra.mxu0 0.0
    %596 = vmatprep.subr.mxu0 0.0
    %597 = vmatpush1.xpose.msra.mxu0 0.0
    %598 = vmatprep.subr.mxu0 0.0
    %599 = vmatpush1.xpose.msra.mxu0 0.0
    %600 = vmatprep.subr.mxu0 0.0
    %601 = vmatpush1.xpose.msra.mxu0 0.0
    %602 = vmatprep.subr.mxu0 0.0
    %603 = vmatpush1.xpose.msra.mxu0 0.0
    %604 = vmatprep.subr.mxu0 0.0
    %605 = vmatpush1.xpose.msra.mxu0 0.0
    %606 = vmatprep.subr.mxu0 0.0
    %607 = vmatpush1.xpose.msra.mxu0 0.0
    %608 = vmatprep.subr.mxu0 0.0
    %609 = vmatpush1.xpose.msra.mxu0 0.0
    %610 = vmatprep.subr.mxu0 0.0
    %611 = vmatpush1.xpose.msra.mxu0 0.0
    %612 = vmatprep.subr.mxu0 0.0
    %613 = vmatpush1.xpose.msra.mxu0 0.0
    %614 = vmatprep.subr.mxu0 0.0
    %615 = vmatpush1.xpose.msra.mxu0 0.0
    %616 = vmatprep.mubr.f32.mxu0 0.0
    %617 = vmatmul.mubr.f32.gmra.mrb[0].mxu0 %v481
    %v618 = vpop.f32.mrb[0].mxu0
    %v619 = vadd.f32 0.0, %v618
    %v620 = vpop.f32.mrb[0].mxu0
    %621 = vmatprep.mubr.f32.mxu0 0.0
    %622 = vmatmul.mubr.f32.gmra.mrb[0].mxu0 %v484
    %v623 = vpop.f32.mrb[0].mxu0
    %v624 = vadd.f32 0.0, %v623
    %v625 = vpop.f32.mrb[0].mxu0
    %626 = vmatprep.mubr.f32.mxu0 0.0
    %627 = vmatmul.mubr.f32.gmra.mrb[0].mxu0 %v487
    %v628 = vpop.f32.mrb[0].mxu0
    %v629 = vadd.f32 0.0, %v628
    %v630 = vpop.f32.mrb[0].mxu0
    %631 = vmatprep.mubr.f32.mxu0 0.0
    %632 = vmatmul.mubr.f32.gmra.mrb[0].mxu0 %v490
    %v633 = vpop.f32.mrb[0].mxu0
    %v634 = vadd.f32 0.0, %v633
    %v635 = vpop.f32.mrb[0].mxu0
    %636 = vmatprep.mubr.f32.mxu0 0.0
    %637 = vmatmul.mubr.f32.gmra.mrb[0].mxu0 %v493
    %v638 = vpop.f32.mrb[0].mxu0
    %v639 = vadd.f32 0.0, %v638
    %v640 = vpop.f32.mrb[0].mxu0
    %641 = vmatprep.mubr.f32.mxu0 0.0
    %642 = vmatmul.mubr.f32.gmra.mrb[0].mxu0 %v496
    %v643 = vpop.f32.mrb[0].mxu0
    %v644 = vadd.f32 0.0, %v643
    %v645 = vpop.f32.mrb[0].mxu0
    %646 = vmatprep.mubr.f32.mxu0 0.0
    %647 = vmatmul.mubr.f32.gmra.mrb[0].mxu0 %v499
    %v648 = vpop.f32.mrb[0].mxu0
    %v649 = vadd.f32 0.0, %v648
    %v650 = vpop.f32.mrb[0].mxu0
    %651 = vmatprep.mubr.f32.mxu0 0.0
    %652 = vmatmul.mubr.f32.gmra.mrb[0].mxu0 %v502
    %v653 = vpop.f32.mrb[0].mxu0
    %v654 = vadd.f32 0.0, %v653
    %v655 = vpop.f32.mrb[0].mxu0
    %656 = vmatprep.mubr.f32.mxu0 0.0
    %657 = vmatmul.mubr.f32.gmra.mrb[0].mxu0 %v505
    %v658 = vpop.f32.mrb[0].mxu0
    %v659 = vadd.f32 0.0, %v658
    %v660 = vpop.f32.mrb[0].mxu0
    %661 = vmatprep.mubr.f32.mxu0 0.0
    %662 = vmatmul.mubr.f32.gmra.mrb[0].mxu0 %v508
    %v663 = vpop.f32.mrb[0].mxu0
    %v664 = vadd.f32 0.0, %v663
    %v665 = vpop.f32.mrb[0].mxu0
    %666 = vmatprep.mubr.f32.mxu0 0.0
    %667 = vmatmul.mubr.f32.gmra.mrb[0].mxu0 %v511
    %v668 = vpop.f32.mrb[0].mxu0
    %v669 = vadd.f32 0.0, %v668
    %v670 = vpop.f32.mrb[0].mxu0
    %671 = vmatprep.mubr.f32.mxu0 0.0
    %672 = vmatmul.mubr.f32.gmra.mrb[0].mxu0 %v514
    %v673 = vpop.f32.mrb[0].mxu0
    %v674 = vadd.f32 0.0, %v673
    %v675 = vpop.f32.mrb[0].mxu0
    %676 = vmatprep.mubr.f32.mxu0 0.0
    %677 = vmatmul.mubr.f32.gmra.mrb[0].mxu0 %v517
    %v678 = vpop.f32.mrb[0].mxu0
    %v679 = vadd.f32 0.0, %v678
    %v680 = vpop.f32.mrb[0].mxu0
    %681 = vmatprep.mubr.f32.mxu0 0.0
    %682 = vmatmul.mubr.f32.gmra.mrb[0].mxu0 %v520
    %v683 = vpop.f32.mrb[0].mxu0
    %v684 = vadd.f32 0.0, %v683
    %v685 = vpop.f32.mrb[0].mxu0
    %686 = vmatprep.mubr.f32.mxu0 0.0
    %687 = vmatmul.mubr.f32.gmra.mrb[0].mxu0 %v523
    %v688 = vpop.f32.mrb[0].mxu0
    %v689 = vadd.f32 0.0, %v688
    %v690 = vpop.f32.mrb[0].mxu0
    %691 = vmatprep.mubr.f32.mxu0 0.0
    %692 = vmatmul.mubr.f32.gmra.mrb[0].mxu0 %v526
    %v693 = vpop.f32.mrb[0].mxu0
    %v694 = vadd.f32 0.0, %v693
    %v695 = vpop.f32.mrb[0].mxu0
    %696 = vdwg.mxu0
    %v697 = vmul.f32 %v619, 2.0
    %v698 = vmul.f32 %v624, 2.0
    %v699 = vmul.f32 %v629, 2.0
    %v700 = vmul.f32 %v634, 2.0
    %v701 = vmul.f32 %v639, 2.0
    %v702 = vmul.f32 %v644, 2.0
    %v703 = vmul.f32 %v649, 2.0
    %v704 = vmul.f32 %v654, 2.0
    %v705 = vmul.f32 %v659, 2.0
    %v706 = vmul.f32 %v664, 2.0
    %v707 = vmul.f32 %v669, 2.0
    %v708 = vmul.f32 %v674, 2.0
    %v709 = vmul.f32 %v679, 2.0
    %v710 = vmul.f32 %v684, 2.0
    %v711 = vmul.f32 %v689, 2.0
    %v712 = vmul.f32 %v694, 2.0
    %v714 = vlaneseq
    %v715 = vshrl.u32 %v714, 7
    %v716 = vsub.s32 0, %v715
    %v717 = vrot.slane %v471, %v716
    %v719 = vsub.f32 %v717, %v697
    %v720 = vsub.f32 %v717, %v698
    %v721 = vsub.f32 %v717, %v699
    %v722 = vsub.f32 %v717, %v700
    %v723 = vsub.f32 %v717, %v701
    %v724 = vsub.f32 %v717, %v702
    %v725 = vsub.f32 %v717, %v703
    %v726 = vsub.f32 %v717, %v704
    %v727 = vsub.f32 %v717, %v705
    %v728 = vsub.f32 %v717, %v706
    %v729 = vsub.f32 %v717, %v707
    %v730 = vsub.f32 %v717, %v708
    %v731 = vsub.f32 %v717, %v709
    %v732 = vsub.f32 %v717, %v710
    %v733 = vsub.f32 %v717, %v711
    %v734 = vsub.f32 %v717, %v712
    %vm735 = vcmask 523264
    %v736 = vsel %vm735, %v719, inf
    %737 = vmin.xlane.f32.xlu0 %v736
    %v738 = vpop.xlane.xlu0 %737
    %v739 = vsel %vm735, %v720, inf
    %740 = vmin.xlane.f32.xlu0 %v739
    %v741 = vpop.xlane.xlu0 %740
    %v742 = vsel %vm735, %v721, inf
    %743 = vmin.xlane.f32.xlu0 %v742
    %v744 = vpop.xlane.xlu0 %743
    %v745 = vsel %vm735, %v722, inf
    %746 = vmin.xlane.f32.xlu0 %v745
    %v747 = vpop.xlane.xlu0 %746
    %v748 = vsel %vm735, %v723, inf
    %749 = vmin.xlane.f32.xlu0 %v748
    %v750 = vpop.xlane.xlu0 %749
    %v751 = vsel %vm735, %v724, inf
    %752 = vmin.xlane.f32.xlu0 %v751
    %v753 = vpop.xlane.xlu0 %752
    %v754 = vsel %vm735, %v725, inf
    %755 = vmin.xlane.f32.xlu0 %v754
    %v756 = vpop.xlane.xlu0 %755
    %v757 = vsel %vm735, %v726, inf
    %758 = vmin.xlane.f32.xlu0 %v757
    %v759 = vpop.xlane.xlu0 %758
    %v760 = vsel %vm735, %v727, inf
    %761 = vmin.xlane.f32.xlu0 %v760
    %v762 = vpop.xlane.xlu0 %761
    %v763 = vsel %vm735, %v728, inf
    %764 = vmin.xlane.f32.xlu0 %v763
    %v765 = vpop.xlane.xlu0 %764
    %v766 = vsel %vm735, %v729, inf
    %767 = vmin.xlane.f32.xlu0 %v766
    %v768 = vpop.xlane.xlu0 %767
    %v769 = vsel %vm735, %v730, inf
    %770 = vmin.xlane.f32.xlu0 %v769
    %v771 = vpop.xlane.xlu0 %770
    %v772 = vsel %vm735, %v731, inf
    %773 = vmin.xlane.f32.xlu0 %v772
    %v774 = vpop.xlane.xlu0 %773
    %v775 = vsel %vm735, %v732, inf
    %776 = vmin.xlane.f32.xlu0 %v775
    %v777 = vpop.xlane.xlu0 %776
    %v778 = vsel %vm735, %v733, inf
    %779 = vmin.xlane.f32.xlu0 %v778
    %v780 = vpop.xlane.xlu0 %779
    %v781 = vsel %vm735, %v734, inf
    %782 = vmin.xlane.f32.xlu0 %v781
    %v783 = vpop.xlane.xlu0 %782
    %v784 = vlaneseq
    %v785 = vand.u32 %v784, 127
    %vm786 = vcmp.eq.f32.partialorder %v719, %v738
    %vm787 = vcmp.eq.f32.partialorder %v720, %v741
    %vm788 = vcmp.eq.f32.partialorder %v721, %v744
    %vm789 = vcmp.eq.f32.partialorder %v722, %v747
    %vm790 = vcmp.eq.f32.partialorder %v723, %v750
    %vm791 = vcmp.eq.f32.partialorder %v724, %v753
    %vm792 = vcmp.eq.f32.partialorder %v725, %v756
    %vm793 = vcmp.eq.f32.partialorder %v726, %v759
    %vm794 = vcmp.eq.f32.partialorder %v727, %v762
    %vm795 = vcmp.eq.f32.partialorder %v728, %v765
    %vm796 = vcmp.eq.f32.partialorder %v729, %v768
    %vm797 = vcmp.eq.f32.partialorder %v730, %v771
    %vm798 = vcmp.eq.f32.partialorder %v731, %v774
    %vm799 = vcmp.eq.f32.partialorder %v732, %v777
    %vm800 = vcmp.eq.f32.partialorder %v733, %v780
    %vm801 = vcmp.eq.f32.partialorder %v734, %v783
    %v802 = vcvt.s32.f32 %v785
    %v803 = vsel %vm786, %v802, 64.0
    %v804 = vsel %vm787, %v802, 64.0
    %v805 = vsel %vm788, %v802, 64.0
    %v806 = vsel %vm789, %v802, 64.0
    %v807 = vsel %vm790, %v802, 64.0
    %v808 = vsel %vm791, %v802, 64.0
    %v809 = vsel %vm792, %v802, 64.0
    %v810 = vsel %vm793, %v802, 64.0
    %v811 = vsel %vm794, %v802, 64.0
    %v812 = vsel %vm795, %v802, 64.0
    %v813 = vsel %vm796, %v802, 64.0
    %v814 = vsel %vm797, %v802, 64.0
    %v815 = vsel %vm798, %v802, 64.0
    %v816 = vsel %vm799, %v802, 64.0
    %v817 = vsel %vm800, %v802, 64.0
    %v818 = vsel %vm801, %v802, 64.0
    %v819 = vsel %vm735, %v803, inf
    %820 = vmin.xlane.f32.xlu0 %v819
    %v821 = vpop.xlane.xlu0 %820
    %v822 = vsel %vm735, %v804, inf
    %823 = vmin.xlane.f32.xlu0 %v822
    %v824 = vpop.xlane.xlu0 %823
    %v825 = vsel %vm735, %v805, inf
    %826 = vmin.xlane.f32.xlu0 %v825
    %v827 = vpop.xlane.xlu0 %826
    %v828 = vsel %vm735, %v806, inf
    %829 = vmin.xlane.f32.xlu0 %v828
    %v830 = vpop.xlane.xlu0 %829
    %v831 = vsel %vm735, %v807, inf
    %832 = vmin.xlane.f32.xlu0 %v831
    %v833 = vpop.xlane.xlu0 %832
    %v834 = vsel %vm735, %v808, inf
    %835 = vmin.xlane.f32.xlu0 %v834
    %v836 = vpop.xlane.xlu0 %835
    %v837 = vsel %vm735, %v809, inf
    %838 = vmin.xlane.f32.xlu0 %v837
    %v839 = vpop.xlane.xlu0 %838
    %v840 = vsel %vm735, %v810, inf
    %841 = vmin.xlane.f32.xlu0 %v840
    %v842 = vpop.xlane.xlu0 %841
    %v843 = vsel %vm735, %v811, inf
    %844 = vmin.xlane.f32.xlu0 %v843
    %v845 = vpop.xlane.xlu0 %844
    %v846 = vsel %vm735, %v812, inf
    %847 = vmin.xlane.f32.xlu0 %v846
    %v848 = vpop.xlane.xlu0 %847
    %v849 = vsel %vm735, %v813, inf
    %850 = vmin.xlane.f32.xlu0 %v849
    %v851 = vpop.xlane.xlu0 %850
    %v852 = vsel %vm735, %v814, inf
    %853 = vmin.xlane.f32.xlu0 %v852
    %v854 = vpop.xlane.xlu0 %853
    %v855 = vsel %vm735, %v815, inf
    %856 = vmin.xlane.f32.xlu0 %v855
    %v857 = vpop.xlane.xlu0 %856
    %v858 = vsel %vm735, %v816, inf
    %859 = vmin.xlane.f32.xlu0 %v858
    %v860 = vpop.xlane.xlu0 %859
    %v861 = vsel %vm735, %v817, inf
    %862 = vmin.xlane.f32.xlu0 %v861
    %v863 = vpop.xlane.xlu0 %862
    %v864 = vsel %vm735, %v818, inf
    %865 = vmin.xlane.f32.xlu0 %v864
    %v866 = vpop.xlane.xlu0 %865
    %v867 = vcvt.f32.s32.to.zero.pseudo %v821
    %v868 = vcvt.f32.s32.to.zero.pseudo %v824
    %v869 = vcvt.f32.s32.to.zero.pseudo %v827
    %v870 = vcvt.f32.s32.to.zero.pseudo %v830
    %v871 = vcvt.f32.s32.to.zero.pseudo %v833
    %v872 = vcvt.f32.s32.to.zero.pseudo %v836
    %v873 = vcvt.f32.s32.to.zero.pseudo %v839
    %v874 = vcvt.f32.s32.to.zero.pseudo %v842
    %v875 = vcvt.f32.s32.to.zero.pseudo %v845
    %v876 = vcvt.f32.s32.to.zero.pseudo %v848
    %v877 = vcvt.f32.s32.to.zero.pseudo %v851
    %v878 = vcvt.f32.s32.to.zero.pseudo %v854
    %v879 = vcvt.f32.s32.to.zero.pseudo %v857
    %v880 = vcvt.f32.s32.to.zero.pseudo %v860
    %v881 = vcvt.f32.s32.to.zero.pseudo %v863
    %v882 = vcvt.f32.s32.to.zero.pseudo %v866
    %vm883 = vcmp.lt.f32.partialorder %v738, inf
    %vm884 = vcmp.lt.f32.partialorder %v741, inf
    %vm885 = vcmp.lt.f32.partialorder %v744, inf
    %vm886 = vcmp.lt.f32.partialorder %v747, inf
    %vm887 = vcmp.lt.f32.partialorder %v750, inf
    %vm888 = vcmp.lt.f32.partialorder %v753, inf
    %vm889 = vcmp.lt.f32.partialorder %v756, inf
    %vm890 = vcmp.lt.f32.partialorder %v759, inf
    %vm891 = vcmp.lt.f32.partialorder %v762, inf
    %vm892 = vcmp.lt.f32.partialorder %v765, inf
    %vm893 = vcmp.lt.f32.partialorder %v768, inf
    %vm894 = vcmp.lt.f32.partialorder %v771, inf
    %vm895 = vcmp.lt.f32.partialorder %v774, inf
    %vm896 = vcmp.lt.f32.partialorder %v777, inf
    %vm897 = vcmp.lt.f32.partialorder %v780, inf
    %vm898 = vcmp.lt.f32.partialorder %v783, inf
    %v899 = vsel %vm883, %v867, 0
    %v900 = vsel %vm884, %v868, 0
    %v901 = vsel %vm885, %v869, 0
    %v902 = vsel %vm886, %v870, 0
    %v903 = vsel %vm887, %v871, 0
    %v904 = vsel %vm888, %v872, 0
    %v905 = vsel %vm889, %v873, 0
    %v906 = vsel %vm890, %v874, 0
    %v907 = vsel %vm891, %v875, 0
    %v908 = vsel %vm892, %v876, 0
    %v909 = vsel %vm893, %v877, 0
    %v910 = vsel %vm894, %v878, 0
    %v911 = vsel %vm895, %v879, 0
    %v912 = vsel %vm896, %v880, 0
    %v913 = vsel %vm897, %v881, 0
    %v914 = vsel %vm898, %v882, 0
    %vm915 = vcmp.eq.s32.totalorder %v785, %v899
    %vm916 = vcmp.eq.s32.totalorder %v785, %v900
    %vm917 = vcmp.eq.s32.totalorder %v785, %v901
    %vm918 = vcmp.eq.s32.totalorder %v785, %v902
    %vm919 = vcmp.eq.s32.totalorder %v785, %v903
    %vm920 = vcmp.eq.s32.totalorder %v785, %v904
    %vm921 = vcmp.eq.s32.totalorder %v785, %v905
    %vm922 = vcmp.eq.s32.totalorder %v785, %v906
    %vm923 = vcmp.eq.s32.totalorder %v785, %v907
    %vm924 = vcmp.eq.s32.totalorder %v785, %v908
    %vm925 = vcmp.eq.s32.totalorder %v785, %v909
    %vm926 = vcmp.eq.s32.totalorder %v785, %v910
    %vm927 = vcmp.eq.s32.totalorder %v785, %v911
    %vm928 = vcmp.eq.s32.totalorder %v785, %v912
    %vm929 = vcmp.eq.s32.totalorder %v785, %v913
    %vm930 = vcmp.eq.s32.totalorder %v785, %v914
    %v931 = vsel %vm915, 1, 0
    %v932 = vsel %vm916, 1, 0
    %v933 = vsel %vm917, 1, 0
    %v934 = vsel %vm918, 1, 0
    %v935 = vsel %vm919, 1, 0
    %v936 = vsel %vm920, 1, 0
    %v937 = vsel %vm921, 1, 0
    %v938 = vsel %vm922, 1, 0
    %v939 = vsel %vm923, 1, 0
    %v940 = vsel %vm924, 1, 0
    %v941 = vsel %vm925, 1, 0
    %v942 = vsel %vm926, 1, 0
    %v943 = vsel %vm927, 1, 0
    %v944 = vsel %vm928, 1, 0
    %v945 = vsel %vm929, 1, 0
    %v946 = vsel %vm930, 1, 0
    %v947 = vcvt.s32.f32 %v931
    %v948 = vcvt.s32.f32 %v932
    %v949 = vcvt.s32.f32 %v933
    %v950 = vcvt.s32.f32 %v934
    %v951 = vcvt.s32.f32 %v935
    %v952 = vcvt.s32.f32 %v936
    %v953 = vcvt.s32.f32 %v937
    %v954 = vcvt.s32.f32 %v938
    %v955 = vcvt.s32.f32 %v939
    %v956 = vcvt.s32.f32 %v940
    %v957 = vcvt.s32.f32 %v941
    %v958 = vcvt.s32.f32 %v942
    %v959 = vcvt.s32.f32 %v943
    %v960 = vcvt.s32.f32 %v944
    %v961 = vcvt.s32.f32 %v945
    %v962 = vcvt.s32.f32 %v946
    %v964 = vsel %vm735, %v947, 0
    %v967 = vsel %vm735, %v948, 0
    %v970 = vsel %vm735, %v949, 0
    %v973 = vsel %vm735, %v950, 0
    %v976 = vsel %vm735, %v951, 0
    %v979 = vsel %vm735, %v952, 0
    %v982 = vsel %vm735, %v953, 0
    %v985 = vsel %vm735, %v954, 0
    %v988 = vsel %vm735, %v955, 0
    %v991 = vsel %vm735, %v956, 0
    %v994 = vsel %vm735, %v957, 0
    %v997 = vsel %vm735, %v958, 0
    %v1000 = vsel %vm735, %v959, 0
    %v1003 = vsel %vm735, %v960, 0
    %v1006 = vsel %vm735, %v961, 0
    %v1009 = vsel %vm735, %v962, 0
    %1011 = vmatprep.subr.mxu0 0.0
    %1012 = vmatpush1.msra.mxu0 %v472
    %1013 = vmatprep.subr.mxu0 0.0
    %1014 = vmatpush1.msra.mxu0 %v473
    %1015 = vmatprep.subr.mxu0 0.0
    %1016 = vmatpush1.msra.mxu0 %v474
    %1017 = vmatprep.subr.mxu0 0.0
    %1018 = vmatpush1.msra.mxu0 %v475
    %1019 = vmatprep.subr.mxu0 0.0
    %1020 = vmatpush1.msra.mxu0 %v476
    %1021 = vmatprep.subr.mxu0 0.0
    %1022 = vmatpush1.msra.mxu0 %v477
    %1023 = vmatprep.subr.mxu0 0.0
    %1024 = vmatpush1.msra.mxu0 %v478
    %1025 = vmatprep.subr.mxu0 0.0
    %1026 = vmatpush1.msra.mxu0 %v479
    %1027 = vmatprep.subr.mxu0 0.0
    %1028 = vmatpush1.msra.mxu0 0.0
    %1029 = vmatprep.subr.mxu0 0.0
    %1030 = vmatpush1.msra.mxu0 0.0
    %1031 = vmatprep.subr.mxu0 0.0
    %1032 = vmatpush1.msra.mxu0 0.0
    %1033 = vmatprep.subr.mxu0 0.0
    %1034 = vmatpush1.msra.mxu0 0.0
    %1035 = vmatprep.subr.mxu0 0.0
    %1036 = vmatpush1.msra.mxu0 0.0
    %1037 = vmatprep.subr.mxu0 0.0
    %1038 = vmatpush1.msra.mxu0 0.0
    %1039 = vmatprep.subr.mxu0 0.0
    %1040 = vmatpush1.msra.mxu0 0.0
    %1041 = vmatprep.subr.mxu0 0.0
    %1042 = vmatpush1.msra.mxu0 0.0
    %1043 = vmatprep.subr.mxu0 0.0
    %1044 = vmatpush1.msra.mxu0 0.0
    %1045 = vmatprep.subr.mxu0 0.0
    %1046 = vmatpush1.msra.mxu0 0.0
    %1047 = vmatprep.subr.mxu0 0.0
    %1048 = vmatpush1.msra.mxu0 0.0
    %1049 = vmatprep.subr.mxu0 0.0
    %1050 = vmatpush1.msra.mxu0 0.0
    %1051 = vmatprep.subr.mxu0 0.0
    %1052 = vmatpush1.msra.mxu0 0.0
    %1053 = vmatprep.subr.mxu0 0.0
    %1054 = vmatpush1.msra.mxu0 0.0
    %1055 = vmatprep.subr.mxu0 0.0
    %1056 = vmatpush1.msra.mxu0 0.0
    %1057 = vmatprep.subr.mxu0 0.0
    %1058 = vmatpush1.msra.mxu0 0.0
    %1059 = vmatprep.subr.mxu0 0.0
    %1060 = vmatpush1.msra.mxu0 0.0
    %1061 = vmatprep.subr.mxu0 0.0
    %1062 = vmatpush1.msra.mxu0 0.0
    %1063 = vmatprep.subr.mxu0 0.0
    %1064 = vmatpush1.msra.mxu0 0.0
    %1065 = vmatprep.subr.mxu0 0.0
    %1066 = vmatpush1.msra.mxu0 0.0
    %1067 = vmatprep.subr.mxu0 0.0
    %1068 = vmatpush1.msra.mxu0 0.0
    %1069 = vmatprep.subr.mxu0 0.0
    %1070 = vmatpush1.msra.mxu0 0.0
    %1071 = vmatprep.subr.mxu0 0.0
    %1072 = vmatpush1.msra.mxu0 0.0
    %1073 = vmatprep.subr.mxu0 0.0
    %1074 = vmatpush1.msra.mxu0 0.0
    %1075 = vmatprep.mubr.f32.mxu0 0.0
    %1076 = vmatmul.mubr.f32.gmra.mrb[0].mxu0 %v964
    %v1077 = vpop.f32.mrb[0].mxu0
    %v1078 = vadd.f32 0.0, %v1077
    %v1079 = vpop.f32.mrb[0].mxu0
    %1080 = vmatprep.mubr.f32.mxu0 0.0
    %1081 = vmatmul.mubr.f32.gmra.mrb[0].mxu0 %v967
    %v1082 = vpop.f32.mrb[0].mxu0
    %v1083 = vadd.f32 0.0, %v1082
    %v1084 = vpop.f32.mrb[0].mxu0
    %1085 = vmatprep.mubr.f32.mxu0 0.0
    %1086 = vmatmul.mubr.f32.gmra.mrb[0].mxu0 %v970
    %v1087 = vpop.f32.mrb[0].mxu0
    %v1088 = vadd.f32 0.0, %v1087
    %v1089 = vpop.f32.mrb[0].mxu0
    %1090 = vmatprep.mubr.f32.mxu0 0.0
    %1091 = vmatmul.mubr.f32.gmra.mrb[0].mxu0 %v973
    %v1092 = vpop.f32.mrb[0].mxu0
    %v1093 = vadd.f32 0.0, %v1092
    %v1094 = vpop.f32.mrb[0].mxu0
    %1095 = vmatprep.mubr.f32.mxu0 0.0
    %1096 = vmatmul.mubr.f32.gmra.mrb[0].mxu0 %v976
    %v1097 = vpop.f32.mrb[0].mxu0
    %v1098 = vadd.f32 0.0, %v1097
    %v1099 = vpop.f32.mrb[0].mxu0
    %1100 = vmatprep.mubr.f32.mxu0 0.0
    %1101 = vmatmul.mubr.f32.gmra.mrb[0].mxu0 %v979
    %v1102 = vpop.f32.mrb[0].mxu0
    %v1103 = vadd.f32 0.0, %v1102
    %v1104 = vpop.f32.mrb[0].mxu0
    %1105 = vmatprep.mubr.f32.mxu0 0.0
    %1106 = vmatmul.mubr.f32.gmra.mrb[0].mxu0 %v982
    %v1107 = vpop.f32.mrb[0].mxu0
    %v1108 = vadd.f32 0.0, %v1107
    %v1109 = vpop.f32.mrb[0].mxu0
    %1110 = vmatprep.mubr.f32.mxu0 0.0
    %1111 = vmatmul.mubr.f32.gmra.mrb[0].mxu0 %v985
    %v1112 = vpop.f32.mrb[0].mxu0
    %v1113 = vadd.f32 0.0, %v1112
    %v1114 = vpop.f32.mrb[0].mxu0
    %1115 = vmatprep.mubr.f32.mxu0 0.0
    %1116 = vmatmul.mubr.f32.gmra.mrb[0].mxu0 %v988
    %v1117 = vpop.f32.mrb[0].mxu0
    %v1118 = vadd.f32 0.0, %v1117
    %v1119 = vpop.f32.mrb[0].mxu0
    %1120 = vmatprep.mubr.f32.mxu0 0.0
    %1121 = vmatmul.mubr.f32.gmra.mrb[0].mxu0 %v991
    %v1122 = vpop.f32.mrb[0].mxu0
    %v1123 = vadd.f32 0.0, %v1122
    %v1124 = vpop.f32.mrb[0].mxu0
    %1125 = vmatprep.mubr.f32.mxu0 0.0
    %1126 = vmatmul.mubr.f32.gmra.mrb[0].mxu0 %v994
    %v1127 = vpop.f32.mrb[0].mxu0
    %v1128 = vadd.f32 0.0, %v1127
    %v1129 = vpop.f32.mrb[0].mxu0
    %1130 = vmatprep.mubr.f32.mxu0 0.0
    %1131 = vmatmul.mubr.f32.gmra.mrb[0].mxu0 %v997
    %v1132 = vpop.f32.mrb[0].mxu0
    %v1133 = vadd.f32 0.0, %v1132
    %v1134 = vpop.f32.mrb[0].mxu0
    %1135 = vmatprep.mubr.f32.mxu0 0.0
    %1136 = vmatmul.mubr.f32.gmra.mrb[0].mxu0 %v1000
    %v1137 = vpop.f32.mrb[0].mxu0
    %v1138 = vadd.f32 0.0, %v1137
    %v1139 = vpop.f32.mrb[0].mxu0
    %1140 = vmatprep.mubr.f32.mxu0 0.0
    %1141 = vmatmul.mubr.f32.gmra.mrb[0].mxu0 %v1003
    %v1142 = vpop.f32.mrb[0].mxu0
    %v1143 = vadd.f32 0.0, %v1142
    %v1144 = vpop.f32.mrb[0].mxu0
    %1145 = vmatprep.mubr.f32.mxu0 0.0
    %1146 = vmatmul.mubr.f32.gmra.mrb[0].mxu0 %v1006
    %v1147 = vpop.f32.mrb[0].mxu0
    %v1148 = vadd.f32 0.0, %v1147
    %v1149 = vpop.f32.mrb[0].mxu0
    %1150 = vmatprep.mubr.f32.mxu0 0.0
    %1151 = vmatmul.mubr.f32.gmra.mrb[0].mxu0 %v1009
    %v1152 = vpop.f32.mrb[0].mxu0
    %v1153 = vadd.f32 0.0, %v1152
    %v1154 = vpop.f32.mrb[0].mxu0
    %1155 = vdwg.mxu0
    %v1157 = vsel %vm735, 1.0, 0
    %1159 = vmatprep.subr.mxu0 0.0
    %1160 = vmatpush1.xpose.msra.mxu0 %v964
    %1161 = vmatprep.subr.mxu0 0.0
    %1162 = vmatpush1.xpose.msra.mxu0 %v967
    %1163 = vmatprep.subr.mxu0 0.0
    %1164 = vmatpush1.xpose.msra.mxu0 %v970
    %1165 = vmatprep.subr.mxu0 0.0
    %1166 = vmatpush1.xpose.msra.mxu0 %v973
    %1167 = vmatprep.subr.mxu0 0.0
    %1168 = vmatpush1.xpose.msra.mxu0 %v976
    %1169 = vmatprep.subr.mxu0 0.0
    %1170 = vmatpush1.xpose.msra.mxu0 %v979
    %1171 = vmatprep.subr.mxu0 0.0
    %1172 = vmatpush1.xpose.msra.mxu0 %v982
    %1173 = vmatprep.subr.mxu0 0.0
    %1174 = vmatpush1.xpose.msra.mxu0 %v985
    %1175 = vmatprep.subr.mxu0 0.0
    %1176 = vmatpush1.xpose.msra.mxu0 %v988
    %1177 = vmatprep.subr.mxu0 0.0
    %1178 = vmatpush1.xpose.msra.mxu0 %v991
    %1179 = vmatprep.subr.mxu0 0.0
    %1180 = vmatpush1.xpose.msra.mxu0 %v994
    %1181 = vmatprep.subr.mxu0 0.0
    %1182 = vmatpush1.xpose.msra.mxu0 %v997
    %1183 = vmatprep.subr.mxu0 0.0
    %1184 = vmatpush1.xpose.msra.mxu0 %v1000
    %1185 = vmatprep.subr.mxu0 0.0
    %1186 = vmatpush1.xpose.msra.mxu0 %v1003
    %1187 = vmatprep.subr.mxu0 0.0
    %1188 = vmatpush1.xpose.msra.mxu0 %v1006
    %1189 = vmatprep.subr.mxu0 0.0
    %1190 = vmatpush1.xpose.msra.mxu0 %v1009
    %1191 = vmatprep.subr.mxu0 0.0
    %1192 = vmatpush1.xpose.msra.mxu0 0.0
    %1193 = vmatprep.subr.mxu0 0.0
    %1194 = vmatpush1.xpose.msra.mxu0 0.0
    %1195 = vmatprep.subr.mxu0 0.0
    %1196 = vmatpush1.xpose.msra.mxu0 0.0
    %1197 = vmatprep.subr.mxu0 0.0
    %1198 = vmatpush1.xpose.msra.mxu0 0.0
    %1199 = vmatprep.subr.mxu0 0.0
    %1200 = vmatpush1.xpose.msra.mxu0 0.0
    %1201 = vmatprep.subr.mxu0 0.0
    %1202 = vmatpush1.xpose.msra.mxu0 0.0
    %1203 = vmatprep.subr.mxu0 0.0
    %1204 = vmatpush1.xpose.msra.mxu0 0.0
    %1205 = vmatprep.subr.mxu0 0.0
    %1206 = vmatpush1.xpose.msra.mxu0 0.0
    %1207 = vmatprep.subr.mxu0 0.0
    %1208 = vmatpush1.xpose.msra.mxu0 0.0
    %1209 = vmatprep.subr.mxu0 0.0
    %1210 = vmatpush1.xpose.msra.mxu0 0.0
    %1211 = vmatprep.subr.mxu0 0.0
    %1212 = vmatpush1.xpose.msra.mxu0 0.0
    %1213 = vmatprep.subr.mxu0 0.0
    %1214 = vmatpush1.xpose.msra.mxu0 0.0
    %1215 = vmatprep.subr.mxu0 0.0
    %1216 = vmatpush1.xpose.msra.mxu0 0.0
    %1217 = vmatprep.subr.mxu0 0.0
    %1218 = vmatpush1.xpose.msra.mxu0 0.0
    %1219 = vmatprep.subr.mxu0 0.0
    %1220 = vmatpush1.xpose.msra.mxu0 0.0
    %1221 = vmatprep.subr.mxu0 0.0
    %1222 = vmatpush1.xpose.msra.mxu0 0.0
    %1223 = vmatprep.mubr.f32.mxu0 0.0
    %1224 = vmatmul.mubr.f32.gmra.mrb[0].mxu0 %v1157
    %v1225 = vpop.f32.mrb[0].mxu0
    %v1226 = vadd.f32 0.0, %v1225
    %v1227 = vpop.f32.mrb[0].mxu0
    %1228 = vdwg.mxu0
    %v1229 = vmul.f32 %v1226, 0.0
    %v1231 = vsel %vm735, %v802, 0
    %1233 = vmatprep.subr.mxu0 0.0
    %1234 = vmatpush1.xpose.msra.mxu0 %v964
    %1235 = vmatprep.subr.mxu0 0.0
    %1236 = vmatpush1.xpose.msra.mxu0 %v967
    %1237 = vmatprep.subr.mxu0 0.0
    %1238 = vmatpush1.xpose.msra.mxu0 %v970
    %1239 = vmatprep.subr.mxu0 0.0
    %1240 = vmatpush1.xpose.msra.mxu0 %v973
    %1241 = vmatprep.subr.mxu0 0.0
    %1242 = vmatpush1.xpose.msra.mxu0 %v976
    %1243 = vmatprep.subr.mxu0 0.0
    %1244 = vmatpush1.xpose.msra.mxu0 %v979
    %1245 = vmatprep.subr.mxu0 0.0
    %1246 = vmatpush1.xpose.msra.mxu0 %v982
    %1247 = vmatprep.subr.mxu0 0.0
    %1248 = vmatpush1.xpose.msra.mxu0 %v985
    %1249 = vmatprep.subr.mxu0 0.0
    %1250 = vmatpush1.xpose.msra.mxu0 %v988
    %1251 = vmatprep.subr.mxu0 0.0
    %1252 = vmatpush1.xpose.msra.mxu0 %v991
    %1253 = vmatprep.subr.mxu0 0.0
    %1254 = vmatpush1.xpose.msra.mxu0 %v994
    %1255 = vmatprep.subr.mxu0 0.0
    %1256 = vmatpush1.xpose.msra.mxu0 %v997
    %1257 = vmatprep.subr.mxu0 0.0
    %1258 = vmatpush1.xpose.msra.mxu0 %v1000
    %1259 = vmatprep.subr.mxu0 0.0
    %1260 = vmatpush1.xpose.msra.mxu0 %v1003
    %1261 = vmatprep.subr.mxu0 0.0
    %1262 = vmatpush1.xpose.msra.mxu0 %v1006
    %1263 = vmatprep.subr.mxu0 0.0
    %1264 = vmatpush1.xpose.msra.mxu0 %v1009
    %1265 = vmatprep.subr.mxu0 0.0
    %1266 = vmatpush1.xpose.msra.mxu0 0.0
    %1267 = vmatprep.subr.mxu0 0.0
    %1268 = vmatpush1.xpose.msra.mxu0 0.0
    %1269 = vmatprep.subr.mxu0 0.0
    %1270 = vmatpush1.xpose.msra.mxu0 0.0
    %1271 = vmatprep.subr.mxu0 0.0
    %1272 = vmatpush1.xpose.msra.mxu0 0.0
    %1273 = vmatprep.subr.mxu0 0.0
    %1274 = vmatpush1.xpose.msra.mxu0 0.0
    %1275 = vmatprep.subr.mxu0 0.0
    %1276 = vmatpush1.xpose.msra.mxu0 0.0
    %1277 = vmatprep.subr.mxu0 0.0
    %1278 = vmatpush1.xpose.msra.mxu0 0.0
    %1279 = vmatprep.subr.mxu0 0.0
    %1280 = vmatpush1.xpose.msra.mxu0 0.0
    %1281 = vmatprep.subr.mxu0 0.0
    %1282 = vmatpush1.xpose.msra.mxu0 0.0
    %1283 = vmatprep.subr.mxu0 0.0
    %1284 = vmatpush1.xpose.msra.mxu0 0.0
    %1285 = vmatprep.subr.mxu0 0.0
    %1286 = vmatpush1.xpose.msra.mxu0 0.0
    %1287 = vmatprep.subr.mxu0 0.0
    %1288 = vmatpush1.xpose.msra.mxu0 0.0
    %1289 = vmatprep.subr.mxu0 0.0
    %1290 = vmatpush1.xpose.msra.mxu0 0.0
    %1291 = vmatprep.subr.mxu0 0.0
    %1292 = vmatpush1.xpose.msra.mxu0 0.0
    %1293 = vmatprep.subr.mxu0 0.0
    %1294 = vmatpush1.xpose.msra.mxu0 0.0
    %1295 = vmatprep.subr.mxu0 0.0
    %1296 = vmatpush1.xpose.msra.mxu0 0.0
    %1297 = vmatprep.mubr.f32.mxu0 0.0
    %1298 = vmatmul.mubr.f32.gmra.mrb[0].mxu0 %v1231
    %v1299 = vpop.f32.mrb[0].mxu0
    %v1300 = vadd.f32 %v1229, %v1299
    %v1301 = vpop.f32.mrb[0].mxu0
    %1302 = vdwg.mxu0
    %1303 = vst.msk [vmem:[%s7] sm:$0xff] %vm58, %v1078
    %1304 = vst.msk [vmem:[%s7 + $0x8] sm:$0xff] %vm58, %v1083
    %1305 = vst.msk [vmem:[%s7 + $0x10] sm:$0xff] %vm58, %v1088
    %1306 = vst.msk [vmem:[%s7 + $0x18] sm:$0xff] %vm58, %v1093
    %1307 = vst.msk [vmem:[%s7 + $0x20] sm:$0xff] %vm58, %v1098
    %1308 = vst.msk [vmem:[%s7 + $0x28] sm:$0xff] %vm58, %v1103
    %1309 = vst.msk [vmem:[%s7 + $0x30] sm:$0xff] %vm58, %v1108
    %1310 = vst.msk [vmem:[%s7 + $0x38] sm:$0xff] %vm58, %v1113
    %1311 = vst.msk [vmem:[%s7 + $0x40] sm:$0xff] %vm58, %v1118
    %1312 = vst.msk [vmem:[%s7 + $0x48] sm:$0xff] %vm58, %v1123
    %1313 = vst.msk [vmem:[%s7 + $0x50] sm:$0xff] %vm58, %v1128
    %1314 = vst.msk [vmem:[%s7 + $0x58] sm:$0xff] %vm58, %v1133
    %1315 = vst.msk [vmem:[%s7 + $0x60] sm:$0xff] %vm58, %v1138
    %1316 = vst.msk [vmem:[%s7 + $0x68] sm:$0xff] %vm58, %v1143
    %1317 = vst.msk [vmem:[%s7 + $0x70] sm:$0xff] %vm58, %v1148
    %1318 = vst.msk [vmem:[%s7 + $0x78] sm:$0xff] %vm58, %v1153
    %v1319 = vcvt.f32.s32.to.zero.pseudo %v1300
    %1320 = vst [vmem:[#allocation2] sm:$0x1] %v1319
    %v1321 = vsub.f32 %v1078, %v393
    %v1322 = vsub.f32 %v1083, %v398
    %v1323 = vsub.f32 %v1088, %v403
    %v1324 = vsub.f32 %v1093, %v408
    %v1325 = vsub.f32 %v1098, %v413
    %v1326 = vsub.f32 %v1103, %v418
    %v1327 = vsub.f32 %v1108, %v423
    %v1328 = vsub.f32 %v1113, %v428
    %v1329 = vsub.f32 %v1118, %v433
    %v1330 = vsub.f32 %v1123, %v438
    %v1331 = vsub.f32 %v1128, %v443
    %v1332 = vsub.f32 %v1133, %v448
    %v1333 = vsub.f32 %v1138, %v453
    %v1334 = vsub.f32 %v1143, %v458
    %v1335 = vsub.f32 %v1148, %v463
    %v1336 = vsub.f32 %v1153, %v468
    %v1337 = vmul.f32 %v1321, %v1321
    %v1338 = vmul.f32 %v1322, %v1322
    %v1339 = vmul.f32 %v1323, %v1323
    %v1340 = vmul.f32 %v1324, %v1324
    %v1341 = vmul.f32 %v1325, %v1325
    %v1342 = vmul.f32 %v1326, %v1326
    %v1343 = vmul.f32 %v1327, %v1327
    %v1344 = vmul.f32 %v1328, %v1328
    %v1345 = vmul.f32 %v1329, %v1329
    %v1346 = vmul.f32 %v1330, %v1330
    %v1347 = vmul.f32 %v1331, %v1331
    %v1348 = vmul.f32 %v1332, %v1332
    %v1349 = vmul.f32 %v1333, %v1333
    %v1350 = vmul.f32 %v1334, %v1334
    %v1351 = vmul.f32 %v1335, %v1335
    %v1352 = vmul.f32 %v1336, %v1336
    %v1353 = vsel %vm58, %v1337, 0.0
    %1354 = vadd.xlane.f32.xlu0 %v1353
    %v1355 = vpop.xlane.xlu0 %1354
    %v1356 = vsel %vm58, %v1338, 0.0
    %1357 = vadd.xlane.f32.xlu0 %v1356
    %v1358 = vpop.xlane.xlu0 %1357
    %v1359 = vsel %vm58, %v1339, 0.0
    %1360 = vadd.xlane.f32.xlu0 %v1359
    %v1361 = vpop.xlane.xlu0 %1360
    %v1362 = vsel %vm58, %v1340, 0.0
    %1363 = vadd.xlane.f32.xlu0 %v1362
    %v1364 = vpop.xlane.xlu0 %1363
    %v1365 = vsel %vm58, %v1341, 0.0
    %1366 = vadd.xlane.f32.xlu0 %v1365
    %v1367 = vpop.xlane.xlu0 %1366
    %v1368 = vsel %vm58, %v1342, 0.0
    %1369 = vadd.xlane.f32.xlu0 %v1368
    %v1370 = vpop.xlane.xlu0 %1369
    %v1371 = vsel %vm58, %v1343, 0.0
    %1372 = vadd.xlane.f32.xlu0 %v1371
    %v1373 = vpop.xlane.xlu0 %1372
    %v1374 = vsel %vm58, %v1344, 0.0
    %1375 = vadd.xlane.f32.xlu0 %v1374
    %v1376 = vpop.xlane.xlu0 %1375
    %v1377 = vsel %vm58, %v1345, 0.0
    %1378 = vadd.xlane.f32.xlu0 %v1377
    %v1379 = vpop.xlane.xlu0 %1378
    %v1380 = vsel %vm58, %v1346, 0.0
    %1381 = vadd.xlane.f32.xlu0 %v1380
    %v1382 = vpop.xlane.xlu0 %1381
    %v1383 = vsel %vm58, %v1347, 0.0
    %1384 = vadd.xlane.f32.xlu0 %v1383
    %v1385 = vpop.xlane.xlu0 %1384
    %v1386 = vsel %vm58, %v1348, 0.0
    %1387 = vadd.xlane.f32.xlu0 %v1386
    %v1388 = vpop.xlane.xlu0 %1387
    %v1389 = vsel %vm58, %v1349, 0.0
    %1390 = vadd.xlane.f32.xlu0 %v1389
    %v1391 = vpop.xlane.xlu0 %1390
    %v1392 = vsel %vm58, %v1350, 0.0
    %1393 = vadd.xlane.f32.xlu0 %v1392
    %v1394 = vpop.xlane.xlu0 %1393
    %v1395 = vsel %vm58, %v1351, 0.0
    %1396 = vadd.xlane.f32.xlu0 %v1395
    %v1397 = vpop.xlane.xlu0 %1396
    %v1398 = vsel %vm58, %v1352, 0.0
    %1399 = vadd.xlane.f32.xlu0 %v1398
    %v1400 = vpop.xlane.xlu0 %1399
    %v1401 = vadd.f32 %v1355, %v1358
    %v1402 = vadd.f32 %v1401, %v1361
    %v1403 = vadd.f32 %v1402, %v1364
    %v1404 = vadd.f32 %v1403, %v1367
    %v1405 = vadd.f32 %v1404, %v1370
    %v1406 = vadd.f32 %v1405, %v1373
    %v1407 = vadd.f32 %v1406, %v1376
    %v1408 = vadd.f32 %v1407, %v1379
    %v1409 = vadd.f32 %v1408, %v1382
    %v1410 = vadd.f32 %v1409, %v1385
    %v1411 = vadd.f32 %v1410, %v1388
    %v1412 = vadd.f32 %v1411, %v1391
    %v1413 = vadd.f32 %v1412, %v1394
    %v1414 = vadd.f32 %v1413, %v1397
    %v1415 = vadd.f32 %v1414, %v1400
    %v1416 = vrot.slane %v1415, 4
    %v1417 = vadd.f32 %v1415, %v1416
    %v1418 = vrot.slane %v1417, 2
    %v1419 = vadd.f32 %v1417, %v1418
    %v1420 = vrot.slane %v1419, 1
    %v1421 = vadd.f32 %v1419, %v1420
    %vm1422 = vcmask 0
    %1423 = vst.msk [vmem:[#allocation4] sm:$0x1] %vm1422, %v1421
    %p1424 = scmp.eq.s32.totalorder 0, 0
    // Predicated region
    $region30: #{tpu_custom_call.1} parent=1 // pred_check
      %p1425 = pneg %p1424
    $region31: #{tpu_custom_call.1} parent=1 // pred_check_branch
      %1427 = sbr.rel (%p1425) target = $region33
    $region32: #{tpu_custom_call.1} parent=1 // pred_region
      %s1428 = smul.u32 0, 128
      %v1429 = vlaneseq
      %v1430 = vshrl.u32 %v1429, 7
      %v1431 = vadd.s32 %v1430, 8
      %v1432 = vadd.s32 %v1430, 16
      %v1433 = vadd.s32 %v1430, 24
      %v1434 = vadd.s32 %v1430, 32
      %v1435 = vadd.s32 %v1430, 40
      %v1436 = vadd.s32 %v1430, 48
      %v1437 = vadd.s32 %v1430, 56
      %v1438 = vadd.s32 %v1430, 64
      %v1439 = vadd.s32 %v1430, 72
      %v1440 = vadd.s32 %v1430, 80
      %v1441 = vadd.s32 %v1430, 88
      %v1442 = vadd.s32 %v1430, 96
      %v1443 = vadd.s32 %v1430, 104
      %v1444 = vadd.s32 %v1430, 112
      %v1445 = vadd.s32 %v1430, 120
      %v1446 = vstv %s1428
      %v1447 = vadd.s32 %v1446, %v1430
      %v1448 = vadd.s32 %v1446, %v1431
      %v1449 = vadd.s32 %v1446, %v1432
      %v1450 = vadd.s32 %v1446, %v1433
      %v1451 = vadd.s32 %v1446, %v1434
      %v1452 = vadd.s32 %v1446, %v1435
      %v1453 = vadd.s32 %v1446, %v1436
      %v1454 = vadd.s32 %v1446, %v1437
      %v1455 = vadd.s32 %v1446, %v1438
      %v1456 = vadd.s32 %v1446, %v1439
      %v1457 = vadd.s32 %v1446, %v1440
      %v1458 = vadd.s32 %v1446, %v1441
      %v1459 = vadd.s32 %v1446, %v1442
      %v1460 = vadd.s32 %v1446, %v1443
      %v1461 = vadd.s32 %v1446, %v1444
      %v1462 = vadd.s32 %v1446, %v1445
      %vm1463 = vcmp.lt.s32.totalorder %v1447, 16
      %vm1464 = vcmp.lt.s32.totalorder %v1448, 16
      %vm1465 = vcmp.lt.s32.totalorder %v1449, 16
      %vm1466 = vcmp.lt.s32.totalorder %v1450, 16
      %vm1467 = vcmp.lt.s32.totalorder %v1451, 16
      %vm1468 = vcmp.lt.s32.totalorder %v1452, 16
      %vm1469 = vcmp.lt.s32.totalorder %v1453, 16
      %vm1470 = vcmp.lt.s32.totalorder %v1454, 16
      %vm1471 = vcmp.lt.s32.totalorder %v1455, 16
      %vm1472 = vcmp.lt.s32.totalorder %v1456, 16
      %vm1473 = vcmp.lt.s32.totalorder %v1457, 16
      %vm1474 = vcmp.lt.s32.totalorder %v1458, 16
      %vm1475 = vcmp.lt.s32.totalorder %v1459, 16
      %vm1476 = vcmp.lt.s32.totalorder %v1460, 16
      %vm1477 = vcmp.lt.s32.totalorder %v1461, 16
      %vm1478 = vcmp.lt.s32.totalorder %v1462, 16
      %v1479 = vsel %vm1463, 1, 0
      %v1480 = vsel %vm1464, 1, 0
      %v1481 = vsel %vm1465, 1, 0
      %v1482 = vsel %vm1466, 1, 0
      %v1483 = vsel %vm1467, 1, 0
      %v1484 = vsel %vm1468, 1, 0
      %v1485 = vsel %vm1469, 1, 0
      %v1486 = vsel %vm1470, 1, 0
      %v1487 = vsel %vm1471, 1, 0
      %v1488 = vsel %vm1472, 1, 0
      %v1489 = vsel %vm1473, 1, 0
      %v1490 = vsel %vm1474, 1, 0
      %v1491 = vsel %vm1475, 1, 0
      %v1492 = vsel %vm1476, 1, 0
      %v1493 = vsel %vm1477, 1, 0
      %v1494 = vsel %vm1478, 1, 0
      %vm1495 = vcmp.eq.s32.totalorder %v1479, 1
      %vm1496 = vcmp.eq.s32.totalorder %v1480, 1
      %vm1497 = vcmp.eq.s32.totalorder %v1481, 1
      %vm1498 = vcmp.eq.s32.totalorder %v1482, 1
      %vm1499 = vcmp.eq.s32.totalorder %v1483, 1
      %vm1500 = vcmp.eq.s32.totalorder %v1484, 1
      %vm1501 = vcmp.eq.s32.totalorder %v1485, 1
      %vm1502 = vcmp.eq.s32.totalorder %v1486, 1
      %vm1503 = vcmp.eq.s32.totalorder %v1487, 1
      %vm1504 = vcmp.eq.s32.totalorder %v1488, 1
      %vm1505 = vcmp.eq.s32.totalorder %v1489, 1
      %vm1506 = vcmp.eq.s32.totalorder %v1490, 1
      %vm1507 = vcmp.eq.s32.totalorder %v1491, 1
      %vm1508 = vcmp.eq.s32.totalorder %v1492, 1
      %vm1509 = vcmp.eq.s32.totalorder %v1493, 1
      %vm1510 = vcmp.eq.s32.totalorder %v1494, 1
      %v1511 = vsel %vm1495, %v1321, 0.0
      %v1512 = vsel %vm1496, %v1322, 0.0
      %v1513 = vsel %vm1497, %v1323, 0.0
      %v1514 = vsel %vm1498, %v1324, 0.0
      %v1515 = vsel %vm1499, %v1325, 0.0
      %v1516 = vsel %vm1500, %v1326, 0.0
      %v1517 = vsel %vm1501, %v1327, 0.0
      %v1518 = vsel %vm1502, %v1328, 0.0
      %v1519 = vsel %vm1503, %v1329, 0.0
      %v1520 = vsel %vm1504, %v1330, 0.0
      %v1521 = vsel %vm1505, %v1331, 0.0
      %v1522 = vsel %vm1506, %v1332, 0.0
      %v1523 = vsel %vm1507, %v1333, 0.0
      %v1524 = vsel %vm1508, %v1334, 0.0
      %v1525 = vsel %vm1509, %v1335, 0.0
      %v1526 = vsel %vm1510, %v1336, 0.0
      %v1527 = vmul.f32 %v1511, %v1511
      %v1528 = vmul.f32 %v1512, %v1512
      %v1529 = vmul.f32 %v1513, %v1513
      %v1530 = vmul.f32 %v1514, %v1514
      %v1531 = vmul.f32 %v1515, %v1515
      %v1532 = vmul.f32 %v1516, %v1516
      %v1533 = vmul.f32 %v1517, %v1517
      %v1534 = vmul.f32 %v1518, %v1518
      %v1535 = vmul.f32 %v1519, %v1519
      %v1536 = vmul.f32 %v1520, %v1520
      %v1537 = vmul.f32 %v1521, %v1521
      %v1538 = vmul.f32 %v1522, %v1522
      %v1539 = vmul.f32 %v1523, %v1523
      %v1540 = vmul.f32 %v1524, %v1524
      %v1541 = vmul.f32 %v1525, %v1525
      %v1542 = vmul.f32 %v1526, %v1526
      %v1543 = vsel %vm58, %v1527, 0.0
      %1544 = vadd.xlane.f32.xlu0 %v1543
      %v1545 = vpop.xlane.xlu0 %1544
      %v1546 = vsel %vm58, %v1528, 0.0
      %1547 = vadd.xlane.f32.xlu0 %v1546
      %v1548 = vpop.xlane.xlu0 %1547
      %v1549 = vsel %vm58, %v1529, 0.0
      %1550 = vadd.xlane.f32.xlu0 %v1549
      %v1551 = vpop.xlane.xlu0 %1550
      %v1552 = vsel %vm58, %v1530, 0.0
      %1553 = vadd.xlane.f32.xlu0 %v1552
      %v1554 = vpop.xlane.xlu0 %1553
      %v1555 = vsel %vm58, %v1531, 0.0
      %1556 = vadd.xlane.f32.xlu0 %v1555
      %v1557 = vpop.xlane.xlu0 %1556
      %v1558 = vsel %vm58, %v1532, 0.0
      %1559 = vadd.xlane.f32.xlu0 %v1558
      %v1560 = vpop.xlane.xlu0 %1559
      %v1561 = vsel %vm58, %v1533, 0.0
      %1562 = vadd.xlane.f32.xlu0 %v1561
      %v1563 = vpop.xlane.xlu0 %1562
      %v1564 = vsel %vm58, %v1534, 0.0
      %1565 = vadd.xlane.f32.xlu0 %v1564
      %v1566 = vpop.xlane.xlu0 %1565
      %v1567 = vsel %vm58, %v1535, 0.0
      %1568 = vadd.xlane.f32.xlu0 %v1567
      %v1569 = vpop.xlane.xlu0 %1568
      %v1570 = vsel %vm58, %v1536, 0.0
      %1571 = vadd.xlane.f32.xlu0 %v1570
      %v1572 = vpop.xlane.xlu0 %1571
      %v1573 = vsel %vm58, %v1537, 0.0
      %1574 = vadd.xlane.f32.xlu0 %v1573
      %v1575 = vpop.xlane.xlu0 %1574
      %v1576 = vsel %vm58, %v1538, 0.0
      %1577 = vadd.xlane.f32.xlu0 %v1576
      %v1578 = vpop.xlane.xlu0 %1577
      %v1579 = vsel %vm58, %v1539, 0.0
      %1580 = vadd.xlane.f32.xlu0 %v1579
      %v1581 = vpop.xlane.xlu0 %1580
      %v1582 = vsel %vm58, %v1540, 0.0
      %1583 = vadd.xlane.f32.xlu0 %v1582
      %v1584 = vpop.xlane.xlu0 %1583
      %v1585 = vsel %vm58, %v1541, 0.0
      %1586 = vadd.xlane.f32.xlu0 %v1585
      %v1587 = vpop.xlane.xlu0 %1586
      %v1588 = vsel %vm58, %v1542, 0.0
      %1589 = vadd.xlane.f32.xlu0 %v1588
      %v1590 = vpop.xlane.xlu0 %1589
      %v1591 = vadd.f32 %v1545, %v1548
      %v1592 = vadd.f32 %v1591, %v1551
      %v1593 = vadd.f32 %v1592, %v1554
      %v1594 = vadd.f32 %v1593, %v1557
      %v1595 = vadd.f32 %v1594, %v1560
      %v1596 = vadd.f32 %v1595, %v1563
      %v1597 = vadd.f32 %v1596, %v1566
      %v1598 = vadd.f32 %v1597, %v1569
      %v1599 = vadd.f32 %v1598, %v1572
      %v1600 = vadd.f32 %v1599, %v1575
      %v1601 = vadd.f32 %v1600, %v1578
      %v1602 = vadd.f32 %v1601, %v1581
      %v1603 = vadd.f32 %v1602, %v1584
      %v1604 = vadd.f32 %v1603, %v1587
      %v1605 = vadd.f32 %v1604, %v1590
      %v1606 = vrot.slane %v1605, 4
      %v1607 = vadd.f32 %v1605, %v1606
      %v1608 = vrot.slane %v1607, 2
      %v1609 = vadd.f32 %v1607, %v1608
      %v1610 = vrot.slane %v1609, 1
      %v1611 = vadd.f32 %v1609, %v1610
      %1612 = vst.msk [vmem:[#allocation4] sm:$0x1] %vm1422, %v1611
    $region33: #{tpu_custom_call.1} parent=1 // pred_fallthru
      _
    // Predicated region
    $region34: #{tpu_custom_call.1} parent=1 // pred_check
      _
    $region35: #{tpu_custom_call.1} parent=1 // pred_check_branch
      %1614 = sbr.rel (0) target = $region37
    $region36: #{tpu_custom_call.1} parent=1 // pred_region
      _
    $region37: #{tpu_custom_call.1} parent=1 // pred_fallthru
      _
    // Predicated region
    $region38: #{tpu_custom_call.1} parent=1 // pred_check
      _
    $region39: #{tpu_custom_call.1} parent=1 // pred_check_branch
      %1616 = sbr.rel (0) target = $region41
    $region40: #{tpu_custom_call.1} parent=1 // pred_region
      %s1618 = ssub.s32 16, 16
      %1619 = vsyncadd [#allocation3], %s1618
      %s1621 = sshll.u32 [#allocation2], 4
      %s1622 = int_to_ptr.vmem [resolvable:$true] %s1621
      %1624 = dma.vmem_to_hbm [thread:$0]  %s1622, 16, %s8, [#allocation3]
    $region41: #{tpu_custom_call.1} parent=1 // pred_fallthru
      _
    // Predicated region
    $region42: #{tpu_custom_call.1} parent=1 // pred_check
      _
    $region43: #{tpu_custom_call.1} parent=1 // pred_check_branch
      %1626 = sbr.rel (0) target = $region45
    $region44: #{tpu_custom_call.1} parent=1 // pred_region
      %s1628 = ssub.s32 16, 16
      %1629 = vsyncadd [#allocation5], %s1628
      %s1631 = sshll.u32 [#allocation4], 4
      %s1632 = int_to_ptr.vmem [resolvable:$true] %s1631
      %1634 = dma.vmem_to_hbm [thread:$0]  %s1632, 16, %s9, [#allocation5]
    $region45: #{tpu_custom_call.1} parent=1 // pred_fallthru
      _
    // Predicated region
    $region46: #{tpu_custom_call.1} parent=1 // pred_check
      _
    $region47: #{tpu_custom_call.1} parent=1 // pred_check_branch
      %1636 = sbr.rel (0) target = $region49
    $region48: #{tpu_custom_call.1} parent=1 // pred_region
      _
    $region49: #{tpu_custom_call.1} parent=1 // pred_fallthru
      _
    // Predicated region
    $region50: #{tpu_custom_call.1} parent=1 // pred_check
      _
    $region51: #{tpu_custom_call.1} parent=1 // pred_check_branch
      %1638 = sbr.rel (0) target = $region53
    $region52: #{tpu_custom_call.1} parent=1 // pred_region
      %1639 = dma.done [#allocation3], 16
    $region53: #{tpu_custom_call.1} parent=1 // pred_fallthru
      _
    // Predicated region
    $region54: #{tpu_custom_call.1} parent=1 // pred_check
      _
    $region55: #{tpu_custom_call.1} parent=1 // pred_check_branch
      %1641 = sbr.rel (0) target = $region57
    $region56: #{tpu_custom_call.1} parent=1 // pred_region
      %1642 = dma.done [#allocation5], 16
    $region57: #{tpu_custom_call.1} parent=1 // pred_fallthru
      _
    %1643 = vsyncpa [#allocation3], 1
    %1644 = vsyncpa [#allocation5], 1

</llo_original>
